<compile_context>
chip_gen: v6e
topology: v6e:2x2x1
jax: 0.10.0
libtpu: 0.0.40
codegen_flags: <defaults>
</compile_context>

<pallas_src>
import functools

import jax
import jax.numpy as jnp
from jax import lax
from jax.experimental import pallas as pl
from jax.experimental.pallas import tpu as pltpu

N_EMBEDDING = 384
NUM_HEADS = 8
HEAD_SIZE = N_EMBEDDING // NUM_HEADS  # 48
NEG_INF = -1e30  # finite additive mask value (safer than -inf)
# BLOCK_SIZE=256 in the reference only sizes the causal-mask buffer; for
# T <= BLOCK_SIZE the effective mask is tril(T, T).


# ----------------------------------------------------------------------------
# Kernel
# ----------------------------------------------------------------------------
def _mha_kernel(x_ref, wqkv_ref, wp_ref, bp_ref, o_ref, *, b_blk, seq_len, hs_pad):
    C = N_EMBEDDING
    cq = NUM_HEADS * hs_pad                      # per-section QKV width
    bt = b_blk * seq_len

    # Fused QKV projection: bf16 operands, f32 accumulation on the MXU.
    x = x_ref[...].astype(jnp.bfloat16)                               # (BT, C)
    qkv = jnp.dot(x, wqkv_ref[...],
                  preferred_element_type=jnp.float32)                 # (BT, 3cq) f32

    # 1/sqrt(head_size) is folded into the Q columns of wqkv at pack time.
    q = qkv[:, 0:cq].astype(jnp.bfloat16)
    k = qkv[:, cq:2 * cq].astype(jnp.bfloat16)
    v = qkv[:, 2 * cq:3 * cq].astype(jnp.bfloat16)

    # Additive causal mask, computed once, broadcast over (batch, head).
    row = lax.broadcasted_iota(jnp.int32, (seq_len, seq_len), 0)
    col = lax.broadcasted_iota(jnp.int32, (seq_len, seq_len), 1)
    add_mask = jnp.where(col <= row, 0.0, NEG_INF).astype(jnp.float32)  # (T, T)

    wp = wp_ref[...]                                                  # (cq, C) bf16

    # Per-head attention, batched over the B_BLK sequences in this block.
    acc = jnp.zeros((bt, C), jnp.float32)
    for h in range(NUM_HEADS):                   # static unroll over heads
        sl = slice(h * hs_pad, (h + 1) * hs_pad)
        qh = q[:, sl].reshape(b_blk, seq_len, hs_pad)                 # (b, T, hs)
        kh = k[:, sl].reshape(b_blk, seq_len, hs_pad)
        vh = v[:, sl].reshape(b_blk, seq_len, hs_pad)

        s = jnp.einsum('bqd,bkd->bqk', qh, kh,
                       preferred_element_type=jnp.float32)            # (b, T, T) f32
        s = s + add_mask
        m = jnp.max(s, axis=-1, keepdims=True)
        p = jnp.exp(s - m)
        l = jnp.sum(p, axis=-1, keepdims=True)

        oh = jnp.einsum('bqk,bkd->bqd', p.astype(jnp.bfloat16), vh,
                        preferred_element_type=jnp.float32)           # (b, T, hs)
        # Normalize AFTER the PV matmul: touches (b,T,hs) not (b,T,T).
        oh = oh * pl.reciprocal(l, approx=True)                       # EUP slot

        acc = acc + jnp.dot(oh.reshape(bt, hs_pad).astype(jnp.bfloat16),
                            wp[sl, :],
                            preferred_element_type=jnp.float32)       # (BT, C)

    o_ref[...] = (acc + bp_ref[...]).astype(o_ref.dtype)


# ----------------------------------------------------------------------------
# Block-size / generation heuristics
# ----------------------------------------------------------------------------
def _tpu_kind():
    try:
        return jax.devices()[0].device_kind.lower()
    except Exception:
        return ""


def _vmem_limit_bytes(kind):
    # v7x has 64 MiB physical VMEM per TensorCore -> keep headroom at 48 MiB.
    if "v7" in kind:
        return 48 * 1024 * 1024
    return 64 * 1024 * 1024


def _pad_heads(kind):
    # 256-wide MXU parts (v6e/v7x): pad head size 48->64 for lane alignment.
    # On v5e (128-wide MXU) padding would add an extra MXU pass -> keep 384.
    return ("v6" in kind) or ("v7" in kind)


def _target_rows(T, cq, vmem_limit):
    """Largest MXU-row block that fits a conservative VMEM budget."""
    C = N_EMBEDDING
    fixed = 2 * (C * 3 * cq * 2 + cq * C * 2 + C * 4)     # weights, double-buffered
    per_row = (2 * 2 * C * 4          # x + out blocks, f32, double-buffered
               + 3 * cq * 4           # qkv f32
               + 3 * cq * 2           # q/k/v bf16
               + C * 4                # acc f32
               + 4 * T * 4)           # s/p live-range headroom
    budget = int(0.6 * vmem_limit) - fixed
    rows = max(8, budget // per_row)
    return int(min(1024, max(256, rows)))


def _pick_b_blk(B, T, target_rows):
    """Pick sequences-per-block: legal sublane dim, big MXU fill, >=2 grid steps."""
    cands = [b for b in range(1, B + 1)
             if B % b == 0 and ((b * T) % 8 == 0 or b == B)]
    fit = [b for b in cands if b * T <= max(target_rows, 1)]
    multi = [b for b in fit if B // b >= 2]   # keep >=2 grid steps when possible
    if multi:
        return max(multi)
    if fit:
        return max(fit)
    return min(cands)


# ----------------------------------------------------------------------------
# Wrapper
# ----------------------------------------------------------------------------
@functools.partial(jax.jit, static_argnames=("hs_pad", "vmem_limit"))
def _mha_forward(x, wq, wk, wv, wp, bp, *, hs_pad, vmem_limit):
    B, T, C = x.shape
    assert C == N_EMBEDDING
    cq = NUM_HEADS * hs_pad
    scale = HEAD_SIZE ** (-0.5)

    # --- weight packing (wrapper-side only) --------------------------------
    def pad_cols(w):  # (C, C) -> (C, cq): zero-pad each head's 48 cols to hs_pad
        if hs_pad == HEAD_SIZE:
            return w
        w3 = w.reshape(C, NUM_HEADS, HEAD_SIZE)
        w3 = jnp.pad(w3, ((0, 0), (0, 0), (0, hs_pad - HEAD_SIZE)))
        return w3.reshape(C, cq)

    wqkv = jnp.concatenate(
        [pad_cols(wq * scale), pad_cols(wk), pad_cols(wv)], axis=1
    ).astype(jnp.bfloat16)                                   # (C, 3cq) bf16

    if hs_pad == HEAD_SIZE:
        wp_p = wp
    else:
        wp3 = wp.reshape(NUM_HEADS, HEAD_SIZE, C)
        wp3 = jnp.pad(wp3, ((0, 0), (0, hs_pad - HEAD_SIZE), (0, 0)))
        wp_p = wp3.reshape(cq, C)
    wp_p = wp_p.astype(jnp.bfloat16)                         # (cq, C) bf16

    bp2 = bp.reshape(1, C)
    x2 = x.reshape(B * T, C)                                  # lane-dense 2D slab

    # --- block sizing -------------------------------------------------------
    b_blk = _pick_b_blk(B, T, _target_rows(T, cq, vmem_limit))
    bt_blk = b_blk * T
    n_blocks = B // b_blk

    kernel = functools.partial(_mha_kernel, b_blk=b_blk, seq_len=T, hs_pad=hs_pad)

    flops = B * T * (2 * C * 3 * cq + NUM_HEADS * 4 * T * hs_pad + 2 * cq * C)
    transcendentals = B * NUM_HEADS * T * T
    bytes_accessed = 4 * 2 * B * T * C + 2 * (C * 3 * cq + cq * C) + 4 * C

    out = pl.pallas_call(
        kernel,
        out_shape=jax.ShapeDtypeStruct((B * T, C), jnp.float32),
        grid_spec=pltpu.PrefetchScalarGridSpec(
            num_scalar_prefetch=0,
            grid=(n_blocks,),
            in_specs=[
                pl.BlockSpec((bt_blk, C), lambda i: (i, 0)),       # x slab
                pl.BlockSpec((C, 3 * cq), lambda i: (0, 0)),       # fused W_qkv (bf16)
                pl.BlockSpec((cq, C), lambda i: (0, 0)),           # W_proj (bf16)
                pl.BlockSpec((1, C), lambda i: (0, 0)),            # b_proj
            ],
            out_specs=pl.BlockSpec((bt_blk, C), lambda i: (i, 0)),
        ),
        compiler_params=pltpu.CompilerParams(
            dimension_semantics=("parallel",),
            vmem_limit_bytes=vmem_limit,
        ),
        cost_estimate=pl.CostEstimate(
            flops=flops,
            transcendentals=transcendentals,
            bytes_accessed=bytes_accessed,
        ),
    )(x2, wqkv, wp_p, bp2)
    return out.reshape(B, T, C)


def multi_head_attention(x, wq, wk, wv, wp, bp):
    """x: (B, T, C) float32 -> (B, T, C) float32."""
    kind = _tpu_kind()
    hs_pad = 64 if _pad_heads(kind) else HEAD_SIZE
    vmem_limit = _vmem_limit_bytes(kind)
    return _mha_forward(x, wq, wk, wv, wp, bp, hs_pad=hs_pad, vmem_limit=vmem_limit)


# ----------------------------------------------------------------------------
# Pure-JAX reference (matches the PyTorch module in eval mode)
# ----------------------------------------------------------------------------
def _reference(x, wq, wk, wv, wp, bp):
    B, T, C = x.shape
    q = x @ wq
    k = x @ wk
    v = x @ wv
    q = q.reshape(B, T, NUM_HEADS, HEAD_SIZE).transpose(0, 2, 1, 3)
    k = k.reshape(B, T, NUM_HEADS, HEAD_SIZE).transpose(0, 2, 1, 3)
    v = v.reshape(B, T, NUM_HEADS, HEAD_SIZE).transpose(0, 2, 1, 3)
    s = jnp.einsum("bhqd,bhkd->bhqk", q, k) * (HEAD_SIZE ** -0.5)
    mask = jnp.tril(jnp.ones((T, T), dtype=bool))
    s = jnp.where(mask[None, None], s, -jnp.inf)
    p = jax.nn.softmax(s, axis=-1)
    o = jnp.einsum("bhqk,bhkd->bhqd", p, v)
    o = o.transpose(0, 2, 1, 3).reshape(B, T, NUM_HEADS * HEAD_SIZE)
    return o @ wp + bp


if __name__ == "__main__":
    key = jax.random.PRNGKey(0)
    kx, kq, kk, kv, kp, kb = jax.random.split(key, 6)

    B, T, C = 2, 8, N_EMBEDDING
    x = jax.random.normal(kx, (B, T, C), dtype=jnp.float32)

    # Deterministic synthetic parameters (Linear weights stored as (in, out)).
    scale = 1.0 / (C ** 0.5)
    wq = jax.random.uniform(kq, (C, C), jnp.float32, -scale, scale)
    wk = jax.random.uniform(kk, (C, C), jnp.float32, -scale, scale)
    wv = jax.random.uniform(kv, (C, C), jnp.float32, -scale, scale)
    wp = jax.random.uniform(kp, (C, C), jnp.float32, -scale, scale)
    bp = jax.random.uniform(kb, (C,), jnp.float32, -scale, scale)

    out = multi_head_attention(x, wq, wk, wv, wp, bp)
    out = jax.block_until_ready(out)

    ref = _reference(x, wq, wk, wv, wp, bp)
    assert out.shape == (B, T, C)
    # Tolerance accounts for bf16 MXU operands + EUP approximate reciprocal.
    assert jnp.allclose(out, ref, atol=3e-2, rtol=3e-2), "mismatch vs reference"

    print("KERNEL_OK")
</pallas_src>

<mosaic_0001>
module attributes {stable_mosaic.version = 11 : i64} {
  func.func @_mha_kernel(%arg0: i32, %arg1: memref<8x384xf32, #tpu.memory_space<vmem>>, %arg2: memref<384x1152xbf16, #tpu.memory_space<vmem>>, %arg3: memref<384x384xbf16, #tpu.memory_space<vmem>>, %arg4: memref<1x384xf32, #tpu.memory_space<vmem>>, %arg5: memref<8x384xf32, #tpu.memory_space<vmem>>) attributes {dimension_semantics = [#tpu.dimension_semantics<parallel>], iteration_bounds = array<i64: 2>, scalar_prefetch = 0 : i64, scratch_operands = 0 : i64, tpu.core_type = #tpu.core_type<tc>, window_params = [{transform_indices = @transform_0, window_bounds = array<i64: 8, 384>}, {pipeline_mode = #tpu.pipeline_mode<synchronous>, transform_indices = @transform_1, window_bounds = array<i64: 384, 1152>}, {pipeline_mode = #tpu.pipeline_mode<synchronous>, transform_indices = @transform_2, window_bounds = array<i64: 384, 384>}, {pipeline_mode = #tpu.pipeline_mode<synchronous>, transform_indices = @transform_3, window_bounds = array<i64: 1, 384>}, {transform_indices = @transform_4, window_bounds = array<i64: 8, 384>}]} {
    %c0 = arith.constant 0 : index
    %c0_0 = arith.constant 0 : index
    %0 = vector.load %arg1[%c0, %c0_0] : memref<8x384xf32, #tpu.memory_space<vmem>>, vector<8x384xf32>
    %1 = arith.truncf %0 : vector<8x384xf32> to vector<8x384xbf16>
    %c0_1 = arith.constant 0 : index
    %c0_2 = arith.constant 0 : index
    %2 = vector.load %arg2[%c0_1, %c0_2] : memref<384x1152xbf16, #tpu.memory_space<vmem>>, vector<384x1152xbf16>
    %cst = arith.constant dense<0.000000e+00> : vector<8x1152xf32>
    %3 = tpu.matmul %1, %2, %cst {dimension_numbers = #tpu.dot_dimension_numbers<[1], [0], [0], [1], [0, 0, 1, 1], [], []>} : vector<8x384xbf16>, vector<384x1152xbf16>, vector<8x1152xf32> -> vector<8x1152xf32>
    %4 = vector.extract_strided_slice %3 {offsets = [0, 0], sizes = [8, 384], strides = [1, 1]} : vector<8x1152xf32> to vector<8x384xf32>
    %5 = arith.truncf %4 : vector<8x384xf32> to vector<8x384xbf16>
    %6 = vector.extract_strided_slice %3 {offsets = [0, 384], sizes = [8, 384], strides = [1, 1]} : vector<8x1152xf32> to vector<8x384xf32>
    %7 = arith.truncf %6 : vector<8x384xf32> to vector<8x384xbf16>
    %8 = vector.extract_strided_slice %3 {offsets = [0, 768], sizes = [8, 384], strides = [1, 1]} : vector<8x1152xf32> to vector<8x384xf32>
    %9 = arith.truncf %8 : vector<8x384xf32> to vector<8x384xbf16>
    %10 = tpu.iota {dimensions = array<i32: 0>} : vector<8x8xi32>
    %11 = tpu.iota {dimensions = array<i32: 1>} : vector<8x8xi32>
    %12 = arith.cmpi sle, %11, %10 : vector<8x8xi32>
    %cst_3 = arith.constant 0.000000e+00 : f32
    %cst_4 = arith.constant -1.000000e+30 : f32
    %13 = vector.broadcast %cst_3 : f32 to vector<8x8xf32>
    %14 = vector.broadcast %cst_4 : f32 to vector<8x8xf32>
    %15 = arith.select %12, %13, %14 : vector<8x8xi1>, vector<8x8xf32>
    %c0_5 = arith.constant 0 : index
    %c0_6 = arith.constant 0 : index
    %16 = vector.load %arg3[%c0_5, %c0_6] : memref<384x384xbf16, #tpu.memory_space<vmem>>, vector<384x384xbf16>
    %cst_7 = arith.constant 0.000000e+00 : f32
    %17 = vector.broadcast %cst_7 : f32 to vector<8x384xf32>
    %18 = vector.extract_strided_slice %5 {offsets = [0, 0], sizes = [8, 48], strides = [1, 1]} : vector<8x384xbf16> to vector<8x48xbf16>
    %19 = vector.shape_cast %18 : vector<8x48xbf16> to vector<1x8x48xbf16>
    %20 = vector.extract_strided_slice %7 {offsets = [0, 0], sizes = [8, 48], strides = [1, 1]} : vector<8x384xbf16> to vector<8x48xbf16>
    %21 = vector.shape_cast %20 : vector<8x48xbf16> to vector<1x8x48xbf16>
    %22 = vector.extract_strided_slice %9 {offsets = [0, 0], sizes = [8, 48], strides = [1, 1]} : vector<8x384xbf16> to vector<8x48xbf16>
    %23 = vector.shape_cast %22 : vector<8x48xbf16> to vector<1x8x48xbf16>
    "tpu.trace_start"() <{level = 10 : i32, message = "bqd,bkd->bqk"}> : () -> ()
    %cst_8 = arith.constant dense<0.000000e+00> : vector<1x8x8xf32>
    %24 = tpu.matmul %19, %21, %cst_8 {dimension_numbers = #tpu.dot_dimension_numbers<[2], [2], [1], [1], [0, 0, 0, 1, 1, 1], [0], [0]>} : vector<1x8x48xbf16>, vector<1x8x48xbf16>, vector<1x8x8xf32> -> vector<1x8x8xf32>
    "tpu.trace_stop"() : () -> ()
    %25 = vector.shape_cast %15 : vector<8x8xf32> to vector<1x8x8xf32>
    %26 = arith.addf %24, %25 : vector<1x8x8xf32>
    %cst_9 = arith.constant dense<0xFF800000> : vector<1x8xf32>
    %27 = vector.multi_reduction <maximumf>, %26, %cst_9 [2] : vector<1x8x8xf32> to vector<1x8xf32>
    %28 = vector.shape_cast %27 : vector<1x8xf32> to vector<1x8x1xf32>
    %29 = vector.broadcast %28 : vector<1x8x1xf32> to vector<1x8x8xf32>
    %30 = arith.subf %26, %29 : vector<1x8x8xf32>
    %31 = math.exp %30 : vector<1x8x8xf32>
    %cst_10 = arith.constant dense<0.000000e+00> : vector<1x8xf32>
    %32 = vector.multi_reduction <add>, %31, %cst_10 [2] : vector<1x8x8xf32> to vector<1x8xf32>
    %33 = vector.shape_cast %32 : vector<1x8xf32> to vector<1x8x1xf32>
    %34 = arith.truncf %31 : vector<1x8x8xf32> to vector<1x8x8xbf16>
    "tpu.trace_start"() <{level = 10 : i32, message = "bqk,bkd->bqd"}> : () -> ()
    %cst_11 = arith.constant dense<0.000000e+00> : vector<1x8x48xf32>
    %35 = tpu.matmul %34, %23, %cst_11 {dimension_numbers = #tpu.dot_dimension_numbers<[2], [1], [1], [2], [0, 0, 0, 1, 1, 2], [0], [0]>} : vector<1x8x8xbf16>, vector<1x8x48xbf16>, vector<1x8x48xf32> -> vector<1x8x48xf32>
    "tpu.trace_stop"() : () -> ()
    %36 = tpu.reciprocal %33 {approx = true} : vector<1x8x1xf32> -> vector<1x8x1xf32>
    %37 = vector.broadcast %36 : vector<1x8x1xf32> to vector<1x8x48xf32>
    %38 = arith.mulf %35, %37 : vector<1x8x48xf32>
    %39 = vector.shape_cast %38 : vector<1x8x48xf32> to vector<8x48xf32>
    %40 = arith.truncf %39 : vector<8x48xf32> to vector<8x48xbf16>
    %41 = vector.extract_strided_slice %16 {offsets = [0, 0], sizes = [48, 384], strides = [1, 1]} : vector<384x384xbf16> to vector<48x384xbf16>
    %cst_12 = arith.constant dense<0.000000e+00> : vector<8x384xf32>
    %42 = tpu.matmul %40, %41, %cst_12 {dimension_numbers = #tpu.dot_dimension_numbers<[1], [0], [0], [1], [0, 0, 1, 1], [], []>} : vector<8x48xbf16>, vector<48x384xbf16>, vector<8x384xf32> -> vector<8x384xf32>
    %43 = arith.addf %17, %42 : vector<8x384xf32>
    %44 = vector.extract_strided_slice %5 {offsets = [0, 48], sizes = [8, 48], strides = [1, 1]} : vector<8x384xbf16> to vector<8x48xbf16>
    %45 = vector.shape_cast %44 : vector<8x48xbf16> to vector<1x8x48xbf16>
    %46 = vector.extract_strided_slice %7 {offsets = [0, 48], sizes = [8, 48], strides = [1, 1]} : vector<8x384xbf16> to vector<8x48xbf16>
    %47 = vector.shape_cast %46 : vector<8x48xbf16> to vector<1x8x48xbf16>
    %48 = vector.extract_strided_slice %9 {offsets = [0, 48], sizes = [8, 48], strides = [1, 1]} : vector<8x384xbf16> to vector<8x48xbf16>
    %49 = vector.shape_cast %48 : vector<8x48xbf16> to vector<1x8x48xbf16>
    "tpu.trace_start"() <{level = 10 : i32, message = "bqd,bkd->bqk"}> : () -> ()
    %cst_13 = arith.constant dense<0.000000e+00> : vector<1x8x8xf32>
    %50 = tpu.matmul %45, %47, %cst_13 {dimension_numbers = #tpu.dot_dimension_numbers<[2], [2], [1], [1], [0, 0, 0, 1, 1, 1], [0], [0]>} : vector<1x8x48xbf16>, vector<1x8x48xbf16>, vector<1x8x8xf32> -> vector<1x8x8xf32>
    "tpu.trace_stop"() : () -> ()
    %51 = vector.shape_cast %15 : vector<8x8xf32> to vector<1x8x8xf32>
    %52 = arith.addf %50, %51 : vector<1x8x8xf32>
    %cst_14 = arith.constant dense<0xFF800000> : vector<1x8xf32>
    %53 = vector.multi_reduction <maximumf>, %52, %cst_14 [2] : vector<1x8x8xf32> to vector<1x8xf32>
    %54 = vector.shape_cast %53 : vector<1x8xf32> to vector<1x8x1xf32>
    %55 = vector.broadcast %54 : vector<1x8x1xf32> to vector<1x8x8xf32>
    %56 = arith.subf %52, %55 : vector<1x8x8xf32>
    %57 = math.exp %56 : vector<1x8x8xf32>
    %cst_15 = arith.constant dense<0.000000e+00> : vector<1x8xf32>
    %58 = vector.multi_reduction <add>, %57, %cst_15 [2] : vector<1x8x8xf32> to vector<1x8xf32>
    %59 = vector.shape_cast %58 : vector<1x8xf32> to vector<1x8x1xf32>
    %60 = arith.truncf %57 : vector<1x8x8xf32> to vector<1x8x8xbf16>
    "tpu.trace_start"() <{level = 10 : i32, message = "bqk,bkd->bqd"}> : () -> ()
    %cst_16 = arith.constant dense<0.000000e+00> : vector<1x8x48xf32>
    %61 = tpu.matmul %60, %49, %cst_16 {dimension_numbers = #tpu.dot_dimension_numbers<[2], [1], [1], [2], [0, 0, 0, 1, 1, 2], [0], [0]>} : vector<1x8x8xbf16>, vector<1x8x48xbf16>, vector<1x8x48xf32> -> vector<1x8x48xf32>
    "tpu.trace_stop"() : () -> ()
    %62 = tpu.reciprocal %59 {approx = true} : vector<1x8x1xf32> -> vector<1x8x1xf32>
    %63 = vector.broadcast %62 : vector<1x8x1xf32> to vector<1x8x48xf32>
    %64 = arith.mulf %61, %63 : vector<1x8x48xf32>
    %65 = vector.shape_cast %64 : vector<1x8x48xf32> to vector<8x48xf32>
    %66 = arith.truncf %65 : vector<8x48xf32> to vector<8x48xbf16>
    %67 = vector.extract_strided_slice %16 {offsets = [48, 0], sizes = [48, 384], strides = [1, 1]} : vector<384x384xbf16> to vector<48x384xbf16>
    %cst_17 = arith.constant dense<0.000000e+00> : vector<8x384xf32>
    %68 = tpu.matmul %66, %67, %cst_17 {dimension_numbers = #tpu.dot_dimension_numbers<[1], [0], [0], [1], [0, 0, 1, 1], [], []>} : vector<8x48xbf16>, vector<48x384xbf16>, vector<8x384xf32> -> vector<8x384xf32>
    %69 = arith.addf %43, %68 : vector<8x384xf32>
    %70 = vector.extract_strided_slice %5 {offsets = [0, 96], sizes = [8, 48], strides = [1, 1]} : vector<8x384xbf16> to vector<8x48xbf16>
    %71 = vector.shape_cast %70 : vector<8x48xbf16> to vector<1x8x48xbf16>
    %72 = vector.extract_strided_slice %7 {offsets = [0, 96], sizes = [8, 48], strides = [1, 1]} : vector<8x384xbf16> to vector<8x48xbf16>
    %73 = vector.shape_cast %72 : vector<8x48xbf16> to vector<1x8x48xbf16>
    %74 = vector.extract_strided_slice %9 {offsets = [0, 96], sizes = [8, 48], strides = [1, 1]} : vector<8x384xbf16> to vector<8x48xbf16>
    %75 = vector.shape_cast %74 : vector<8x48xbf16> to vector<1x8x48xbf16>
    "tpu.trace_start"() <{level = 10 : i32, message = "bqd,bkd->bqk"}> : () -> ()
    %cst_18 = arith.constant dense<0.000000e+00> : vector<1x8x8xf32>
    %76 = tpu.matmul %71, %73, %cst_18 {dimension_numbers = #tpu.dot_dimension_numbers<[2], [2], [1], [1], [0, 0, 0, 1, 1, 1], [0], [0]>} : vector<1x8x48xbf16>, vector<1x8x48xbf16>, vector<1x8x8xf32> -> vector<1x8x8xf32>
    "tpu.trace_stop"() : () -> ()
    %77 = vector.shape_cast %15 : vector<8x8xf32> to vector<1x8x8xf32>
    %78 = arith.addf %76, %77 : vector<1x8x8xf32>
    %cst_19 = arith.constant dense<0xFF800000> : vector<1x8xf32>
    %79 = vector.multi_reduction <maximumf>, %78, %cst_19 [2] : vector<1x8x8xf32> to vector<1x8xf32>
    %80 = vector.shape_cast %79 : vector<1x8xf32> to vector<1x8x1xf32>
    %81 = vector.broadcast %80 : vector<1x8x1xf32> to vector<1x8x8xf32>
    %82 = arith.subf %78, %81 : vector<1x8x8xf32>
    %83 = math.exp %82 : vector<1x8x8xf32>
    %cst_20 = arith.constant dense<0.000000e+00> : vector<1x8xf32>
    %84 = vector.multi_reduction <add>, %83, %cst_20 [2] : vector<1x8x8xf32> to vector<1x8xf32>
    %85 = vector.shape_cast %84 : vector<1x8xf32> to vector<1x8x1xf32>
    %86 = arith.truncf %83 : vector<1x8x8xf32> to vector<1x8x8xbf16>
    "tpu.trace_start"() <{level = 10 : i32, message = "bqk,bkd->bqd"}> : () -> ()
    %cst_21 = arith.constant dense<0.000000e+00> : vector<1x8x48xf32>
    %87 = tpu.matmul %86, %75, %cst_21 {dimension_numbers = #tpu.dot_dimension_numbers<[2], [1], [1], [2], [0, 0, 0, 1, 1, 2], [0], [0]>} : vector<1x8x8xbf16>, vector<1x8x48xbf16>, vector<1x8x48xf32> -> vector<1x8x48xf32>
    "tpu.trace_stop"() : () -> ()
    %88 = tpu.reciprocal %85 {approx = true} : vector<1x8x1xf32> -> vector<1x8x1xf32>
    %89 = vector.broadcast %88 : vector<1x8x1xf32> to vector<1x8x48xf32>
    %90 = arith.mulf %87, %89 : vector<1x8x48xf32>
    %91 = vector.shape_cast %90 : vector<1x8x48xf32> to vector<8x48xf32>
    %92 = arith.truncf %91 : vector<8x48xf32> to vector<8x48xbf16>
    %93 = vector.extract_strided_slice %16 {offsets = [96, 0], sizes = [48, 384], strides = [1, 1]} : vector<384x384xbf16> to vector<48x384xbf16>
    %cst_22 = arith.constant dense<0.000000e+00> : vector<8x384xf32>
    %94 = tpu.matmul %92, %93, %cst_22 {dimension_numbers = #tpu.dot_dimension_numbers<[1], [0], [0], [1], [0, 0, 1, 1], [], []>} : vector<8x48xbf16>, vector<48x384xbf16>, vector<8x384xf32> -> vector<8x384xf32>
    %95 = arith.addf %69, %94 : vector<8x384xf32>
    %96 = vector.extract_strided_slice %5 {offsets = [0, 144], sizes = [8, 48], strides = [1, 1]} : vector<8x384xbf16> to vector<8x48xbf16>
    %97 = vector.shape_cast %96 : vector<8x48xbf16> to vector<1x8x48xbf16>
    %98 = vector.extract_strided_slice %7 {offsets = [0, 144], sizes = [8, 48], strides = [1, 1]} : vector<8x384xbf16> to vector<8x48xbf16>
    %99 = vector.shape_cast %98 : vector<8x48xbf16> to vector<1x8x48xbf16>
    %100 = vector.extract_strided_slice %9 {offsets = [0, 144], sizes = [8, 48], strides = [1, 1]} : vector<8x384xbf16> to vector<8x48xbf16>
    %101 = vector.shape_cast %100 : vector<8x48xbf16> to vector<1x8x48xbf16>
    "tpu.trace_start"() <{level = 10 : i32, message = "bqd,bkd->bqk"}> : () -> ()
    %cst_23 = arith.constant dense<0.000000e+00> : vector<1x8x8xf32>
    %102 = tpu.matmul %97, %99, %cst_23 {dimension_numbers = #tpu.dot_dimension_numbers<[2], [2], [1], [1], [0, 0, 0, 1, 1, 1], [0], [0]>} : vector<1x8x48xbf16>, vector<1x8x48xbf16>, vector<1x8x8xf32> -> vector<1x8x8xf32>
    "tpu.trace_stop"() : () -> ()
    %103 = vector.shape_cast %15 : vector<8x8xf32> to vector<1x8x8xf32>
    %104 = arith.addf %102, %103 : vector<1x8x8xf32>
    %cst_24 = arith.constant dense<0xFF800000> : vector<1x8xf32>
    %105 = vector.multi_reduction <maximumf>, %104, %cst_24 [2] : vector<1x8x8xf32> to vector<1x8xf32>
    %106 = vector.shape_cast %105 : vector<1x8xf32> to vector<1x8x1xf32>
    %107 = vector.broadcast %106 : vector<1x8x1xf32> to vector<1x8x8xf32>
    %108 = arith.subf %104, %107 : vector<1x8x8xf32>
    %109 = math.exp %108 : vector<1x8x8xf32>
    %cst_25 = arith.constant dense<0.000000e+00> : vector<1x8xf32>
    %110 = vector.multi_reduction <add>, %109, %cst_25 [2] : vector<1x8x8xf32> to vector<1x8xf32>
    %111 = vector.shape_cast %110 : vector<1x8xf32> to vector<1x8x1xf32>
    %112 = arith.truncf %109 : vector<1x8x8xf32> to vector<1x8x8xbf16>
    "tpu.trace_start"() <{level = 10 : i32, message = "bqk,bkd->bqd"}> : () -> ()
    %cst_26 = arith.constant dense<0.000000e+00> : vector<1x8x48xf32>
    %113 = tpu.matmul %112, %101, %cst_26 {dimension_numbers = #tpu.dot_dimension_numbers<[2], [1], [1], [2], [0, 0, 0, 1, 1, 2], [0], [0]>} : vector<1x8x8xbf16>, vector<1x8x48xbf16>, vector<1x8x48xf32> -> vector<1x8x48xf32>
    "tpu.trace_stop"() : () -> ()
    %114 = tpu.reciprocal %111 {approx = true} : vector<1x8x1xf32> -> vector<1x8x1xf32>
    %115 = vector.broadcast %114 : vector<1x8x1xf32> to vector<1x8x48xf32>
    %116 = arith.mulf %113, %115 : vector<1x8x48xf32>
    %117 = vector.shape_cast %116 : vector<1x8x48xf32> to vector<8x48xf32>
    %118 = arith.truncf %117 : vector<8x48xf32> to vector<8x48xbf16>
    %119 = vector.extract_strided_slice %16 {offsets = [144, 0], sizes = [48, 384], strides = [1, 1]} : vector<384x384xbf16> to vector<48x384xbf16>
    %cst_27 = arith.constant dense<0.000000e+00> : vector<8x384xf32>
    %120 = tpu.matmul %118, %119, %cst_27 {dimension_numbers = #tpu.dot_dimension_numbers<[1], [0], [0], [1], [0, 0, 1, 1], [], []>} : vector<8x48xbf16>, vector<48x384xbf16>, vector<8x384xf32> -> vector<8x384xf32>
    %121 = arith.addf %95, %120 : vector<8x384xf32>
    %122 = vector.extract_strided_slice %5 {offsets = [0, 192], sizes = [8, 48], strides = [1, 1]} : vector<8x384xbf16> to vector<8x48xbf16>
    %123 = vector.shape_cast %122 : vector<8x48xbf16> to vector<1x8x48xbf16>
    %124 = vector.extract_strided_slice %7 {offsets = [0, 192], sizes = [8, 48], strides = [1, 1]} : vector<8x384xbf16> to vector<8x48xbf16>
    %125 = vector.shape_cast %124 : vector<8x48xbf16> to vector<1x8x48xbf16>
    %126 = vector.extract_strided_slice %9 {offsets = [0, 192], sizes = [8, 48], strides = [1, 1]} : vector<8x384xbf16> to vector<8x48xbf16>
    %127 = vector.shape_cast %126 : vector<8x48xbf16> to vector<1x8x48xbf16>
    "tpu.trace_start"() <{level = 10 : i32, message = "bqd,bkd->bqk"}> : () -> ()
    %cst_28 = arith.constant dense<0.000000e+00> : vector<1x8x8xf32>
    %128 = tpu.matmul %123, %125, %cst_28 {dimension_numbers = #tpu.dot_dimension_numbers<[2], [2], [1], [1], [0, 0, 0, 1, 1, 1], [0], [0]>} : vector<1x8x48xbf16>, vector<1x8x48xbf16>, vector<1x8x8xf32> -> vector<1x8x8xf32>
    "tpu.trace_stop"() : () -> ()
    %129 = vector.shape_cast %15 : vector<8x8xf32> to vector<1x8x8xf32>
    %130 = arith.addf %128, %129 : vector<1x8x8xf32>
    %cst_29 = arith.constant dense<0xFF800000> : vector<1x8xf32>
    %131 = vector.multi_reduction <maximumf>, %130, %cst_29 [2] : vector<1x8x8xf32> to vector<1x8xf32>
    %132 = vector.shape_cast %131 : vector<1x8xf32> to vector<1x8x1xf32>
    %133 = vector.broadcast %132 : vector<1x8x1xf32> to vector<1x8x8xf32>
    %134 = arith.subf %130, %133 : vector<1x8x8xf32>
    %135 = math.exp %134 : vector<1x8x8xf32>
    %cst_30 = arith.constant dense<0.000000e+00> : vector<1x8xf32>
    %136 = vector.multi_reduction <add>, %135, %cst_30 [2] : vector<1x8x8xf32> to vector<1x8xf32>
    %137 = vector.shape_cast %136 : vector<1x8xf32> to vector<1x8x1xf32>
    %138 = arith.truncf %135 : vector<1x8x8xf32> to vector<1x8x8xbf16>
    "tpu.trace_start"() <{level = 10 : i32, message = "bqk,bkd->bqd"}> : () -> ()
    %cst_31 = arith.constant dense<0.000000e+00> : vector<1x8x48xf32>
    %139 = tpu.matmul %138, %127, %cst_31 {dimension_numbers = #tpu.dot_dimension_numbers<[2], [1], [1], [2], [0, 0, 0, 1, 1, 2], [0], [0]>} : vector<1x8x8xbf16>, vector<1x8x48xbf16>, vector<1x8x48xf32> -> vector<1x8x48xf32>
    "tpu.trace_stop"() : () -> ()
    %140 = tpu.reciprocal %137 {approx = true} : vector<1x8x1xf32> -> vector<1x8x1xf32>
    %141 = vector.broadcast %140 : vector<1x8x1xf32> to vector<1x8x48xf32>
    %142 = arith.mulf %139, %141 : vector<1x8x48xf32>
    %143 = vector.shape_cast %142 : vector<1x8x48xf32> to vector<8x48xf32>
    %144 = arith.truncf %143 : vector<8x48xf32> to vector<8x48xbf16>
    %145 = vector.extract_strided_slice %16 {offsets = [192, 0], sizes = [48, 384], strides = [1, 1]} : vector<384x384xbf16> to vector<48x384xbf16>
    %cst_32 = arith.constant dense<0.000000e+00> : vector<8x384xf32>
    %146 = tpu.matmul %144, %145, %cst_32 {dimension_numbers = #tpu.dot_dimension_numbers<[1], [0], [0], [1], [0, 0, 1, 1], [], []>} : vector<8x48xbf16>, vector<48x384xbf16>, vector<8x384xf32> -> vector<8x384xf32>
    %147 = arith.addf %121, %146 : vector<8x384xf32>
    %148 = vector.extract_strided_slice %5 {offsets = [0, 240], sizes = [8, 48], strides = [1, 1]} : vector<8x384xbf16> to vector<8x48xbf16>
    %149 = vector.shape_cast %148 : vector<8x48xbf16> to vector<1x8x48xbf16>
    %150 = vector.extract_strided_slice %7 {offsets = [0, 240], sizes = [8, 48], strides = [1, 1]} : vector<8x384xbf16> to vector<8x48xbf16>
    %151 = vector.shape_cast %150 : vector<8x48xbf16> to vector<1x8x48xbf16>
    %152 = vector.extract_strided_slice %9 {offsets = [0, 240], sizes = [8, 48], strides = [1, 1]} : vector<8x384xbf16> to vector<8x48xbf16>
    %153 = vector.shape_cast %152 : vector<8x48xbf16> to vector<1x8x48xbf16>
    "tpu.trace_start"() <{level = 10 : i32, message = "bqd,bkd->bqk"}> : () -> ()
    %cst_33 = arith.constant dense<0.000000e+00> : vector<1x8x8xf32>
    %154 = tpu.matmul %149, %151, %cst_33 {dimension_numbers = #tpu.dot_dimension_numbers<[2], [2], [1], [1], [0, 0, 0, 1, 1, 1], [0], [0]>} : vector<1x8x48xbf16>, vector<1x8x48xbf16>, vector<1x8x8xf32> -> vector<1x8x8xf32>
    "tpu.trace_stop"() : () -> ()
    %155 = vector.shape_cast %15 : vector<8x8xf32> to vector<1x8x8xf32>
    %156 = arith.addf %154, %155 : vector<1x8x8xf32>
    %cst_34 = arith.constant dense<0xFF800000> : vector<1x8xf32>
    %157 = vector.multi_reduction <maximumf>, %156, %cst_34 [2] : vector<1x8x8xf32> to vector<1x8xf32>
    %158 = vector.shape_cast %157 : vector<1x8xf32> to vector<1x8x1xf32>
    %159 = vector.broadcast %158 : vector<1x8x1xf32> to vector<1x8x8xf32>
    %160 = arith.subf %156, %159 : vector<1x8x8xf32>
    %161 = math.exp %160 : vector<1x8x8xf32>
    %cst_35 = arith.constant dense<0.000000e+00> : vector<1x8xf32>
    %162 = vector.multi_reduction <add>, %161, %cst_35 [2] : vector<1x8x8xf32> to vector<1x8xf32>
    %163 = vector.shape_cast %162 : vector<1x8xf32> to vector<1x8x1xf32>
    %164 = arith.truncf %161 : vector<1x8x8xf32> to vector<1x8x8xbf16>
    "tpu.trace_start"() <{level = 10 : i32, message = "bqk,bkd->bqd"}> : () -> ()
    %cst_36 = arith.constant dense<0.000000e+00> : vector<1x8x48xf32>
    %165 = tpu.matmul %164, %153, %cst_36 {dimension_numbers = #tpu.dot_dimension_numbers<[2], [1], [1], [2], [0, 0, 0, 1, 1, 2], [0], [0]>} : vector<1x8x8xbf16>, vector<1x8x48xbf16>, vector<1x8x48xf32> -> vector<1x8x48xf32>
    "tpu.trace_stop"() : () -> ()
    %166 = tpu.reciprocal %163 {approx = true} : vector<1x8x1xf32> -> vector<1x8x1xf32>
    %167 = vector.broadcast %166 : vector<1x8x1xf32> to vector<1x8x48xf32>
    %168 = arith.mulf %165, %167 : vector<1x8x48xf32>
    %169 = vector.shape_cast %168 : vector<1x8x48xf32> to vector<8x48xf32>
    %170 = arith.truncf %169 : vector<8x48xf32> to vector<8x48xbf16>
    %171 = vector.extract_strided_slice %16 {offsets = [240, 0], sizes = [48, 384], strides = [1, 1]} : vector<384x384xbf16> to vector<48x384xbf16>
    %cst_37 = arith.constant dense<0.000000e+00> : vector<8x384xf32>
    %172 = tpu.matmul %170, %171, %cst_37 {dimension_numbers = #tpu.dot_dimension_numbers<[1], [0], [0], [1], [0, 0, 1, 1], [], []>} : vector<8x48xbf16>, vector<48x384xbf16>, vector<8x384xf32> -> vector<8x384xf32>
    %173 = arith.addf %147, %172 : vector<8x384xf32>
    %174 = vector.extract_strided_slice %5 {offsets = [0, 288], sizes = [8, 48], strides = [1, 1]} : vector<8x384xbf16> to vector<8x48xbf16>
    %175 = vector.shape_cast %174 : vector<8x48xbf16> to vector<1x8x48xbf16>
    %176 = vector.extract_strided_slice %7 {offsets = [0, 288], sizes = [8, 48], strides = [1, 1]} : vector<8x384xbf16> to vector<8x48xbf16>
    %177 = vector.shape_cast %176 : vector<8x48xbf16> to vector<1x8x48xbf16>
    %178 = vector.extract_strided_slice %9 {offsets = [0, 288], sizes = [8, 48], strides = [1, 1]} : vector<8x384xbf16> to vector<8x48xbf16>
    %179 = vector.shape_cast %178 : vector<8x48xbf16> to vector<1x8x48xbf16>
    "tpu.trace_start"() <{level = 10 : i32, message = "bqd,bkd->bqk"}> : () -> ()
    %cst_38 = arith.constant dense<0.000000e+00> : vector<1x8x8xf32>
    %180 = tpu.matmul %175, %177, %cst_38 {dimension_numbers = #tpu.dot_dimension_numbers<[2], [2], [1], [1], [0, 0, 0, 1, 1, 1], [0], [0]>} : vector<1x8x48xbf16>, vector<1x8x48xbf16>, vector<1x8x8xf32> -> vector<1x8x8xf32>
    "tpu.trace_stop"() : () -> ()
    %181 = vector.shape_cast %15 : vector<8x8xf32> to vector<1x8x8xf32>
    %182 = arith.addf %180, %181 : vector<1x8x8xf32>
    %cst_39 = arith.constant dense<0xFF800000> : vector<1x8xf32>
    %183 = vector.multi_reduction <maximumf>, %182, %cst_39 [2] : vector<1x8x8xf32> to vector<1x8xf32>
    %184 = vector.shape_cast %183 : vector<1x8xf32> to vector<1x8x1xf32>
    %185 = vector.broadcast %184 : vector<1x8x1xf32> to vector<1x8x8xf32>
    %186 = arith.subf %182, %185 : vector<1x8x8xf32>
    %187 = math.exp %186 : vector<1x8x8xf32>
    %cst_40 = arith.constant dense<0.000000e+00> : vector<1x8xf32>
    %188 = vector.multi_reduction <add>, %187, %cst_40 [2] : vector<1x8x8xf32> to vector<1x8xf32>
    %189 = vector.shape_cast %188 : vector<1x8xf32> to vector<1x8x1xf32>
    %190 = arith.truncf %187 : vector<1x8x8xf32> to vector<1x8x8xbf16>
    "tpu.trace_start"() <{level = 10 : i32, message = "bqk,bkd->bqd"}> : () -> ()
    %cst_41 = arith.constant dense<0.000000e+00> : vector<1x8x48xf32>
    %191 = tpu.matmul %190, %179, %cst_41 {dimension_numbers = #tpu.dot_dimension_numbers<[2], [1], [1], [2], [0, 0, 0, 1, 1, 2], [0], [0]>} : vector<1x8x8xbf16>, vector<1x8x48xbf16>, vector<1x8x48xf32> -> vector<1x8x48xf32>
    "tpu.trace_stop"() : () -> ()
    %192 = tpu.reciprocal %189 {approx = true} : vector<1x8x1xf32> -> vector<1x8x1xf32>
    %193 = vector.broadcast %192 : vector<1x8x1xf32> to vector<1x8x48xf32>
    %194 = arith.mulf %191, %193 : vector<1x8x48xf32>
    %195 = vector.shape_cast %194 : vector<1x8x48xf32> to vector<8x48xf32>
    %196 = arith.truncf %195 : vector<8x48xf32> to vector<8x48xbf16>
    %197 = vector.extract_strided_slice %16 {offsets = [288, 0], sizes = [48, 384], strides = [1, 1]} : vector<384x384xbf16> to vector<48x384xbf16>
    %cst_42 = arith.constant dense<0.000000e+00> : vector<8x384xf32>
    %198 = tpu.matmul %196, %197, %cst_42 {dimension_numbers = #tpu.dot_dimension_numbers<[1], [0], [0], [1], [0, 0, 1, 1], [], []>} : vector<8x48xbf16>, vector<48x384xbf16>, vector<8x384xf32> -> vector<8x384xf32>
    %199 = arith.addf %173, %198 : vector<8x384xf32>
    %200 = vector.extract_strided_slice %5 {offsets = [0, 336], sizes = [8, 48], strides = [1, 1]} : vector<8x384xbf16> to vector<8x48xbf16>
    %201 = vector.shape_cast %200 : vector<8x48xbf16> to vector<1x8x48xbf16>
    %202 = vector.extract_strided_slice %7 {offsets = [0, 336], sizes = [8, 48], strides = [1, 1]} : vector<8x384xbf16> to vector<8x48xbf16>
    %203 = vector.shape_cast %202 : vector<8x48xbf16> to vector<1x8x48xbf16>
    %204 = vector.extract_strided_slice %9 {offsets = [0, 336], sizes = [8, 48], strides = [1, 1]} : vector<8x384xbf16> to vector<8x48xbf16>
    %205 = vector.shape_cast %204 : vector<8x48xbf16> to vector<1x8x48xbf16>
    "tpu.trace_start"() <{level = 10 : i32, message = "bqd,bkd->bqk"}> : () -> ()
    %cst_43 = arith.constant dense<0.000000e+00> : vector<1x8x8xf32>
    %206 = tpu.matmul %201, %203, %cst_43 {dimension_numbers = #tpu.dot_dimension_numbers<[2], [2], [1], [1], [0, 0, 0, 1, 1, 1], [0], [0]>} : vector<1x8x48xbf16>, vector<1x8x48xbf16>, vector<1x8x8xf32> -> vector<1x8x8xf32>
    "tpu.trace_stop"() : () -> ()
    %207 = vector.shape_cast %15 : vector<8x8xf32> to vector<1x8x8xf32>
    %208 = arith.addf %206, %207 : vector<1x8x8xf32>
    %cst_44 = arith.constant dense<0xFF800000> : vector<1x8xf32>
    %209 = vector.multi_reduction <maximumf>, %208, %cst_44 [2] : vector<1x8x8xf32> to vector<1x8xf32>
    %210 = vector.shape_cast %209 : vector<1x8xf32> to vector<1x8x1xf32>
    %211 = vector.broadcast %210 : vector<1x8x1xf32> to vector<1x8x8xf32>
    %212 = arith.subf %208, %211 : vector<1x8x8xf32>
    %213 = math.exp %212 : vector<1x8x8xf32>
    %cst_45 = arith.constant dense<0.000000e+00> : vector<1x8xf32>
    %214 = vector.multi_reduction <add>, %213, %cst_45 [2] : vector<1x8x8xf32> to vector<1x8xf32>
    %215 = vector.shape_cast %214 : vector<1x8xf32> to vector<1x8x1xf32>
    %216 = arith.truncf %213 : vector<1x8x8xf32> to vector<1x8x8xbf16>
    "tpu.trace_start"() <{level = 10 : i32, message = "bqk,bkd->bqd"}> : () -> ()
    %cst_46 = arith.constant dense<0.000000e+00> : vector<1x8x48xf32>
    %217 = tpu.matmul %216, %205, %cst_46 {dimension_numbers = #tpu.dot_dimension_numbers<[2], [1], [1], [2], [0, 0, 0, 1, 1, 2], [0], [0]>} : vector<1x8x8xbf16>, vector<1x8x48xbf16>, vector<1x8x48xf32> -> vector<1x8x48xf32>
    "tpu.trace_stop"() : () -> ()
    %218 = tpu.reciprocal %215 {approx = true} : vector<1x8x1xf32> -> vector<1x8x1xf32>
    %219 = vector.broadcast %218 : vector<1x8x1xf32> to vector<1x8x48xf32>
    %220 = arith.mulf %217, %219 : vector<1x8x48xf32>
    %221 = vector.shape_cast %220 : vector<1x8x48xf32> to vector<8x48xf32>
    %222 = arith.truncf %221 : vector<8x48xf32> to vector<8x48xbf16>
    %223 = vector.extract_strided_slice %16 {offsets = [336, 0], sizes = [48, 384], strides = [1, 1]} : vector<384x384xbf16> to vector<48x384xbf16>
    %cst_47 = arith.constant dense<0.000000e+00> : vector<8x384xf32>
    %224 = tpu.matmul %222, %223, %cst_47 {dimension_numbers = #tpu.dot_dimension_numbers<[1], [0], [0], [1], [0, 0, 1, 1], [], []>} : vector<8x48xbf16>, vector<48x384xbf16>, vector<8x384xf32> -> vector<8x384xf32>
    %225 = arith.addf %199, %224 : vector<8x384xf32>
    %c0_48 = arith.constant 0 : index
    %c0_49 = arith.constant 0 : index
    %226 = vector.load %arg4[%c0_48, %c0_49] : memref<1x384xf32, #tpu.memory_space<vmem>>, vector<1x384xf32>
    %227 = vector.broadcast %226 : vector<1x384xf32> to vector<8x384xf32>
    %228 = arith.addf %225, %227 : vector<8x384xf32>
    %c0_50 = arith.constant 0 : index
    %c0_51 = arith.constant 0 : index
    %229 = vector.load %arg5[%c0_50, %c0_51] : memref<8x384xf32, #tpu.memory_space<vmem>>, vector<8x384xf32>
    tpu.vector_store %arg5[%c0_50, %c0_51], %228 {strides = array<i32>} : memref<8x384xf32, #tpu.memory_space<vmem>>, vector<8x384xf32>,
    return
  }
  func.func @transform_0(%arg0: i32) -> (i32, i32) {
    %c0_i32 = arith.constant 0 : i32
    %c0_i32_0 = arith.constant 0 : i32
    return %arg0, %c0_i32 : i32, i32
  }
  func.func @transform_1(%arg0: i32) -> (i32, i32) {
    %c0_i32 = arith.constant 0 : i32
    %c0_i32_0 = arith.constant 0 : i32
    %c0_i32_1 = arith.constant 0 : i32
    return %c0_i32, %c0_i32_0 : i32, i32
  }
  func.func @transform_2(%arg0: i32) -> (i32, i32) {
    %c0_i32 = arith.constant 0 : i32
    %c0_i32_0 = arith.constant 0 : i32
    %c0_i32_1 = arith.constant 0 : i32
    return %c0_i32, %c0_i32_0 : i32, i32
  }
  func.func @transform_3(%arg0: i32) -> (i32, i32) {
    %c0_i32 = arith.constant 0 : i32
    %c0_i32_0 = arith.constant 0 : i32
    %c0_i32_1 = arith.constant 0 : i32
    return %c0_i32, %c0_i32_0 : i32, i32
  }
  func.func @transform_4(%arg0: i32) -> (i32, i32) {
    %c0_i32 = arith.constant 0 : i32
    %c0_i32_0 = arith.constant 0 : i32
    return %arg0, %c0_i32 : i32, i32
  }
}

</mosaic_0001>

<llo_original>
// kernel: _mha_forward.1
$region0: #{_mha_forward.1}
  #allocation0 [shape = 'u32[]', space=smem, size = 0x4, offset = 0x4, fixed_abs, tag = 'smem constant byte address 0x4 - core index']
  #allocation1 [shape = 'u32[144,128]{1,0:T(1,128)}', space=vmem, size = 0x12000, scoped, tag = 'internal scratch']
  %s0 = inlined_call_operand.vmem [shape: f32[16,384], index: 0, kind: input, shape index: {}]
  %s1 = inlined_call_operand.vmem [shape: bf16[384,1152], index: 1, kind: input, shape index: {}]
  %s2 = inlined_call_operand.vmem [shape: bf16[384,384], index: 2, kind: input, shape index: {}]
  %s3 = inlined_call_operand.vmem [shape: f32[1,384], index: 3, kind: input, shape index: {}]
  %s4 = inlined_call_operand.hbm [shape: f32[16,384], index: 4, kind: output, shape index: {}]
  %s5 = sld [smem:[#allocation0]]
  $region49: #{_mha_forward.1} parent=0
    _
  %s7 = ssub.s32 1, %s5
  %s8 = scalar_select 0, %s7, %s5
  $region1: #{_mha_forward.1} parent=0
    #allocation2 [shape = 'u8[24576]{0}', space=vmem, size = 0x6000, scoped, tag = 'output window, operand 0']
    #allocation3 [shape = 's32[2]{0}', space=sflag, size = 0x8, scoped, tag = 'scoped memory for _mha_forward.1']
    %9 = vsyncpa [#allocation3], 0
    %s10 = scalar_lea.sflag [#allocation3], 1
    %11 = vsyncpa %s10, 0
    loop: start=0, step=1, limit=4
    $region2: #{_mha_forward.1} parent=1 // loop_pre_header
      _
    $region3: #{_mha_forward.1} parent=1 // loop_header
      %s13 = sphi 0, %s17
      %p14 = scmp.ge.s32.totalorder %s13, 4
      %s23 = sphi 0, %s25
      %s26 = sphi 0, %s23
      %s27 = sphi 0, %s26
      %s43 = sphi 0, %s27
      %s47 = sphi 0, %s47
      %s49 = sphi 0, %s47
      %s50 = sphi 0, %s49
      %s64 = sphi 0, %s50
      %s68 = sphi 0, %s68
      %s70 = sphi 0, %s68
      %s71 = sphi 0, %s70
      %s85 = sphi 0, %s71
      %s89 = sphi 0, %s89
      %s91 = sphi 0, %s89
      %s92 = sphi 0, %s91
      %s106 = sphi 0, %s92
      %s112 = sphi 0, %s114
      %s115 = sphi 0, %s112
      %s116 = sphi 0, %s115
      %s132 = sphi 0, %s116
    $region4: #{_mha_forward.1} parent=1 // loop_header_branch
      %16 = sbr.rel (%p14) target = $region8
    $region5: #{_mha_forward.1} parent=1 // loop_body
      %s18 = ssub.s32 %s13, 1
      %s19 = ssub.s32 %s13, 2
      %s20 = sadd.s32 %s13, 1
      %s21 = ssub.s32 %s13, %s20
      %p22 = scmp.eq.s32.totalorder %s21, 0
      %s24 = sadd.s32 %s23, 1
      %s25 = scalar_select %p22, %s23, %s24
      %p28 = pneg %p22
      %p29 = scmp.eq.s32.totalorder %s13, 1
      %p30 = por %p28, %p29
      %p31 = scmp.ne.s32.totalorder %s23, %s26
      %p32 = scmp.eq.s32.totalorder %s13, 0
      %p33 = por %p31, %p32
      %p34 = scmp.ne.s32.totalorder %s23, %s26
      %p35 = scmp.eq.s32.totalorder %s18, 1
      %p36 = por %p34, %p35
      %p37 = scmp.ne.s32.totalorder %s26, %s27
      %p38 = scmp.eq.s32.totalorder %s18, 0
      %p39 = por %p37, %p38
      %p40 = scmp.ne.s32.totalorder %s26, %s27
      %p41 = scmp.eq.s32.totalorder %s19, 1
      %p42 = por %p40, %p41
      %p44 = scmp.ne.s32.totalorder %s27, %s43
      %p45 = scmp.eq.s32.totalorder %s19, 0
      %p46 = por %p44, %p45
      %s48 = sadd.s32 %s47, 1
      %p51 = scmp.eq.s32.totalorder %s13, 1
      %p52 = scmp.ne.s32.totalorder %s47, %s49
      %p53 = scmp.eq.s32.totalorder %s13, 0
      %p54 = por %p52, %p53
      %p55 = scmp.ne.s32.totalorder %s47, %s49
      %p56 = scmp.eq.s32.totalorder %s18, 1
      %p57 = por %p55, %p56
      %p58 = scmp.ne.s32.totalorder %s49, %s50
      %p59 = scmp.eq.s32.totalorder %s18, 0
      %p60 = por %p58, %p59
      %p61 = scmp.ne.s32.totalorder %s49, %s50
      %p62 = scmp.eq.s32.totalorder %s19, 1
      %p63 = por %p61, %p62
      %p65 = scmp.ne.s32.totalorder %s50, %s64
      %p66 = scmp.eq.s32.totalorder %s19, 0
      %p67 = por %p65, %p66
      %s69 = sadd.s32 %s68, 1
      %p72 = scmp.eq.s32.totalorder %s13, 1
      %p73 = scmp.ne.s32.totalorder %s68, %s70
      %p74 = scmp.eq.s32.totalorder %s13, 0
      %p75 = por %p73, %p74
      %p76 = scmp.ne.s32.totalorder %s68, %s70
      %p77 = scmp.eq.s32.totalorder %s18, 1
      %p78 = por %p76, %p77
      %p79 = scmp.ne.s32.totalorder %s70, %s71
      %p80 = scmp.eq.s32.totalorder %s18, 0
      %p81 = por %p79, %p80
      %p82 = scmp.ne.s32.totalorder %s70, %s71
      %p83 = scmp.eq.s32.totalorder %s19, 1
      %p84 = por %p82, %p83
      %p86 = scmp.ne.s32.totalorder %s71, %s85
      %p87 = scmp.eq.s32.totalorder %s19, 0
      %p88 = por %p86, %p87
      %s90 = sadd.s32 %s89, 1
      %p93 = scmp.eq.s32.totalorder %s13, 1
      %p94 = scmp.ne.s32.totalorder %s89, %s91
      %p95 = scmp.eq.s32.totalorder %s13, 0
      %p96 = por %p94, %p95
      %p97 = scmp.ne.s32.totalorder %s89, %s91
      %p98 = scmp.eq.s32.totalorder %s18, 1
      %p99 = por %p97, %p98
      %p100 = scmp.ne.s32.totalorder %s91, %s92
      %p101 = scmp.eq.s32.totalorder %s18, 0
      %p102 = por %p100, %p101
      %p103 = scmp.ne.s32.totalorder %s91, %s92
      %p104 = scmp.eq.s32.totalorder %s19, 1
      %p105 = por %p103, %p104
      %p107 = scmp.ne.s32.totalorder %s92, %s106
      %p108 = scmp.eq.s32.totalorder %s19, 0
      %p109 = por %p107, %p108
      %s110 = ssub.s32 %s13, %s20
      %p111 = scmp.eq.s32.totalorder %s110, 0
      %s113 = sadd.s32 %s112, 1
      %s114 = scalar_select %p111, %s112, %s113
      %p117 = pneg %p111
      %p118 = scmp.eq.s32.totalorder %s13, 1
      %p119 = por %p117, %p118
      %p120 = scmp.ne.s32.totalorder %s112, %s115
      %p121 = scmp.eq.s32.totalorder %s13, 0
      %p122 = por %p120, %p121
      %p123 = scmp.ne.s32.totalorder %s112, %s115
      %p124 = scmp.eq.s32.totalorder %s18, 1
      %p125 = por %p123, %p124
      %p126 = scmp.ne.s32.totalorder %s115, %s116
      %p127 = scmp.eq.s32.totalorder %s18, 0
      %p128 = por %p126, %p127
      %p129 = scmp.ne.s32.totalorder %s115, %s116
      %p130 = scmp.eq.s32.totalorder %s19, 1
      %p131 = por %p129, %p130
      %p133 = scmp.ne.s32.totalorder %s116, %s132
      %p134 = scmp.eq.s32.totalorder %s19, 0
      %p135 = por %p133, %p134
      %p136 = scmp.le.s32.totalorder 1, %s13
      %p137 = scmp.lt.s32.totalorder %s13, 3
      %p138 = pnand %p136, %p137
      %p139 = pneg %p138
      // Predicated region
      $region9: #{_mha_forward.1} parent=5 // pred_check
        _
      $region10: #{_mha_forward.1} parent=5 // pred_check_branch
        %141 = sbr.rel (%p138) target = $region12
      $region11: #{_mha_forward.1} parent=5 // pred_region
        %s142 = ssub.s32 %s13, 1
        // Predicated region
        $region13: #{_mha_forward.1} parent=11 // pred_check
          %p143 = pneg %p60
        $region14: #{_mha_forward.1} parent=11 // pred_check_branch
          %145 = sbr.rel (%p143) target = $region16
        $region15: #{_mha_forward.1} parent=11 // pred_region
          _
        $region16: #{_mha_forward.1} parent=11 // pred_fallthru
          _
        // Predicated region
        $region17: #{_mha_forward.1} parent=11 // pred_check
          %p146 = pneg %p81
        $region18: #{_mha_forward.1} parent=11 // pred_check_branch
          %148 = sbr.rel (%p146) target = $region20
        $region19: #{_mha_forward.1} parent=11 // pred_region
          _
        $region20: #{_mha_forward.1} parent=11 // pred_fallthru
          _
        // Predicated region
        $region21: #{_mha_forward.1} parent=11 // pred_check
          %p149 = pneg %p102
        $region22: #{_mha_forward.1} parent=11 // pred_check_branch
          %151 = sbr.rel (%p149) target = $region24
        $region23: #{_mha_forward.1} parent=11 // pred_region
          _
        $region24: #{_mha_forward.1} parent=11 // pred_fallthru
          _
      $region12: #{_mha_forward.1} parent=5 // pred_fallthru
        _
      %p152 = scmp.lt.s32.totalorder %s13, 2
      // Predicated region
      $region25: #{_mha_forward.1} parent=5 // pred_check
        %p153 = pneg %p152
      $region26: #{_mha_forward.1} parent=5 // pred_check_branch
        %155 = sbr.rel (%p153) target = $region28
      $region27: #{_mha_forward.1} parent=5 // pred_region
        // Predicated region
        $region29: #{_mha_forward.1} parent=27 // pred_check
          %p156 = pneg %p33
        $region30: #{_mha_forward.1} parent=27 // pred_check_branch
          %158 = sbr.rel (%p156) target = $region32
        $region31: #{_mha_forward.1} parent=27 // pred_region
          %p159 = scmp.lt.s32.totalorder %s13, 1
          %s160 = scalar_select %p159, %s13, 1
          %s161 = smul.addr %s160, 3
          %s162 = smul.addr %s161, 8
          %s163 = scalar_lea.vmem %s0, %s162
        $region32: #{_mha_forward.1} parent=27 // pred_fallthru
          _
      $region28: #{_mha_forward.1} parent=5 // pred_fallthru
        _
      %p164 = scmp.le.s32.totalorder 1, %s13
      %p165 = scmp.lt.s32.totalorder %s13, 3
      %p166 = pnand %p164, %p165
      %p167 = pneg %p166
      // Predicated region
      $region33: #{_mha_forward.1} parent=5 // pred_check
        _
      $region34: #{_mha_forward.1} parent=5 // pred_check_branch
        %169 = sbr.rel (%p166) target = $region36
      $region35: #{_mha_forward.1} parent=5 // pred_region
        %s170 = ssub.s32 %s13, 1
        %p171 = scmp.lt.s32.totalorder %s18, 1
        %s172 = scalar_select %p171, %s18, 1
        %s173 = smul.addr %s172, 3
        %s174 = smul.addr %s173, 8
        %s175 = scalar_lea.vmem %s0, %s174
        %p176 = pneg %p39
        %p177 = pneg %p36
        %p178 = pneg %p60
        %p179 = pneg %p57
        %p180 = pneg %p81
        %p181 = pneg %p78
        %p182 = pneg %p102
        %p183 = pneg %p99
        %p184 = pneg %p128
        %p185 = pneg %p125
        %s186 = sand.u32 %s115, 1
        %s187 = scalar_lea.sflag [#allocation3], %s186
        %s188 = sand.u32 %s115, 1
        %s189 = smul.addr %s188, 24
        %s190 = scalar_lea.vmem [#allocation2], %s189
        %p191 = scmp.lt.s32.totalorder %s18, 1
        %s192 = scalar_select %p191, %s18, 1
        %s193 = smul.addr %s192, 3
        %s194 = smul.addr %s193, 8
        %s195 = scalar_lea.vmem %s0, %s194
        %v197 = vld [vmem:[%s195] sm:$0xff]
        %v198 = vld [vmem:[%s195 + $0x8] sm:$0xff]
        %v199 = vld [vmem:[%s195 + $0x10] sm:$0xff]
        %v200 = vpack.c.bf16 %v197, %v197
        %v201 = vpack.c.bf16 %v198, %v198
        %v202 = vpack.c.bf16 %v199, %v199
        %v203 = vld [vmem:[%s1] sm:$0xff]
        %v204 = vld [vmem:[%s1 + $0x8] sm:$0xff]
        %v205 = vld [vmem:[%s1 + $0x10] sm:$0xff]
        %v206 = vld [vmem:[%s1 + $0x18] sm:$0xff]
        %v207 = vld [vmem:[%s1 + $0x20] sm:$0xf]
        %v208 = vld [vmem:[%s1 + $0x24] sm:$0xff]
        %v209 = vld [vmem:[%s1 + $0x2c] sm:$0xff]
        %v210 = vld [vmem:[%s1 + $0x34] sm:$0xff]
        %v211 = vld [vmem:[%s1 + $0x3c] sm:$0xff]
        %v212 = vld [vmem:[%s1 + $0x44] sm:$0xf]
        %v213 = vld [vmem:[%s1 + $0x48] sm:$0xff]
        %v214 = vld [vmem:[%s1 + $0x50] sm:$0xff]
        %v215 = vld [vmem:[%s1 + $0x58] sm:$0xff]
        %v216 = vld [vmem:[%s1 + $0x60] sm:$0xff]
        %v217 = vld [vmem:[%s1 + $0x68] sm:$0xf]
        %v218 = vld [vmem:[%s1 + $0x6c] sm:$0xff]
        %v219 = vld [vmem:[%s1 + $0x74] sm:$0xff]
        %v220 = vld [vmem:[%s1 + $0x7c] sm:$0xff]
        %v221 = vld [vmem:[%s1 + $0x84] sm:$0xff]
        %v222 = vld [vmem:[%s1 + $0x8c] sm:$0xf]
        %v223 = vld [vmem:[%s1 + $0x90] sm:$0xff]
        %v224 = vld [vmem:[%s1 + $0x98] sm:$0xff]
        %v225 = vld [vmem:[%s1 + $0xa0] sm:$0xff]
        %v226 = vld [vmem:[%s1 + $0xa8] sm:$0xff]
        %v227 = vld [vmem:[%s1 + $0xb0] sm:$0xf]
        %v228 = vld [vmem:[%s1 + $0xb4] sm:$0xff]
        %v229 = vld [vmem:[%s1 + $0xbc] sm:$0xff]
        %v230 = vld [vmem:[%s1 + $0xc4] sm:$0xff]
        %v231 = vld [vmem:[%s1 + $0xcc] sm:$0xff]
        %v232 = vld [vmem:[%s1 + $0xd4] sm:$0xf]
        %v233 = vld [vmem:[%s1 + $0xd8] sm:$0xff]
        %v234 = vld [vmem:[%s1 + $0xe0] sm:$0xff]
        %v235 = vld [vmem:[%s1 + $0xe8] sm:$0xff]
        %v236 = vld [vmem:[%s1 + $0xf0] sm:$0xff]
        %v237 = vld [vmem:[%s1 + $0xf8] sm:$0xf]
        %v238 = vld [vmem:[%s1 + $0xfc] sm:$0xff]
        %v239 = vld [vmem:[%s1 + $0x104] sm:$0xff]
        %v240 = vld [vmem:[%s1 + $0x10c] sm:$0xff]
        %v241 = vld [vmem:[%s1 + $0x114] sm:$0xff]
        %v242 = vld [vmem:[%s1 + $0x11c] sm:$0xf]
        %v243 = vld [vmem:[%s1 + $0x120] sm:$0xff]
        %v244 = vld [vmem:[%s1 + $0x128] sm:$0xff]
        %v245 = vld [vmem:[%s1 + $0x130] sm:$0xff]
        %v246 = vld [vmem:[%s1 + $0x138] sm:$0xff]
        %v247 = vld [vmem:[%s1 + $0x140] sm:$0xf]
        %v248 = vld [vmem:[%s1 + $0x144] sm:$0xff]
        %v249 = vld [vmem:[%s1 + $0x14c] sm:$0xff]
        %v250 = vld [vmem:[%s1 + $0x154] sm:$0xff]
        %v251 = vld [vmem:[%s1 + $0x15c] sm:$0xff]
        %v252 = vld [vmem:[%s1 + $0x164] sm:$0xf]
        %v253 = vld [vmem:[%s1 + $0x168] sm:$0xff]
        %v254 = vld [vmem:[%s1 + $0x170] sm:$0xff]
        %v255 = vld [vmem:[%s1 + $0x178] sm:$0xff]
        %v256 = vld [vmem:[%s1 + $0x180] sm:$0xff]
        %v257 = vld [vmem:[%s1 + $0x188] sm:$0xf]
        %v258 = vld [vmem:[%s1 + $0x18c] sm:$0xff]
        %v259 = vld [vmem:[%s1 + $0x194] sm:$0xff]
        %v260 = vld [vmem:[%s1 + $0x19c] sm:$0xff]
        %v261 = vld [vmem:[%s1 + $0x1a4] sm:$0xff]
        %v262 = vld [vmem:[%s1 + $0x1ac] sm:$0xf]
        %v263 = vld [vmem:[%s1 + $0x1b0] sm:$0xff]
        %v264 = vld [vmem:[%s1 + $0x1b8] sm:$0xff]
        %v265 = vld [vmem:[%s1 + $0x1c0] sm:$0xff]
        %v266 = vld [vmem:[%s1 + $0x1c8] sm:$0xff]
        %v267 = vld [vmem:[%s1 + $0x1d0] sm:$0xf]
        %v268 = vld [vmem:[%s1 + $0x1d4] sm:$0xff]
        %v269 = vld [vmem:[%s1 + $0x1dc] sm:$0xff]
        %v270 = vld [vmem:[%s1 + $0x1e4] sm:$0xff]
        %v271 = vld [vmem:[%s1 + $0x1ec] sm:$0xff]
        %v272 = vld [vmem:[%s1 + $0x1f4] sm:$0xf]
        %v273 = vld [vmem:[%s1 + $0x1f8] sm:$0xff]
        %v274 = vld [vmem:[%s1 + $0x200] sm:$0xff]
        %v275 = vld [vmem:[%s1 + $0x208] sm:$0xff]
        %v276 = vld [vmem:[%s1 + $0x210] sm:$0xff]
        %v277 = vld [vmem:[%s1 + $0x218] sm:$0xf]
        %v278 = vld [vmem:[%s1 + $0x21c] sm:$0xff]
        %v279 = vld [vmem:[%s1 + $0x224] sm:$0xff]
        %v280 = vld [vmem:[%s1 + $0x22c] sm:$0xff]
        %v281 = vld [vmem:[%s1 + $0x234] sm:$0xff]
        %v282 = vld [vmem:[%s1 + $0x23c] sm:$0xf]
        %v283 = vld [vmem:[%s1 + $0x240] sm:$0xff]
        %v284 = vld [vmem:[%s1 + $0x248] sm:$0xff]
        %v285 = vld [vmem:[%s1 + $0x250] sm:$0xff]
        %v286 = vld [vmem:[%s1 + $0x258] sm:$0xff]
        %v287 = vld [vmem:[%s1 + $0x260] sm:$0xf]
        %v288 = vld [vmem:[%s1 + $0x264] sm:$0xff]
        %v289 = vld [vmem:[%s1 + $0x26c] sm:$0xff]
        %v290 = vld [vmem:[%s1 + $0x274] sm:$0xff]
        %v291 = vld [vmem:[%s1 + $0x27c] sm:$0xff]
        %v292 = vld [vmem:[%s1 + $0x284] sm:$0xf]
        %v293 = vld [vmem:[%s1 + $0x288] sm:$0xff]
        %v294 = vld [vmem:[%s1 + $0x290] sm:$0xff]
        %v295 = vld [vmem:[%s1 + $0x298] sm:$0xff]
        %v296 = vld [vmem:[%s1 + $0x2a0] sm:$0xff]
        %v297 = vld [vmem:[%s1 + $0x2a8] sm:$0xf]
        %v298 = vld [vmem:[%s1 + $0x2ac] sm:$0xff]
        %v299 = vld [vmem:[%s1 + $0x2b4] sm:$0xff]
        %v300 = vld [vmem:[%s1 + $0x2bc] sm:$0xff]
        %v301 = vld [vmem:[%s1 + $0x2c4] sm:$0xff]
        %v302 = vld [vmem:[%s1 + $0x2cc] sm:$0xf]
        %v303 = vld [vmem:[%s1 + $0x2d0] sm:$0xff]
        %v304 = vld [vmem:[%s1 + $0x2d8] sm:$0xff]
        %v305 = vld [vmem:[%s1 + $0x2e0] sm:$0xff]
        %v306 = vld [vmem:[%s1 + $0x2e8] sm:$0xff]
        %v307 = vld [vmem:[%s1 + $0x2f0] sm:$0xf]
        %v308 = vld [vmem:[%s1 + $0x2f4] sm:$0xff]
        %v309 = vld [vmem:[%s1 + $0x2fc] sm:$0xff]
        %v310 = vld [vmem:[%s1 + $0x304] sm:$0xff]
        %v311 = vld [vmem:[%s1 + $0x30c] sm:$0xff]
        %v312 = vld [vmem:[%s1 + $0x314] sm:$0xf]
        %v313 = vld [vmem:[%s1 + $0x318] sm:$0xff]
        %v314 = vld [vmem:[%s1 + $0x320] sm:$0xff]
        %v315 = vld [vmem:[%s1 + $0x328] sm:$0xff]
        %v316 = vld [vmem:[%s1 + $0x330] sm:$0xff]
        %v317 = vld [vmem:[%s1 + $0x338] sm:$0xf]
        %v318 = vld [vmem:[%s1 + $0x33c] sm:$0xff]
        %v319 = vld [vmem:[%s1 + $0x344] sm:$0xff]
        %v320 = vld [vmem:[%s1 + $0x34c] sm:$0xff]
        %v321 = vld [vmem:[%s1 + $0x354] sm:$0xff]
        %v322 = vld [vmem:[%s1 + $0x35c] sm:$0xf]
        %v323 = vld [vmem:[%s1 + $0x360] sm:$0xff]
        %v324 = vld [vmem:[%s1 + $0x368] sm:$0xff]
        %v325 = vld [vmem:[%s1 + $0x370] sm:$0xff]
        %v326 = vld [vmem:[%s1 + $0x378] sm:$0xff]
        %v327 = vld [vmem:[%s1 + $0x380] sm:$0xf]
        %v328 = vld [vmem:[%s1 + $0x384] sm:$0xff]
        %v329 = vld [vmem:[%s1 + $0x38c] sm:$0xff]
        %v330 = vld [vmem:[%s1 + $0x394] sm:$0xff]
        %v331 = vld [vmem:[%s1 + $0x39c] sm:$0xff]
        %v332 = vld [vmem:[%s1 + $0x3a4] sm:$0xf]
        %v333 = vld [vmem:[%s1 + $0x3a8] sm:$0xff]
        %v334 = vld [vmem:[%s1 + $0x3b0] sm:$0xff]
        %v335 = vld [vmem:[%s1 + $0x3b8] sm:$0xff]
        %v336 = vld [vmem:[%s1 + $0x3c0] sm:$0xff]
        %v337 = vld [vmem:[%s1 + $0x3c8] sm:$0xf]
        %v338 = vld [vmem:[%s1 + $0x3cc] sm:$0xff]
        %v339 = vld [vmem:[%s1 + $0x3d4] sm:$0xff]
        %v340 = vld [vmem:[%s1 + $0x3dc] sm:$0xff]
        %v341 = vld [vmem:[%s1 + $0x3e4] sm:$0xff]
        %v342 = vld [vmem:[%s1 + $0x3ec] sm:$0xf]
        %v343 = vld [vmem:[%s1 + $0x3f0] sm:$0xff]
        %v344 = vld [vmem:[%s1 + $0x3f8] sm:$0xff]
        %v345 = vld [vmem:[%s1 + $0x400] sm:$0xff]
        %v346 = vld [vmem:[%s1 + $0x408] sm:$0xff]
        %v347 = vld [vmem:[%s1 + $0x410] sm:$0xf]
        %v348 = vld [vmem:[%s1 + $0x414] sm:$0xff]
        %v349 = vld [vmem:[%s1 + $0x41c] sm:$0xff]
        %v350 = vld [vmem:[%s1 + $0x424] sm:$0xff]
        %v351 = vld [vmem:[%s1 + $0x42c] sm:$0xff]
        %v352 = vld [vmem:[%s1 + $0x434] sm:$0xf]
        %v353 = vld [vmem:[%s1 + $0x438] sm:$0xff]
        %v354 = vld [vmem:[%s1 + $0x440] sm:$0xff]
        %v355 = vld [vmem:[%s1 + $0x448] sm:$0xff]
        %v356 = vld [vmem:[%s1 + $0x450] sm:$0xff]
        %v357 = vld [vmem:[%s1 + $0x458] sm:$0xf]
        %v358 = vld [vmem:[%s1 + $0x45c] sm:$0xff]
        %v359 = vld [vmem:[%s1 + $0x464] sm:$0xff]
        %v360 = vld [vmem:[%s1 + $0x46c] sm:$0xff]
        %v361 = vld [vmem:[%s1 + $0x474] sm:$0xff]
        %v362 = vld [vmem:[%s1 + $0x47c] sm:$0xf]
        %v363 = vld [vmem:[%s1 + $0x480] sm:$0xff]
        %v364 = vld [vmem:[%s1 + $0x488] sm:$0xff]
        %v365 = vld [vmem:[%s1 + $0x490] sm:$0xff]
        %v366 = vld [vmem:[%s1 + $0x498] sm:$0xff]
        %v367 = vld [vmem:[%s1 + $0x4a0] sm:$0xf]
        %v368 = vld [vmem:[%s1 + $0x4a4] sm:$0xff]
        %v369 = vld [vmem:[%s1 + $0x4ac] sm:$0xff]
        %v370 = vld [vmem:[%s1 + $0x4b4] sm:$0xff]
        %v371 = vld [vmem:[%s1 + $0x4bc] sm:$0xff]
        %v372 = vld [vmem:[%s1 + $0x4c4] sm:$0xf]
        %v373 = vld [vmem:[%s1 + $0x4c8] sm:$0xff]
        %v374 = vld [vmem:[%s1 + $0x4d0] sm:$0xff]
        %v375 = vld [vmem:[%s1 + $0x4d8] sm:$0xff]
        %v376 = vld [vmem:[%s1 + $0x4e0] sm:$0xff]
        %v377 = vld [vmem:[%s1 + $0x4e8] sm:$0xf]
        %v378 = vld [vmem:[%s1 + $0x4ec] sm:$0xff]
        %v379 = vld [vmem:[%s1 + $0x4f4] sm:$0xff]
        %v380 = vld [vmem:[%s1 + $0x4fc] sm:$0xff]
        %v381 = vld [vmem:[%s1 + $0x504] sm:$0xff]
        %v382 = vld [vmem:[%s1 + $0x50c] sm:$0xf]
        %v383 = vld [vmem:[%s1 + $0x510] sm:$0xff]
        %v384 = vld [vmem:[%s1 + $0x518] sm:$0xff]
        %v385 = vld [vmem:[%s1 + $0x520] sm:$0xff]
        %v386 = vld [vmem:[%s1 + $0x528] sm:$0xff]
        %v387 = vld [vmem:[%s1 + $0x530] sm:$0xf]
        %v388 = vld [vmem:[%s1 + $0x534] sm:$0xff]
        %v389 = vld [vmem:[%s1 + $0x53c] sm:$0xff]
        %v390 = vld [vmem:[%s1 + $0x544] sm:$0xff]
        %v391 = vld [vmem:[%s1 + $0x54c] sm:$0xff]
        %v392 = vld [vmem:[%s1 + $0x554] sm:$0xf]
        %v393 = vld [vmem:[%s1 + $0x558] sm:$0xff]
        %v394 = vld [vmem:[%s1 + $0x560] sm:$0xff]
        %v395 = vld [vmem:[%s1 + $0x568] sm:$0xff]
        %v396 = vld [vmem:[%s1 + $0x570] sm:$0xff]
        %v397 = vld [vmem:[%s1 + $0x578] sm:$0xf]
        %v398 = vld [vmem:[%s1 + $0x57c] sm:$0xff]
        %v399 = vld [vmem:[%s1 + $0x584] sm:$0xff]
        %v400 = vld [vmem:[%s1 + $0x58c] sm:$0xff]
        %v401 = vld [vmem:[%s1 + $0x594] sm:$0xff]
        %v402 = vld [vmem:[%s1 + $0x59c] sm:$0xf]
        %v403 = vld [vmem:[%s1 + $0x5a0] sm:$0xff]
        %v404 = vld [vmem:[%s1 + $0x5a8] sm:$0xff]
        %v405 = vld [vmem:[%s1 + $0x5b0] sm:$0xff]
        %v406 = vld [vmem:[%s1 + $0x5b8] sm:$0xff]
        %v407 = vld [vmem:[%s1 + $0x5c0] sm:$0xf]
        %v408 = vld [vmem:[%s1 + $0x5c4] sm:$0xff]
        %v409 = vld [vmem:[%s1 + $0x5cc] sm:$0xff]
        %v410 = vld [vmem:[%s1 + $0x5d4] sm:$0xff]
        %v411 = vld [vmem:[%s1 + $0x5dc] sm:$0xff]
        %v412 = vld [vmem:[%s1 + $0x5e4] sm:$0xf]
        %v413 = vld [vmem:[%s1 + $0x5e8] sm:$0xff]
        %v414 = vld [vmem:[%s1 + $0x5f0] sm:$0xff]
        %v415 = vld [vmem:[%s1 + $0x5f8] sm:$0xff]
        %v416 = vld [vmem:[%s1 + $0x600] sm:$0xff]
        %v417 = vld [vmem:[%s1 + $0x608] sm:$0xf]
        %v418 = vld [vmem:[%s1 + $0x60c] sm:$0xff]
        %v419 = vld [vmem:[%s1 + $0x614] sm:$0xff]
        %v420 = vld [vmem:[%s1 + $0x61c] sm:$0xff]
        %v421 = vld [vmem:[%s1 + $0x624] sm:$0xff]
        %v422 = vld [vmem:[%s1 + $0x62c] sm:$0xf]
        %v423 = vld [vmem:[%s1 + $0x630] sm:$0xff]
        %v424 = vld [vmem:[%s1 + $0x638] sm:$0xff]
        %v425 = vld [vmem:[%s1 + $0x640] sm:$0xff]
        %v426 = vld [vmem:[%s1 + $0x648] sm:$0xff]
        %v427 = vld [vmem:[%s1 + $0x650] sm:$0xf]
        %v428 = vld [vmem:[%s1 + $0x654] sm:$0xff]
        %v429 = vld [vmem:[%s1 + $0x65c] sm:$0xff]
        %v430 = vld [vmem:[%s1 + $0x664] sm:$0xff]
        %v431 = vld [vmem:[%s1 + $0x66c] sm:$0xff]
        %v432 = vld [vmem:[%s1 + $0x674] sm:$0xf]
        %v433 = vld [vmem:[%s1 + $0x678] sm:$0xff]
        %v434 = vld [vmem:[%s1 + $0x680] sm:$0xff]
        %v435 = vld [vmem:[%s1 + $0x688] sm:$0xff]
        %v436 = vld [vmem:[%s1 + $0x690] sm:$0xff]
        %v437 = vld [vmem:[%s1 + $0x698] sm:$0xf]
        %v438 = vld [vmem:[%s1 + $0x69c] sm:$0xff]
        %v439 = vld [vmem:[%s1 + $0x6a4] sm:$0xff]
        %v440 = vld [vmem:[%s1 + $0x6ac] sm:$0xff]
        %v441 = vld [vmem:[%s1 + $0x6b4] sm:$0xff]
        %v442 = vld [vmem:[%s1 + $0x6bc] sm:$0xf]
        %v683 = vunpack.c.l.b16 %v203
        %v684 = vunpack.c.h.b16 %v203
        %v685 = vunpack.c.l.b16 %v204
        %v686 = vunpack.c.h.b16 %v204
        %v687 = vunpack.c.l.b16 %v205
        %v688 = vunpack.c.h.b16 %v205
        %v689 = vunpack.c.l.b16 %v206
        %v690 = vunpack.c.h.b16 %v206
        %v691 = vunpack.c.l.b16 %v207
        %v692 = vunpack.c.l.b16 %v208
        %v693 = vunpack.c.h.b16 %v208
        %v694 = vunpack.c.l.b16 %v209
        %v695 = vunpack.c.h.b16 %v209
        %v696 = vunpack.c.l.b16 %v210
        %v697 = vunpack.c.h.b16 %v210
        %v698 = vunpack.c.l.b16 %v211
        %v699 = vunpack.c.h.b16 %v211
        %v700 = vunpack.c.l.b16 %v212
        %v701 = vunpack.c.l.b16 %v213
        %v702 = vunpack.c.h.b16 %v213
        %v703 = vunpack.c.l.b16 %v214
        %v704 = vunpack.c.h.b16 %v214
        %v705 = vunpack.c.l.b16 %v215
        %v706 = vunpack.c.h.b16 %v215
        %v707 = vunpack.c.l.b16 %v216
        %v708 = vunpack.c.h.b16 %v216
        %v709 = vunpack.c.l.b16 %v217
        %v710 = vunpack.c.l.b16 %v218
        %v711 = vunpack.c.h.b16 %v218
        %v712 = vunpack.c.l.b16 %v219
        %v713 = vunpack.c.h.b16 %v219
        %v714 = vunpack.c.l.b16 %v220
        %v715 = vunpack.c.h.b16 %v220
        %v716 = vunpack.c.l.b16 %v221
        %v717 = vunpack.c.h.b16 %v221
        %v718 = vunpack.c.l.b16 %v222
        %v719 = vunpack.c.l.b16 %v223
        %v720 = vunpack.c.h.b16 %v223
        %v721 = vunpack.c.l.b16 %v224
        %v722 = vunpack.c.h.b16 %v224
        %v723 = vunpack.c.l.b16 %v225
        %v724 = vunpack.c.h.b16 %v225
        %v725 = vunpack.c.l.b16 %v226
        %v726 = vunpack.c.h.b16 %v226
        %v727 = vunpack.c.l.b16 %v227
        %v728 = vunpack.c.l.b16 %v228
        %v729 = vunpack.c.h.b16 %v228
        %v730 = vunpack.c.l.b16 %v229
        %v731 = vunpack.c.h.b16 %v229
        %v732 = vunpack.c.l.b16 %v230
        %v733 = vunpack.c.h.b16 %v230
        %v734 = vunpack.c.l.b16 %v231
        %v735 = vunpack.c.h.b16 %v231
        %v736 = vunpack.c.l.b16 %v232
        %v737 = vunpack.c.l.b16 %v233
        %v738 = vunpack.c.h.b16 %v233
        %v739 = vunpack.c.l.b16 %v234
        %v740 = vunpack.c.h.b16 %v234
        %v741 = vunpack.c.l.b16 %v235
        %v742 = vunpack.c.h.b16 %v235
        %v743 = vunpack.c.l.b16 %v236
        %v744 = vunpack.c.h.b16 %v236
        %v745 = vunpack.c.l.b16 %v237
        %v746 = vunpack.c.l.b16 %v238
        %v747 = vunpack.c.h.b16 %v238
        %v748 = vunpack.c.l.b16 %v239
        %v749 = vunpack.c.h.b16 %v239
        %v750 = vunpack.c.l.b16 %v240
        %v751 = vunpack.c.h.b16 %v240
        %v752 = vunpack.c.l.b16 %v241
        %v753 = vunpack.c.h.b16 %v241
        %v754 = vunpack.c.l.b16 %v242
        %v755 = vunpack.c.l.b16 %v243
        %v756 = vunpack.c.h.b16 %v243
        %v757 = vunpack.c.l.b16 %v244
        %v758 = vunpack.c.h.b16 %v244
        %v759 = vunpack.c.l.b16 %v245
        %v760 = vunpack.c.h.b16 %v245
        %v761 = vunpack.c.l.b16 %v246
        %v762 = vunpack.c.h.b16 %v246
        %v763 = vunpack.c.l.b16 %v247
        %v764 = vunpack.c.l.b16 %v248
        %v765 = vunpack.c.h.b16 %v248
        %v766 = vunpack.c.l.b16 %v249
        %v767 = vunpack.c.h.b16 %v249
        %v768 = vunpack.c.l.b16 %v250
        %v769 = vunpack.c.h.b16 %v250
        %v770 = vunpack.c.l.b16 %v251
        %v771 = vunpack.c.h.b16 %v251
        %v772 = vunpack.c.l.b16 %v252
        %v773 = vunpack.c.l.b16 %v253
        %v774 = vunpack.c.h.b16 %v253
        %v775 = vunpack.c.l.b16 %v254
        %v776 = vunpack.c.h.b16 %v254
        %v777 = vunpack.c.l.b16 %v255
        %v778 = vunpack.c.h.b16 %v255
        %v779 = vunpack.c.l.b16 %v256
        %v780 = vunpack.c.h.b16 %v256
        %v781 = vunpack.c.l.b16 %v257
        %v782 = vunpack.c.l.b16 %v258
        %v783 = vunpack.c.h.b16 %v258
        %v784 = vunpack.c.l.b16 %v259
        %v785 = vunpack.c.h.b16 %v259
        %v786 = vunpack.c.l.b16 %v260
        %v787 = vunpack.c.h.b16 %v260
        %v788 = vunpack.c.l.b16 %v261
        %v789 = vunpack.c.h.b16 %v261
        %v790 = vunpack.c.l.b16 %v262
        %v791 = vunpack.c.l.b16 %v263
        %v792 = vunpack.c.h.b16 %v263
        %v793 = vunpack.c.l.b16 %v264
        %v794 = vunpack.c.h.b16 %v264
        %v795 = vunpack.c.l.b16 %v265
        %v796 = vunpack.c.h.b16 %v265
        %v797 = vunpack.c.l.b16 %v266
        %v798 = vunpack.c.h.b16 %v266
        %v799 = vunpack.c.l.b16 %v267
        %v800 = vunpack.c.l.b16 %v268
        %v801 = vunpack.c.h.b16 %v268
        %v802 = vunpack.c.l.b16 %v269
        %v803 = vunpack.c.h.b16 %v269
        %v804 = vunpack.c.l.b16 %v270
        %v805 = vunpack.c.h.b16 %v270
        %v806 = vunpack.c.l.b16 %v271
        %v807 = vunpack.c.h.b16 %v271
        %v808 = vunpack.c.l.b16 %v272
        %v809 = vunpack.c.l.b16 %v273
        %v810 = vunpack.c.h.b16 %v273
        %v811 = vunpack.c.l.b16 %v274
        %v812 = vunpack.c.h.b16 %v274
        %v813 = vunpack.c.l.b16 %v275
        %v814 = vunpack.c.h.b16 %v275
        %v815 = vunpack.c.l.b16 %v276
        %v816 = vunpack.c.h.b16 %v276
        %v817 = vunpack.c.l.b16 %v277
        %v818 = vunpack.c.l.b16 %v278
        %v819 = vunpack.c.h.b16 %v278
        %v820 = vunpack.c.l.b16 %v279
        %v821 = vunpack.c.h.b16 %v279
        %v822 = vunpack.c.l.b16 %v280
        %v823 = vunpack.c.h.b16 %v280
        %v824 = vunpack.c.l.b16 %v281
        %v825 = vunpack.c.h.b16 %v281
        %v826 = vunpack.c.l.b16 %v282
        %v827 = vunpack.c.l.b16 %v283
        %v828 = vunpack.c.h.b16 %v283
        %v829 = vunpack.c.l.b16 %v284
        %v830 = vunpack.c.h.b16 %v284
        %v831 = vunpack.c.l.b16 %v285
        %v832 = vunpack.c.h.b16 %v285
        %v833 = vunpack.c.l.b16 %v286
        %v834 = vunpack.c.h.b16 %v286
        %v835 = vunpack.c.l.b16 %v287
        %v836 = vunpack.c.l.b16 %v288
        %v837 = vunpack.c.h.b16 %v288
        %v838 = vunpack.c.l.b16 %v289
        %v839 = vunpack.c.h.b16 %v289
        %v840 = vunpack.c.l.b16 %v290
        %v841 = vunpack.c.h.b16 %v290
        %v842 = vunpack.c.l.b16 %v291
        %v843 = vunpack.c.h.b16 %v291
        %v844 = vunpack.c.l.b16 %v292
        %v845 = vunpack.c.l.b16 %v293
        %v846 = vunpack.c.h.b16 %v293
        %v847 = vunpack.c.l.b16 %v294
        %v848 = vunpack.c.h.b16 %v294
        %v849 = vunpack.c.l.b16 %v295
        %v850 = vunpack.c.h.b16 %v295
        %v851 = vunpack.c.l.b16 %v296
        %v852 = vunpack.c.h.b16 %v296
        %v853 = vunpack.c.l.b16 %v297
        %v854 = vunpack.c.l.b16 %v298
        %v855 = vunpack.c.h.b16 %v298
        %v856 = vunpack.c.l.b16 %v299
        %v857 = vunpack.c.h.b16 %v299
        %v858 = vunpack.c.l.b16 %v300
        %v859 = vunpack.c.h.b16 %v300
        %v860 = vunpack.c.l.b16 %v301
        %v861 = vunpack.c.h.b16 %v301
        %v862 = vunpack.c.l.b16 %v302
        %v863 = vunpack.c.l.b16 %v303
        %v864 = vunpack.c.h.b16 %v303
        %v865 = vunpack.c.l.b16 %v304
        %v866 = vunpack.c.h.b16 %v304
        %v867 = vunpack.c.l.b16 %v305
        %v868 = vunpack.c.h.b16 %v305
        %v869 = vunpack.c.l.b16 %v306
        %v870 = vunpack.c.h.b16 %v306
        %v871 = vunpack.c.l.b16 %v307
        %v872 = vunpack.c.l.b16 %v308
        %v873 = vunpack.c.h.b16 %v308
        %v874 = vunpack.c.l.b16 %v309
        %v875 = vunpack.c.h.b16 %v309
        %v876 = vunpack.c.l.b16 %v310
        %v877 = vunpack.c.h.b16 %v310
        %v878 = vunpack.c.l.b16 %v311
        %v879 = vunpack.c.h.b16 %v311
        %v880 = vunpack.c.l.b16 %v312
        %v881 = vunpack.c.l.b16 %v313
        %v882 = vunpack.c.h.b16 %v313
        %v883 = vunpack.c.l.b16 %v314
        %v884 = vunpack.c.h.b16 %v314
        %v885 = vunpack.c.l.b16 %v315
        %v886 = vunpack.c.h.b16 %v315
        %v887 = vunpack.c.l.b16 %v316
        %v888 = vunpack.c.h.b16 %v316
        %v889 = vunpack.c.l.b16 %v317
        %v890 = vunpack.c.l.b16 %v318
        %v891 = vunpack.c.h.b16 %v318
        %v892 = vunpack.c.l.b16 %v319
        %v893 = vunpack.c.h.b16 %v319
        %v894 = vunpack.c.l.b16 %v320
        %v895 = vunpack.c.h.b16 %v320
        %v896 = vunpack.c.l.b16 %v321
        %v897 = vunpack.c.h.b16 %v321
        %v898 = vunpack.c.l.b16 %v322
        %v899 = vunpack.c.l.b16 %v323
        %v900 = vunpack.c.h.b16 %v323
        %v901 = vunpack.c.l.b16 %v324
        %v902 = vunpack.c.h.b16 %v324
        %v903 = vunpack.c.l.b16 %v325
        %v904 = vunpack.c.h.b16 %v325
        %v905 = vunpack.c.l.b16 %v326
        %v906 = vunpack.c.h.b16 %v326
        %v907 = vunpack.c.l.b16 %v327
        %v908 = vunpack.c.l.b16 %v328
        %v909 = vunpack.c.h.b16 %v328
        %v910 = vunpack.c.l.b16 %v329
        %v911 = vunpack.c.h.b16 %v329
        %v912 = vunpack.c.l.b16 %v330
        %v913 = vunpack.c.h.b16 %v330
        %v914 = vunpack.c.l.b16 %v331
        %v915 = vunpack.c.h.b16 %v331
        %v916 = vunpack.c.l.b16 %v332
        %v917 = vunpack.c.l.b16 %v333
        %v918 = vunpack.c.h.b16 %v333
        %v919 = vunpack.c.l.b16 %v334
        %v920 = vunpack.c.h.b16 %v334
        %v921 = vunpack.c.l.b16 %v335
        %v922 = vunpack.c.h.b16 %v335
        %v923 = vunpack.c.l.b16 %v336
        %v924 = vunpack.c.h.b16 %v336
        %v925 = vunpack.c.l.b16 %v337
        %v926 = vunpack.c.l.b16 %v338
        %v927 = vunpack.c.h.b16 %v338
        %v928 = vunpack.c.l.b16 %v339
        %v929 = vunpack.c.h.b16 %v339
        %v930 = vunpack.c.l.b16 %v340
        %v931 = vunpack.c.h.b16 %v340
        %v932 = vunpack.c.l.b16 %v341
        %v933 = vunpack.c.h.b16 %v341
        %v934 = vunpack.c.l.b16 %v342
        %v935 = vunpack.c.l.b16 %v343
        %v936 = vunpack.c.h.b16 %v343
        %v937 = vunpack.c.l.b16 %v344
        %v938 = vunpack.c.h.b16 %v344
        %v939 = vunpack.c.l.b16 %v345
        %v940 = vunpack.c.h.b16 %v345
        %v941 = vunpack.c.l.b16 %v346
        %v942 = vunpack.c.h.b16 %v346
        %v943 = vunpack.c.l.b16 %v347
        %v944 = vunpack.c.l.b16 %v348
        %v945 = vunpack.c.h.b16 %v348
        %v946 = vunpack.c.l.b16 %v349
        %v947 = vunpack.c.h.b16 %v349
        %v948 = vunpack.c.l.b16 %v350
        %v949 = vunpack.c.h.b16 %v350
        %v950 = vunpack.c.l.b16 %v351
        %v951 = vunpack.c.h.b16 %v351
        %v952 = vunpack.c.l.b16 %v352
        %v953 = vunpack.c.l.b16 %v353
        %v954 = vunpack.c.h.b16 %v353
        %v955 = vunpack.c.l.b16 %v354
        %v956 = vunpack.c.h.b16 %v354
        %v957 = vunpack.c.l.b16 %v355
        %v958 = vunpack.c.h.b16 %v355
        %v959 = vunpack.c.l.b16 %v356
        %v960 = vunpack.c.h.b16 %v356
        %v961 = vunpack.c.l.b16 %v357
        %v962 = vunpack.c.l.b16 %v358
        %v963 = vunpack.c.h.b16 %v358
        %v964 = vunpack.c.l.b16 %v359
        %v965 = vunpack.c.h.b16 %v359
        %v966 = vunpack.c.l.b16 %v360
        %v967 = vunpack.c.h.b16 %v360
        %v968 = vunpack.c.l.b16 %v361
        %v969 = vunpack.c.h.b16 %v361
        %v970 = vunpack.c.l.b16 %v362
        %v971 = vunpack.c.l.b16 %v363
        %v972 = vunpack.c.h.b16 %v363
        %v973 = vunpack.c.l.b16 %v364
        %v974 = vunpack.c.h.b16 %v364
        %v975 = vunpack.c.l.b16 %v365
        %v976 = vunpack.c.h.b16 %v365
        %v977 = vunpack.c.l.b16 %v366
        %v978 = vunpack.c.h.b16 %v366
        %v979 = vunpack.c.l.b16 %v367
        %v980 = vunpack.c.l.b16 %v368
        %v981 = vunpack.c.h.b16 %v368
        %v982 = vunpack.c.l.b16 %v369
        %v983 = vunpack.c.h.b16 %v369
        %v984 = vunpack.c.l.b16 %v370
        %v985 = vunpack.c.h.b16 %v370
        %v986 = vunpack.c.l.b16 %v371
        %v987 = vunpack.c.h.b16 %v371
        %v988 = vunpack.c.l.b16 %v372
        %v989 = vunpack.c.l.b16 %v373
        %v990 = vunpack.c.h.b16 %v373
        %v991 = vunpack.c.l.b16 %v374
        %v992 = vunpack.c.h.b16 %v374
        %v993 = vunpack.c.l.b16 %v375
        %v994 = vunpack.c.h.b16 %v375
        %v995 = vunpack.c.l.b16 %v376
        %v996 = vunpack.c.h.b16 %v376
        %v997 = vunpack.c.l.b16 %v377
        %v998 = vunpack.c.l.b16 %v378
        %v999 = vunpack.c.h.b16 %v378
        %v1000 = vunpack.c.l.b16 %v379
        %v1001 = vunpack.c.h.b16 %v379
        %v1002 = vunpack.c.l.b16 %v380
        %v1003 = vunpack.c.h.b16 %v380
        %v1004 = vunpack.c.l.b16 %v381
        %v1005 = vunpack.c.h.b16 %v381
        %v1006 = vunpack.c.l.b16 %v382
        %v1007 = vunpack.c.l.b16 %v383
        %v1008 = vunpack.c.h.b16 %v383
        %v1009 = vunpack.c.l.b16 %v384
        %v1010 = vunpack.c.h.b16 %v384
        %v1011 = vunpack.c.l.b16 %v385
        %v1012 = vunpack.c.h.b16 %v385
        %v1013 = vunpack.c.l.b16 %v386
        %v1014 = vunpack.c.h.b16 %v386
        %v1015 = vunpack.c.l.b16 %v387
        %v1016 = vunpack.c.l.b16 %v388
        %v1017 = vunpack.c.h.b16 %v388
        %v1018 = vunpack.c.l.b16 %v389
        %v1019 = vunpack.c.h.b16 %v389
        %v1020 = vunpack.c.l.b16 %v390
        %v1021 = vunpack.c.h.b16 %v390
        %v1022 = vunpack.c.l.b16 %v391
        %v1023 = vunpack.c.h.b16 %v391
        %v1024 = vunpack.c.l.b16 %v392
        %v1025 = vunpack.c.l.b16 %v393
        %v1026 = vunpack.c.h.b16 %v393
        %v1027 = vunpack.c.l.b16 %v394
        %v1028 = vunpack.c.h.b16 %v394
        %v1029 = vunpack.c.l.b16 %v395
        %v1030 = vunpack.c.h.b16 %v395
        %v1031 = vunpack.c.l.b16 %v396
        %v1032 = vunpack.c.h.b16 %v396
        %v1033 = vunpack.c.l.b16 %v397
        %v1034 = vunpack.c.l.b16 %v398
        %v1035 = vunpack.c.h.b16 %v398
        %v1036 = vunpack.c.l.b16 %v399
        %v1037 = vunpack.c.h.b16 %v399
        %v1038 = vunpack.c.l.b16 %v400
        %v1039 = vunpack.c.h.b16 %v400
        %v1040 = vunpack.c.l.b16 %v401
        %v1041 = vunpack.c.h.b16 %v401
        %v1042 = vunpack.c.l.b16 %v402
        %v1043 = vunpack.c.l.b16 %v403
        %v1044 = vunpack.c.h.b16 %v403
        %v1045 = vunpack.c.l.b16 %v404
        %v1046 = vunpack.c.h.b16 %v404
        %v1047 = vunpack.c.l.b16 %v405
        %v1048 = vunpack.c.h.b16 %v405
        %v1049 = vunpack.c.l.b16 %v406
        %v1050 = vunpack.c.h.b16 %v406
        %v1051 = vunpack.c.l.b16 %v407
        %v1052 = vunpack.c.l.b16 %v408
        %v1053 = vunpack.c.h.b16 %v408
        %v1054 = vunpack.c.l.b16 %v409
        %v1055 = vunpack.c.h.b16 %v409
        %v1056 = vunpack.c.l.b16 %v410
        %v1057 = vunpack.c.h.b16 %v410
        %v1058 = vunpack.c.l.b16 %v411
        %v1059 = vunpack.c.h.b16 %v411
        %v1060 = vunpack.c.l.b16 %v412
        %v1061 = vunpack.c.l.b16 %v413
        %v1062 = vunpack.c.h.b16 %v413
        %v1063 = vunpack.c.l.b16 %v414
        %v1064 = vunpack.c.h.b16 %v414
        %v1065 = vunpack.c.l.b16 %v415
        %v1066 = vunpack.c.h.b16 %v415
        %v1067 = vunpack.c.l.b16 %v416
        %v1068 = vunpack.c.h.b16 %v416
        %v1069 = vunpack.c.l.b16 %v417
        %v1070 = vunpack.c.l.b16 %v418
        %v1071 = vunpack.c.h.b16 %v418
        %v1072 = vunpack.c.l.b16 %v419
        %v1073 = vunpack.c.h.b16 %v419
        %v1074 = vunpack.c.l.b16 %v420
        %v1075 = vunpack.c.h.b16 %v420
        %v1076 = vunpack.c.l.b16 %v421
        %v1077 = vunpack.c.h.b16 %v421
        %v1078 = vunpack.c.l.b16 %v422
        %v1079 = vunpack.c.l.b16 %v423
        %v1080 = vunpack.c.h.b16 %v423
        %v1081 = vunpack.c.l.b16 %v424
        %v1082 = vunpack.c.h.b16 %v424
        %v1083 = vunpack.c.l.b16 %v425
        %v1084 = vunpack.c.h.b16 %v425
        %v1085 = vunpack.c.l.b16 %v426
        %v1086 = vunpack.c.h.b16 %v426
        %v1087 = vunpack.c.l.b16 %v427
        %v1088 = vunpack.c.l.b16 %v428
        %v1089 = vunpack.c.h.b16 %v428
        %v1090 = vunpack.c.l.b16 %v429
        %v1091 = vunpack.c.h.b16 %v429
        %v1092 = vunpack.c.l.b16 %v430
        %v1093 = vunpack.c.h.b16 %v430
        %v1094 = vunpack.c.l.b16 %v431
        %v1095 = vunpack.c.h.b16 %v431
        %v1096 = vunpack.c.l.b16 %v432
        %v1097 = vunpack.c.l.b16 %v433
        %v1098 = vunpack.c.h.b16 %v433
        %v1099 = vunpack.c.l.b16 %v434
        %v1100 = vunpack.c.h.b16 %v434
        %v1101 = vunpack.c.l.b16 %v435
        %v1102 = vunpack.c.h.b16 %v435
        %v1103 = vunpack.c.l.b16 %v436
        %v1104 = vunpack.c.h.b16 %v436
        %v1105 = vunpack.c.l.b16 %v437
        %v1106 = vunpack.c.l.b16 %v438
        %v1107 = vunpack.c.h.b16 %v438
        %v1108 = vunpack.c.l.b16 %v439
        %v1109 = vunpack.c.h.b16 %v439
        %v1110 = vunpack.c.l.b16 %v440
        %v1111 = vunpack.c.h.b16 %v440
        %v1112 = vunpack.c.l.b16 %v441
        %v1113 = vunpack.c.h.b16 %v441
        %v1114 = vunpack.c.l.b16 %v442
        %v1115 = vpack.c.b16 %v692, %v683
        %v1116 = vpack.c.b16 %v693, %v684
        %v1117 = vpack.c.b16 %v694, %v685
        %v1118 = vpack.c.b16 %v695, %v686
        %v1119 = vpack.c.b16 %v696, %v687
        %v1120 = vpack.c.b16 %v697, %v688
        %v1121 = vpack.c.b16 %v698, %v689
        %v1122 = vpack.c.b16 %v699, %v690
        %v1123 = vpack.c.b16 %v700, %v691
        %v1124 = vpack.c.b16 %v710, %v701
        %v1125 = vpack.c.b16 %v711, %v702
        %v1126 = vpack.c.b16 %v712, %v703
        %v1127 = vpack.c.b16 %v713, %v704
        %v1128 = vpack.c.b16 %v714, %v705
        %v1129 = vpack.c.b16 %v715, %v706
        %v1130 = vpack.c.b16 %v716, %v707
        %v1131 = vpack.c.b16 %v717, %v708
        %v1132 = vpack.c.b16 %v718, %v709
        %v1133 = vpack.c.b16 %v728, %v719
        %v1134 = vpack.c.b16 %v729, %v720
        %v1135 = vpack.c.b16 %v730, %v721
        %v1136 = vpack.c.b16 %v731, %v722
        %v1137 = vpack.c.b16 %v732, %v723
        %v1138 = vpack.c.b16 %v733, %v724
        %v1139 = vpack.c.b16 %v734, %v725
        %v1140 = vpack.c.b16 %v735, %v726
        %v1141 = vpack.c.b16 %v736, %v727
        %v1142 = vpack.c.b16 %v746, %v737
        %v1143 = vpack.c.b16 %v747, %v738
        %v1144 = vpack.c.b16 %v748, %v739
        %v1145 = vpack.c.b16 %v749, %v740
        %v1146 = vpack.c.b16 %v750, %v741
        %v1147 = vpack.c.b16 %v751, %v742
        %v1148 = vpack.c.b16 %v752, %v743
        %v1149 = vpack.c.b16 %v753, %v744
        %v1150 = vpack.c.b16 %v754, %v745
        %v1151 = vpack.c.b16 %v764, %v755
        %v1152 = vpack.c.b16 %v765, %v756
        %v1153 = vpack.c.b16 %v766, %v757
        %v1154 = vpack.c.b16 %v767, %v758
        %v1155 = vpack.c.b16 %v768, %v759
        %v1156 = vpack.c.b16 %v769, %v760
        %v1157 = vpack.c.b16 %v770, %v761
        %v1158 = vpack.c.b16 %v771, %v762
        %v1159 = vpack.c.b16 %v772, %v763
        %v1160 = vpack.c.b16 %v782, %v773
        %v1161 = vpack.c.b16 %v783, %v774
        %v1162 = vpack.c.b16 %v784, %v775
        %v1163 = vpack.c.b16 %v785, %v776
        %v1164 = vpack.c.b16 %v786, %v777
        %v1165 = vpack.c.b16 %v787, %v778
        %v1166 = vpack.c.b16 %v788, %v779
        %v1167 = vpack.c.b16 %v789, %v780
        %v1168 = vpack.c.b16 %v790, %v781
        %v1169 = vpack.c.b16 %v800, %v791
        %v1170 = vpack.c.b16 %v801, %v792
        %v1171 = vpack.c.b16 %v802, %v793
        %v1172 = vpack.c.b16 %v803, %v794
        %v1173 = vpack.c.b16 %v804, %v795
        %v1174 = vpack.c.b16 %v805, %v796
        %v1175 = vpack.c.b16 %v806, %v797
        %v1176 = vpack.c.b16 %v807, %v798
        %v1177 = vpack.c.b16 %v808, %v799
        %v1178 = vpack.c.b16 %v818, %v809
        %v1179 = vpack.c.b16 %v819, %v810
        %v1180 = vpack.c.b16 %v820, %v811
        %v1181 = vpack.c.b16 %v821, %v812
        %v1182 = vpack.c.b16 %v822, %v813
        %v1183 = vpack.c.b16 %v823, %v814
        %v1184 = vpack.c.b16 %v824, %v815
        %v1185 = vpack.c.b16 %v825, %v816
        %v1186 = vpack.c.b16 %v826, %v817
        %v1187 = vpack.c.b16 %v836, %v827
        %v1188 = vpack.c.b16 %v837, %v828
        %v1189 = vpack.c.b16 %v838, %v829
        %v1190 = vpack.c.b16 %v839, %v830
        %v1191 = vpack.c.b16 %v840, %v831
        %v1192 = vpack.c.b16 %v841, %v832
        %v1193 = vpack.c.b16 %v842, %v833
        %v1194 = vpack.c.b16 %v843, %v834
        %v1195 = vpack.c.b16 %v844, %v835
        %v1196 = vpack.c.b16 %v854, %v845
        %v1197 = vpack.c.b16 %v855, %v846
        %v1198 = vpack.c.b16 %v856, %v847
        %v1199 = vpack.c.b16 %v857, %v848
        %v1200 = vpack.c.b16 %v858, %v849
        %v1201 = vpack.c.b16 %v859, %v850
        %v1202 = vpack.c.b16 %v860, %v851
        %v1203 = vpack.c.b16 %v861, %v852
        %v1204 = vpack.c.b16 %v862, %v853
        %v1205 = vpack.c.b16 %v872, %v863
        %v1206 = vpack.c.b16 %v873, %v864
        %v1207 = vpack.c.b16 %v874, %v865
        %v1208 = vpack.c.b16 %v875, %v866
        %v1209 = vpack.c.b16 %v876, %v867
        %v1210 = vpack.c.b16 %v877, %v868
        %v1211 = vpack.c.b16 %v878, %v869
        %v1212 = vpack.c.b16 %v879, %v870
        %v1213 = vpack.c.b16 %v880, %v871
        %v1214 = vpack.c.b16 %v890, %v881
        %v1215 = vpack.c.b16 %v891, %v882
        %v1216 = vpack.c.b16 %v892, %v883
        %v1217 = vpack.c.b16 %v893, %v884
        %v1218 = vpack.c.b16 %v894, %v885
        %v1219 = vpack.c.b16 %v895, %v886
        %v1220 = vpack.c.b16 %v896, %v887
        %v1221 = vpack.c.b16 %v897, %v888
        %v1222 = vpack.c.b16 %v898, %v889
        %v1223 = vpack.c.b16 %v908, %v899
        %v1224 = vpack.c.b16 %v909, %v900
        %v1225 = vpack.c.b16 %v910, %v901
        %v1226 = vpack.c.b16 %v911, %v902
        %v1227 = vpack.c.b16 %v912, %v903
        %v1228 = vpack.c.b16 %v913, %v904
        %v1229 = vpack.c.b16 %v914, %v905
        %v1230 = vpack.c.b16 %v915, %v906
        %v1231 = vpack.c.b16 %v916, %v907
        %v1232 = vpack.c.b16 %v926, %v917
        %v1233 = vpack.c.b16 %v927, %v918
        %v1234 = vpack.c.b16 %v928, %v919
        %v1235 = vpack.c.b16 %v929, %v920
        %v1236 = vpack.c.b16 %v930, %v921
        %v1237 = vpack.c.b16 %v931, %v922
        %v1238 = vpack.c.b16 %v932, %v923
        %v1239 = vpack.c.b16 %v933, %v924
        %v1240 = vpack.c.b16 %v934, %v925
        %v1241 = vpack.c.b16 %v944, %v935
        %v1242 = vpack.c.b16 %v945, %v936
        %v1243 = vpack.c.b16 %v946, %v937
        %v1244 = vpack.c.b16 %v947, %v938
        %v1245 = vpack.c.b16 %v948, %v939
        %v1246 = vpack.c.b16 %v949, %v940
        %v1247 = vpack.c.b16 %v950, %v941
        %v1248 = vpack.c.b16 %v951, %v942
        %v1249 = vpack.c.b16 %v952, %v943
        %v1250 = vpack.c.b16 %v962, %v953
        %v1251 = vpack.c.b16 %v963, %v954
        %v1252 = vpack.c.b16 %v964, %v955
        %v1253 = vpack.c.b16 %v965, %v956
        %v1254 = vpack.c.b16 %v966, %v957
        %v1255 = vpack.c.b16 %v967, %v958
        %v1256 = vpack.c.b16 %v968, %v959
        %v1257 = vpack.c.b16 %v969, %v960
        %v1258 = vpack.c.b16 %v970, %v961
        %v1259 = vpack.c.b16 %v980, %v971
        %v1260 = vpack.c.b16 %v981, %v972
        %v1261 = vpack.c.b16 %v982, %v973
        %v1262 = vpack.c.b16 %v983, %v974
        %v1263 = vpack.c.b16 %v984, %v975
        %v1264 = vpack.c.b16 %v985, %v976
        %v1265 = vpack.c.b16 %v986, %v977
        %v1266 = vpack.c.b16 %v987, %v978
        %v1267 = vpack.c.b16 %v988, %v979
        %v1268 = vpack.c.b16 %v998, %v989
        %v1269 = vpack.c.b16 %v999, %v990
        %v1270 = vpack.c.b16 %v1000, %v991
        %v1271 = vpack.c.b16 %v1001, %v992
        %v1272 = vpack.c.b16 %v1002, %v993
        %v1273 = vpack.c.b16 %v1003, %v994
        %v1274 = vpack.c.b16 %v1004, %v995
        %v1275 = vpack.c.b16 %v1005, %v996
        %v1276 = vpack.c.b16 %v1006, %v997
        %v1277 = vpack.c.b16 %v1016, %v1007
        %v1278 = vpack.c.b16 %v1017, %v1008
        %v1279 = vpack.c.b16 %v1018, %v1009
        %v1280 = vpack.c.b16 %v1019, %v1010
        %v1281 = vpack.c.b16 %v1020, %v1011
        %v1282 = vpack.c.b16 %v1021, %v1012
        %v1283 = vpack.c.b16 %v1022, %v1013
        %v1284 = vpack.c.b16 %v1023, %v1014
        %v1285 = vpack.c.b16 %v1024, %v1015
        %v1286 = vpack.c.b16 %v1034, %v1025
        %v1287 = vpack.c.b16 %v1035, %v1026
        %v1288 = vpack.c.b16 %v1036, %v1027
        %v1289 = vpack.c.b16 %v1037, %v1028
        %v1290 = vpack.c.b16 %v1038, %v1029
        %v1291 = vpack.c.b16 %v1039, %v1030
        %v1292 = vpack.c.b16 %v1040, %v1031
        %v1293 = vpack.c.b16 %v1041, %v1032
        %v1294 = vpack.c.b16 %v1042, %v1033
        %v1295 = vpack.c.b16 %v1052, %v1043
        %v1296 = vpack.c.b16 %v1053, %v1044
        %v1297 = vpack.c.b16 %v1054, %v1045
        %v1298 = vpack.c.b16 %v1055, %v1046
        %v1299 = vpack.c.b16 %v1056, %v1047
        %v1300 = vpack.c.b16 %v1057, %v1048
        %v1301 = vpack.c.b16 %v1058, %v1049
        %v1302 = vpack.c.b16 %v1059, %v1050
        %v1303 = vpack.c.b16 %v1060, %v1051
        %v1304 = vpack.c.b16 %v1070, %v1061
        %v1305 = vpack.c.b16 %v1071, %v1062
        %v1306 = vpack.c.b16 %v1072, %v1063
        %v1307 = vpack.c.b16 %v1073, %v1064
        %v1308 = vpack.c.b16 %v1074, %v1065
        %v1309 = vpack.c.b16 %v1075, %v1066
        %v1310 = vpack.c.b16 %v1076, %v1067
        %v1311 = vpack.c.b16 %v1077, %v1068
        %v1312 = vpack.c.b16 %v1078, %v1069
        %v1313 = vpack.c.b16 %v1088, %v1079
        %v1314 = vpack.c.b16 %v1089, %v1080
        %v1315 = vpack.c.b16 %v1090, %v1081
        %v1316 = vpack.c.b16 %v1091, %v1082
        %v1317 = vpack.c.b16 %v1092, %v1083
        %v1318 = vpack.c.b16 %v1093, %v1084
        %v1319 = vpack.c.b16 %v1094, %v1085
        %v1320 = vpack.c.b16 %v1095, %v1086
        %v1321 = vpack.c.b16 %v1096, %v1087
        %v1322 = vpack.c.b16 %v1106, %v1097
        %v1323 = vpack.c.b16 %v1107, %v1098
        %v1324 = vpack.c.b16 %v1108, %v1099
        %v1325 = vpack.c.b16 %v1109, %v1100
        %v1326 = vpack.c.b16 %v1110, %v1101
        %v1327 = vpack.c.b16 %v1111, %v1102
        %v1328 = vpack.c.b16 %v1112, %v1103
        %v1329 = vpack.c.b16 %v1113, %v1104
        %v1330 = vpack.c.b16 %v1114, %v1105
        %1547 = vmatprep.subr.bf16.mxu0 %v1179
        %1548 = vmatpush1.bf16.msra.mxu0 %v1178
        %1549 = vmatprep.subr.bf16.mxu0 %v1170
        %1550 = vmatpush1.bf16.msra.mxu0 %v1169
        %1551 = vmatprep.subr.bf16.mxu0 %v1161
        %1552 = vmatpush1.bf16.msra.mxu0 %v1160
        %1553 = vmatprep.subr.bf16.mxu0 %v1152
        %1554 = vmatpush1.bf16.msra.mxu0 %v1151
        %1555 = vmatprep.subr.bf16.mxu0 %v1143
        %1556 = vmatpush1.bf16.msra.mxu0 %v1142
        %1557 = vmatprep.subr.bf16.mxu0 %v1134
        %1558 = vmatpush1.bf16.msra.mxu0 %v1133
        %1559 = vmatprep.subr.bf16.mxu0 %v1125
        %1560 = vmatpush1.bf16.msra.mxu0 %v1124
        %1561 = vmatprep.subr.bf16.mxu0 %v1116
        %1562 = vmatpush1.bf16.msra.mxu0 %v1115
        %1563 = vmatprep.subr.bf16.mxu0 %v1251
        %1564 = vmatpush2.bf16.msra.mxu0 %v1250
        %1565 = vmatprep.subr.bf16.mxu0 %v1242
        %1566 = vmatpush2.bf16.msra.mxu0 %v1241
        %1567 = vmatprep.subr.bf16.mxu0 %v1233
        %1568 = vmatpush2.bf16.msra.mxu0 %v1232
        %1569 = vmatprep.subr.bf16.mxu0 %v1224
        %1570 = vmatpush2.bf16.msra.mxu0 %v1223
        %1571 = vmatprep.subr.bf16.mxu0 %v1215
        %1572 = vmatpush2.bf16.msra.mxu0 %v1214
        %1573 = vmatprep.subr.bf16.mxu0 %v1206
        %1574 = vmatpush2.bf16.msra.mxu0 %v1205
        %1575 = vmatprep.subr.bf16.mxu0 %v1197
        %1576 = vmatpush2.bf16.msra.mxu0 %v1196
        %1577 = vmatprep.subr.bf16.mxu0 %v1188
        %1578 = vmatpush2.bf16.msra.mxu0 %v1187
        %1579 = vmatprep.mubr.bf16.mxu0 %v201
        %1580 = vmatmul.mubr.bf16.gmra.mxu0 %v200
        %v1581 = vpop.f32.mrf.mxu0
        %v1582 = vadd.f32 0.0, %v1581
        %v1583 = vpop.f32.mrf.mxu0
        %v1584 = vadd.f32 0.0, %v1583
        %v1585 = vpop.f32.mrf.mxu0
        %v1586 = vpop.f32.mrf.mxu0
        %1587 = vdwg.mxu0
        %1588 = vmatprep.subr.bf16.mxu0 %v1323
        %1589 = vmatpush1.bf16.msra.mxu0 %v1322
        %1590 = vmatprep.subr.bf16.mxu0 %v1314
        %1591 = vmatpush1.bf16.msra.mxu0 %v1313
        %1592 = vmatprep.subr.bf16.mxu0 %v1305
        %1593 = vmatpush1.bf16.msra.mxu0 %v1304
        %1594 = vmatprep.subr.bf16.mxu0 %v1296
        %1595 = vmatpush1.bf16.msra.mxu0 %v1295
        %1596 = vmatprep.subr.bf16.mxu0 %v1287
        %1597 = vmatpush1.bf16.msra.mxu0 %v1286
        %1598 = vmatprep.subr.bf16.mxu0 %v1278
        %1599 = vmatpush1.bf16.msra.mxu0 %v1277
        %1600 = vmatprep.subr.bf16.mxu0 %v1269
        %1601 = vmatpush1.bf16.msra.mxu0 %v1268
        %1602 = vmatprep.subr.bf16.mxu0 %v1260
        %1603 = vmatpush1.bf16.msra.mxu0 %v1259
        %1604 = vmatprep.subr.bf16.mxu0 0
        %1605 = vmatpush2.bf16.msra.mxu0 0
        %1606 = vmatprep.subr.bf16.mxu0 0
        %1607 = vmatpush2.bf16.msra.mxu0 0
        %1608 = vmatprep.subr.bf16.mxu0 0
        %1609 = vmatpush2.bf16.msra.mxu0 0
        %1610 = vmatprep.subr.bf16.mxu0 0
        %1611 = vmatpush2.bf16.msra.mxu0 0
        %1612 = vmatprep.subr.bf16.mxu0 0
        %1613 = vmatpush2.bf16.msra.mxu0 0
        %1614 = vmatprep.subr.bf16.mxu0 0
        %1615 = vmatpush2.bf16.msra.mxu0 0
        %1616 = vmatprep.subr.bf16.mxu0 0
        %1617 = vmatpush2.bf16.msra.mxu0 0
        %1618 = vmatprep.subr.bf16.mxu0 0
        %1619 = vmatpush2.bf16.msra.mxu0 0
        %1620 = vmatprep.mubr.bf16.mxu0 0
        %1621 = vmatmul.mubr.bf16.gmra.mxu0 %v202
        %v1622 = vpop.f32.mrf.mxu0
        %v1623 = vadd.f32 %v1582, %v1622
        %v1624 = vpop.f32.mrf.mxu0
        %v1625 = vadd.f32 %v1584, %v1624
        %v1626 = vpop.f32.mrf.mxu0
        %v1627 = vpop.f32.mrf.mxu0
        %1628 = vdwg.mxu0
        %1629 = vmatprep.subr.bf16.mxu0 %v1181
        %1630 = vmatpush1.bf16.msra.mxu0 %v1180
        %1631 = vmatprep.subr.bf16.mxu0 %v1172
        %1632 = vmatpush1.bf16.msra.mxu0 %v1171
        %1633 = vmatprep.subr.bf16.mxu0 %v1163
        %1634 = vmatpush1.bf16.msra.mxu0 %v1162
        %1635 = vmatprep.subr.bf16.mxu0 %v1154
        %1636 = vmatpush1.bf16.msra.mxu0 %v1153
        %1637 = vmatprep.subr.bf16.mxu0 %v1145
        %1638 = vmatpush1.bf16.msra.mxu0 %v1144
        %1639 = vmatprep.subr.bf16.mxu0 %v1136
        %1640 = vmatpush1.bf16.msra.mxu0 %v1135
        %1641 = vmatprep.subr.bf16.mxu0 %v1127
        %1642 = vmatpush1.bf16.msra.mxu0 %v1126
        %1643 = vmatprep.subr.bf16.mxu0 %v1118
        %1644 = vmatpush1.bf16.msra.mxu0 %v1117
        %1645 = vmatprep.subr.bf16.mxu0 %v1253
        %1646 = vmatpush2.bf16.msra.mxu0 %v1252
        %1647 = vmatprep.subr.bf16.mxu0 %v1244
        %1648 = vmatpush2.bf16.msra.mxu0 %v1243
        %1649 = vmatprep.subr.bf16.mxu0 %v1235
        %1650 = vmatpush2.bf16.msra.mxu0 %v1234
        %1651 = vmatprep.subr.bf16.mxu0 %v1226
        %1652 = vmatpush2.bf16.msra.mxu0 %v1225
        %1653 = vmatprep.subr.bf16.mxu0 %v1217
        %1654 = vmatpush2.bf16.msra.mxu0 %v1216
        %1655 = vmatprep.subr.bf16.mxu0 %v1208
        %1656 = vmatpush2.bf16.msra.mxu0 %v1207
        %1657 = vmatprep.subr.bf16.mxu0 %v1199
        %1658 = vmatpush2.bf16.msra.mxu0 %v1198
        %1659 = vmatprep.subr.bf16.mxu0 %v1190
        %1660 = vmatpush2.bf16.msra.mxu0 %v1189
        %1661 = vmatprep.mubr.bf16.mxu0 %v201
        %1662 = vmatmul.mubr.bf16.gmra.mxu0 %v200
        %v1663 = vpop.f32.mrf.mxu0
        %v1664 = vadd.f32 0.0, %v1663
        %v1665 = vpop.f32.mrf.mxu0
        %v1666 = vadd.f32 0.0, %v1665
        %v1667 = vpop.f32.mrf.mxu0
        %v1668 = vpop.f32.mrf.mxu0
        %1669 = vdwg.mxu0
        %1670 = vmatprep.subr.bf16.mxu0 %v1325
        %1671 = vmatpush1.bf16.msra.mxu0 %v1324
        %1672 = vmatprep.subr.bf16.mxu0 %v1316
        %1673 = vmatpush1.bf16.msra.mxu0 %v1315
        %1674 = vmatprep.subr.bf16.mxu0 %v1307
        %1675 = vmatpush1.bf16.msra.mxu0 %v1306
        %1676 = vmatprep.subr.bf16.mxu0 %v1298
        %1677 = vmatpush1.bf16.msra.mxu0 %v1297
        %1678 = vmatprep.subr.bf16.mxu0 %v1289
        %1679 = vmatpush1.bf16.msra.mxu0 %v1288
        %1680 = vmatprep.subr.bf16.mxu0 %v1280
        %1681 = vmatpush1.bf16.msra.mxu0 %v1279
        %1682 = vmatprep.subr.bf16.mxu0 %v1271
        %1683 = vmatpush1.bf16.msra.mxu0 %v1270
        %1684 = vmatprep.subr.bf16.mxu0 %v1262
        %1685 = vmatpush1.bf16.msra.mxu0 %v1261
        %1686 = vmatprep.subr.bf16.mxu0 0
        %1687 = vmatpush2.bf16.msra.mxu0 0
        %1688 = vmatprep.subr.bf16.mxu0 0
        %1689 = vmatpush2.bf16.msra.mxu0 0
        %1690 = vmatprep.subr.bf16.mxu0 0
        %1691 = vmatpush2.bf16.msra.mxu0 0
        %1692 = vmatprep.subr.bf16.mxu0 0
        %1693 = vmatpush2.bf16.msra.mxu0 0
        %1694 = vmatprep.subr.bf16.mxu0 0
        %1695 = vmatpush2.bf16.msra.mxu0 0
        %1696 = vmatprep.subr.bf16.mxu0 0
        %1697 = vmatpush2.bf16.msra.mxu0 0
        %1698 = vmatprep.subr.bf16.mxu0 0
        %1699 = vmatpush2.bf16.msra.mxu0 0
        %1700 = vmatprep.subr.bf16.mxu0 0
        %1701 = vmatpush2.bf16.msra.mxu0 0
        %1702 = vmatprep.mubr.bf16.mxu0 0
        %1703 = vmatmul.mubr.bf16.gmra.mxu0 %v202
        %v1704 = vpop.f32.mrf.mxu0
        %v1705 = vadd.f32 %v1664, %v1704
        %v1706 = vpop.f32.mrf.mxu0
        %v1707 = vadd.f32 %v1666, %v1706
        %v1708 = vpop.f32.mrf.mxu0
        %v1709 = vpop.f32.mrf.mxu0
        %1710 = vdwg.mxu0
        %1711 = vmatprep.subr.bf16.mxu0 %v1183
        %1712 = vmatpush1.bf16.msra.mxu0 %v1182
        %1713 = vmatprep.subr.bf16.mxu0 %v1174
        %1714 = vmatpush1.bf16.msra.mxu0 %v1173
        %1715 = vmatprep.subr.bf16.mxu0 %v1165
        %1716 = vmatpush1.bf16.msra.mxu0 %v1164
        %1717 = vmatprep.subr.bf16.mxu0 %v1156
        %1718 = vmatpush1.bf16.msra.mxu0 %v1155
        %1719 = vmatprep.subr.bf16.mxu0 %v1147
        %1720 = vmatpush1.bf16.msra.mxu0 %v1146
        %1721 = vmatprep.subr.bf16.mxu0 %v1138
        %1722 = vmatpush1.bf16.msra.mxu0 %v1137
        %1723 = vmatprep.subr.bf16.mxu0 %v1129
        %1724 = vmatpush1.bf16.msra.mxu0 %v1128
        %1725 = vmatprep.subr.bf16.mxu0 %v1120
        %1726 = vmatpush1.bf16.msra.mxu0 %v1119
        %1727 = vmatprep.subr.bf16.mxu0 %v1255
        %1728 = vmatpush2.bf16.msra.mxu0 %v1254
        %1729 = vmatprep.subr.bf16.mxu0 %v1246
        %1730 = vmatpush2.bf16.msra.mxu0 %v1245
        %1731 = vmatprep.subr.bf16.mxu0 %v1237
        %1732 = vmatpush2.bf16.msra.mxu0 %v1236
        %1733 = vmatprep.subr.bf16.mxu0 %v1228
        %1734 = vmatpush2.bf16.msra.mxu0 %v1227
        %1735 = vmatprep.subr.bf16.mxu0 %v1219
        %1736 = vmatpush2.bf16.msra.mxu0 %v1218
        %1737 = vmatprep.subr.bf16.mxu0 %v1210
        %1738 = vmatpush2.bf16.msra.mxu0 %v1209
        %1739 = vmatprep.subr.bf16.mxu0 %v1201
        %1740 = vmatpush2.bf16.msra.mxu0 %v1200
        %1741 = vmatprep.subr.bf16.mxu0 %v1192
        %1742 = vmatpush2.bf16.msra.mxu0 %v1191
        %1743 = vmatprep.mubr.bf16.mxu0 %v201
        %1744 = vmatmul.mubr.bf16.gmra.mxu0 %v200
        %v1745 = vpop.f32.mrf.mxu0
        %v1746 = vadd.f32 0.0, %v1745
        %v1747 = vpop.f32.mrf.mxu0
        %v1748 = vadd.f32 0.0, %v1747
        %v1749 = vpop.f32.mrf.mxu0
        %v1750 = vpop.f32.mrf.mxu0
        %1751 = vdwg.mxu0
        %1752 = vmatprep.subr.bf16.mxu0 %v1327
        %1753 = vmatpush1.bf16.msra.mxu0 %v1326
        %1754 = vmatprep.subr.bf16.mxu0 %v1318
        %1755 = vmatpush1.bf16.msra.mxu0 %v1317
        %1756 = vmatprep.subr.bf16.mxu0 %v1309
        %1757 = vmatpush1.bf16.msra.mxu0 %v1308
        %1758 = vmatprep.subr.bf16.mxu0 %v1300
        %1759 = vmatpush1.bf16.msra.mxu0 %v1299
        %1760 = vmatprep.subr.bf16.mxu0 %v1291
        %1761 = vmatpush1.bf16.msra.mxu0 %v1290
        %1762 = vmatprep.subr.bf16.mxu0 %v1282
        %1763 = vmatpush1.bf16.msra.mxu0 %v1281
        %1764 = vmatprep.subr.bf16.mxu0 %v1273
        %1765 = vmatpush1.bf16.msra.mxu0 %v1272
        %1766 = vmatprep.subr.bf16.mxu0 %v1264
        %1767 = vmatpush1.bf16.msra.mxu0 %v1263
        %1768 = vmatprep.subr.bf16.mxu0 0
        %1769 = vmatpush2.bf16.msra.mxu0 0
        %1770 = vmatprep.subr.bf16.mxu0 0
        %1771 = vmatpush2.bf16.msra.mxu0 0
        %1772 = vmatprep.subr.bf16.mxu0 0
        %1773 = vmatpush2.bf16.msra.mxu0 0
        %1774 = vmatprep.subr.bf16.mxu0 0
        %1775 = vmatpush2.bf16.msra.mxu0 0
        %1776 = vmatprep.subr.bf16.mxu0 0
        %1777 = vmatpush2.bf16.msra.mxu0 0
        %1778 = vmatprep.subr.bf16.mxu0 0
        %1779 = vmatpush2.bf16.msra.mxu0 0
        %1780 = vmatprep.subr.bf16.mxu0 0
        %1781 = vmatpush2.bf16.msra.mxu0 0
        %1782 = vmatprep.subr.bf16.mxu0 0
        %1783 = vmatpush2.bf16.msra.mxu0 0
        %1784 = vmatprep.mubr.bf16.mxu0 0
        %1785 = vmatmul.mubr.bf16.gmra.mxu0 %v202
        %v1786 = vpop.f32.mrf.mxu0
        %v1787 = vadd.f32 %v1746, %v1786
        %v1788 = vpop.f32.mrf.mxu0
        %v1789 = vadd.f32 %v1748, %v1788
        %v1790 = vpop.f32.mrf.mxu0
        %v1791 = vpop.f32.mrf.mxu0
        %1792 = vdwg.mxu0
        %1793 = vmatprep.subr.bf16.mxu0 %v1185
        %1794 = vmatpush1.bf16.msra.mxu0 %v1184
        %1795 = vmatprep.subr.bf16.mxu0 %v1176
        %1796 = vmatpush1.bf16.msra.mxu0 %v1175
        %1797 = vmatprep.subr.bf16.mxu0 %v1167
        %1798 = vmatpush1.bf16.msra.mxu0 %v1166
        %1799 = vmatprep.subr.bf16.mxu0 %v1158
        %1800 = vmatpush1.bf16.msra.mxu0 %v1157
        %1801 = vmatprep.subr.bf16.mxu0 %v1149
        %1802 = vmatpush1.bf16.msra.mxu0 %v1148
        %1803 = vmatprep.subr.bf16.mxu0 %v1140
        %1804 = vmatpush1.bf16.msra.mxu0 %v1139
        %1805 = vmatprep.subr.bf16.mxu0 %v1131
        %1806 = vmatpush1.bf16.msra.mxu0 %v1130
        %1807 = vmatprep.subr.bf16.mxu0 %v1122
        %1808 = vmatpush1.bf16.msra.mxu0 %v1121
        %1809 = vmatprep.subr.bf16.mxu0 %v1257
        %1810 = vmatpush2.bf16.msra.mxu0 %v1256
        %1811 = vmatprep.subr.bf16.mxu0 %v1248
        %1812 = vmatpush2.bf16.msra.mxu0 %v1247
        %1813 = vmatprep.subr.bf16.mxu0 %v1239
        %1814 = vmatpush2.bf16.msra.mxu0 %v1238
        %1815 = vmatprep.subr.bf16.mxu0 %v1230
        %1816 = vmatpush2.bf16.msra.mxu0 %v1229
        %1817 = vmatprep.subr.bf16.mxu0 %v1221
        %1818 = vmatpush2.bf16.msra.mxu0 %v1220
        %1819 = vmatprep.subr.bf16.mxu0 %v1212
        %1820 = vmatpush2.bf16.msra.mxu0 %v1211
        %1821 = vmatprep.subr.bf16.mxu0 %v1203
        %1822 = vmatpush2.bf16.msra.mxu0 %v1202
        %1823 = vmatprep.subr.bf16.mxu0 %v1194
        %1824 = vmatpush2.bf16.msra.mxu0 %v1193
        %1825 = vmatprep.mubr.bf16.mxu0 %v201
        %1826 = vmatmul.mubr.bf16.gmra.mxu0 %v200
        %v1827 = vpop.f32.mrf.mxu0
        %v1828 = vadd.f32 0.0, %v1827
        %v1829 = vpop.f32.mrf.mxu0
        %v1830 = vadd.f32 0.0, %v1829
        %v1831 = vpop.f32.mrf.mxu0
        %v1832 = vpop.f32.mrf.mxu0
        %1833 = vdwg.mxu0
        %1834 = vmatprep.subr.bf16.mxu0 %v1329
        %1835 = vmatpush1.bf16.msra.mxu0 %v1328
        %1836 = vmatprep.subr.bf16.mxu0 %v1320
        %1837 = vmatpush1.bf16.msra.mxu0 %v1319
        %1838 = vmatprep.subr.bf16.mxu0 %v1311
        %1839 = vmatpush1.bf16.msra.mxu0 %v1310
        %1840 = vmatprep.subr.bf16.mxu0 %v1302
        %1841 = vmatpush1.bf16.msra.mxu0 %v1301
        %1842 = vmatprep.subr.bf16.mxu0 %v1293
        %1843 = vmatpush1.bf16.msra.mxu0 %v1292
        %1844 = vmatprep.subr.bf16.mxu0 %v1284
        %1845 = vmatpush1.bf16.msra.mxu0 %v1283
        %1846 = vmatprep.subr.bf16.mxu0 %v1275
        %1847 = vmatpush1.bf16.msra.mxu0 %v1274
        %1848 = vmatprep.subr.bf16.mxu0 %v1266
        %1849 = vmatpush1.bf16.msra.mxu0 %v1265
        %1850 = vmatprep.subr.bf16.mxu0 0
        %1851 = vmatpush2.bf16.msra.mxu0 0
        %1852 = vmatprep.subr.bf16.mxu0 0
        %1853 = vmatpush2.bf16.msra.mxu0 0
        %1854 = vmatprep.subr.bf16.mxu0 0
        %1855 = vmatpush2.bf16.msra.mxu0 0
        %1856 = vmatprep.subr.bf16.mxu0 0
        %1857 = vmatpush2.bf16.msra.mxu0 0
        %1858 = vmatprep.subr.bf16.mxu0 0
        %1859 = vmatpush2.bf16.msra.mxu0 0
        %1860 = vmatprep.subr.bf16.mxu0 0
        %1861 = vmatpush2.bf16.msra.mxu0 0
        %1862 = vmatprep.subr.bf16.mxu0 0
        %1863 = vmatpush2.bf16.msra.mxu0 0
        %1864 = vmatprep.subr.bf16.mxu0 0
        %1865 = vmatpush2.bf16.msra.mxu0 0
        %1866 = vmatprep.mubr.bf16.mxu0 0
        %1867 = vmatmul.mubr.bf16.gmra.mxu0 %v202
        %v1868 = vpop.f32.mrf.mxu0
        %v1869 = vadd.f32 %v1828, %v1868
        %v1870 = vpop.f32.mrf.mxu0
        %v1871 = vadd.f32 %v1830, %v1870
        %v1872 = vpop.f32.mrf.mxu0
        %v1873 = vpop.f32.mrf.mxu0
        %1874 = vdwg.mxu0
        %1875 = vmatprep.subr.bf16.mxu0 0
        %1876 = vmatpush1.bf16.msra.mxu0 %v1186
        %1877 = vmatprep.subr.bf16.mxu0 0
        %1878 = vmatpush1.bf16.msra.mxu0 %v1177
        %1879 = vmatprep.subr.bf16.mxu0 0
        %1880 = vmatpush1.bf16.msra.mxu0 %v1168
        %1881 = vmatprep.subr.bf16.mxu0 0
        %1882 = vmatpush1.bf16.msra.mxu0 %v1159
        %1883 = vmatprep.subr.bf16.mxu0 0
        %1884 = vmatpush1.bf16.msra.mxu0 %v1150
        %1885 = vmatprep.subr.bf16.mxu0 0
        %1886 = vmatpush1.bf16.msra.mxu0 %v1141
        %1887 = vmatprep.subr.bf16.mxu0 0
        %1888 = vmatpush1.bf16.msra.mxu0 %v1132
        %1889 = vmatprep.subr.bf16.mxu0 0
        %1890 = vmatpush1.bf16.msra.mxu0 %v1123
        %1891 = vmatprep.subr.bf16.mxu0 0
        %1892 = vmatpush2.bf16.msra.mxu0 %v1258
        %1893 = vmatprep.subr.bf16.mxu0 0
        %1894 = vmatpush2.bf16.msra.mxu0 %v1249
        %1895 = vmatprep.subr.bf16.mxu0 0
        %1896 = vmatpush2.bf16.msra.mxu0 %v1240
        %1897 = vmatprep.subr.bf16.mxu0 0
        %1898 = vmatpush2.bf16.msra.mxu0 %v1231
        %1899 = vmatprep.subr.bf16.mxu0 0
        %1900 = vmatpush2.bf16.msra.mxu0 %v1222
        %1901 = vmatprep.subr.bf16.mxu0 0
        %1902 = vmatpush2.bf16.msra.mxu0 %v1213
        %1903 = vmatprep.subr.bf16.mxu0 0
        %1904 = vmatpush2.bf16.msra.mxu0 %v1204
        %1905 = vmatprep.subr.bf16.mxu0 0
        %1906 = vmatpush2.bf16.msra.mxu0 %v1195
        %1907 = vmatprep.mubr.bf16.mxu0 %v201
        %1908 = vmatmul.mubr.bf16.gmra.mxu0 %v200
        %v1909 = vpop.f32.mrf.mxu0
        %v1910 = vadd.f32 0.0, %v1909
        %v1911 = vpop.f32.mrf.mxu0
        %v1912 = vpop.f32.mrf.mxu0
        %v1913 = vpop.f32.mrf.mxu0
        %1914 = vdwg.mxu0
        %1915 = vmatprep.subr.bf16.mxu0 0
        %1916 = vmatpush1.bf16.msra.mxu0 %v1330
        %1917 = vmatprep.subr.bf16.mxu0 0
        %1918 = vmatpush1.bf16.msra.mxu0 %v1321
        %1919 = vmatprep.subr.bf16.mxu0 0
        %1920 = vmatpush1.bf16.msra.mxu0 %v1312
        %1921 = vmatprep.subr.bf16.mxu0 0
        %1922 = vmatpush1.bf16.msra.mxu0 %v1303
        %1923 = vmatprep.subr.bf16.mxu0 0
        %1924 = vmatpush1.bf16.msra.mxu0 %v1294
        %1925 = vmatprep.subr.bf16.mxu0 0
        %1926 = vmatpush1.bf16.msra.mxu0 %v1285
        %1927 = vmatprep.subr.bf16.mxu0 0
        %1928 = vmatpush1.bf16.msra.mxu0 %v1276
        %1929 = vmatprep.subr.bf16.mxu0 0
        %1930 = vmatpush1.bf16.msra.mxu0 %v1267
        %1931 = vmatprep.subr.bf16.mxu0 0
        %1932 = vmatpush2.bf16.msra.mxu0 0
        %1933 = vmatprep.subr.bf16.mxu0 0
        %1934 = vmatpush2.bf16.msra.mxu0 0
        %1935 = vmatprep.subr.bf16.mxu0 0
        %1936 = vmatpush2.bf16.msra.mxu0 0
        %1937 = vmatprep.subr.bf16.mxu0 0
        %1938 = vmatpush2.bf16.msra.mxu0 0
        %1939 = vmatprep.subr.bf16.mxu0 0
        %1940 = vmatpush2.bf16.msra.mxu0 0
        %1941 = vmatprep.subr.bf16.mxu0 0
        %1942 = vmatpush2.bf16.msra.mxu0 0
        %1943 = vmatprep.subr.bf16.mxu0 0
        %1944 = vmatpush2.bf16.msra.mxu0 0
        %1945 = vmatprep.subr.bf16.mxu0 0
        %1946 = vmatpush2.bf16.msra.mxu0 0
        %1947 = vmatprep.mubr.bf16.mxu0 0
        %1948 = vmatmul.mubr.bf16.gmra.mxu0 %v202
        %v1949 = vpop.f32.mrf.mxu0
        %v1950 = vadd.f32 %v1910, %v1949
        %v1951 = vpop.f32.mrf.mxu0
        %v1952 = vpop.f32.mrf.mxu0
        %v1953 = vpop.f32.mrf.mxu0
        %1954 = vdwg.mxu0
        %v1955 = vpack.c.bf16 %v1623, %v1623
        %v1956 = vpack.c.bf16 %v1625, %v1625
        %v1957 = vpack.c.bf16 %v1705, %v1705
        %v1958 = vpack.c.bf16 %v1707, %v1707
        %v1959 = vpack.c.bf16 %v1787, %v1787
        %v1960 = vpack.c.bf16 %v1789, %v1789
        %v1961 = vpack.c.bf16 %v1869, %v1869
        %v1962 = vpack.c.bf16 %v1871, %v1871
        %v1963 = vpack.c.bf16 %v1950, %v1950
        %v1964 = vlaneseq
        %v1965 = vshrl.u32 %v1964, 7
        %v1966 = vlaneseq
        %v1967 = vand.u32 %v1966, 127
        %vm1968 = vcmp.le.s32.totalorder %v1967, %v1965
        %v1969 = vsel %vm1968, 0.0, -1e+30
        %v1970 = vld [vmem:[%s2] sm:$0xff]
        %v1971 = vld [vmem:[%s2 + $0x8] sm:$0xf]
        %v1972 = vld [vmem:[%s2 + $0xc] sm:$0xff]
        %v1973 = vld [vmem:[%s2 + $0x14] sm:$0xf]
        %v1974 = vld [vmem:[%s2 + $0x18] sm:$0xff]
        %v1975 = vld [vmem:[%s2 + $0x20] sm:$0xf]
        %v1976 = vld [vmem:[%s2 + $0x24] sm:$0xff]
        %v1977 = vld [vmem:[%s2 + $0x2c] sm:$0xf]
        %v1978 = vld [vmem:[%s2 + $0x30] sm:$0xff]
        %v1979 = vld [vmem:[%s2 + $0x38] sm:$0xf]
        %v1980 = vld [vmem:[%s2 + $0x3c] sm:$0xff]
        %v1981 = vld [vmem:[%s2 + $0x44] sm:$0xf]
        %v1982 = vld [vmem:[%s2 + $0x48] sm:$0xff]
        %v1983 = vld [vmem:[%s2 + $0x50] sm:$0xf]
        %v1984 = vld [vmem:[%s2 + $0x54] sm:$0xff]
        %v1985 = vld [vmem:[%s2 + $0x5c] sm:$0xf]
        %v1986 = vld [vmem:[%s2 + $0x60] sm:$0xff]
        %v1987 = vld [vmem:[%s2 + $0x68] sm:$0xf]
        %v1988 = vld [vmem:[%s2 + $0x6c] sm:$0xff]
        %v1989 = vld [vmem:[%s2 + $0x74] sm:$0xf]
        %v1990 = vld [vmem:[%s2 + $0x78] sm:$0xff]
        %v1991 = vld [vmem:[%s2 + $0x80] sm:$0xf]
        %v1992 = vld [vmem:[%s2 + $0x84] sm:$0xff]
        %v1993 = vld [vmem:[%s2 + $0x8c] sm:$0xf]
        %v1994 = vld [vmem:[%s2 + $0x90] sm:$0xff]
        %v1995 = vld [vmem:[%s2 + $0x98] sm:$0xf]
        %v1996 = vld [vmem:[%s2 + $0x9c] sm:$0xff]
        %v1997 = vld [vmem:[%s2 + $0xa4] sm:$0xf]
        %v1998 = vld [vmem:[%s2 + $0xa8] sm:$0xff]
        %v1999 = vld [vmem:[%s2 + $0xb0] sm:$0xf]
        %v2000 = vld [vmem:[%s2 + $0xb4] sm:$0xff]
        %v2001 = vld [vmem:[%s2 + $0xbc] sm:$0xf]
        %v2002 = vld [vmem:[%s2 + $0xc0] sm:$0xff]
        %v2003 = vld [vmem:[%s2 + $0xc8] sm:$0xf]
        %v2004 = vld [vmem:[%s2 + $0xcc] sm:$0xff]
        %v2005 = vld [vmem:[%s2 + $0xd4] sm:$0xf]
        %v2006 = vld [vmem:[%s2 + $0xd8] sm:$0xff]
        %v2007 = vld [vmem:[%s2 + $0xe0] sm:$0xf]
        %v2008 = vld [vmem:[%s2 + $0xe4] sm:$0xff]
        %v2009 = vld [vmem:[%s2 + $0xec] sm:$0xf]
        %v2010 = vld [vmem:[%s2 + $0xf0] sm:$0xff]
        %v2011 = vld [vmem:[%s2 + $0xf8] sm:$0xf]
        %v2012 = vld [vmem:[%s2 + $0xfc] sm:$0xff]
        %v2013 = vld [vmem:[%s2 + $0x104] sm:$0xf]
        %v2014 = vld [vmem:[%s2 + $0x108] sm:$0xff]
        %v2015 = vld [vmem:[%s2 + $0x110] sm:$0xf]
        %v2016 = vld [vmem:[%s2 + $0x114] sm:$0xff]
        %v2017 = vld [vmem:[%s2 + $0x11c] sm:$0xf]
        %v2018 = vld [vmem:[%s2 + $0x120] sm:$0xff]
        %v2019 = vld [vmem:[%s2 + $0x128] sm:$0xf]
        %v2020 = vld [vmem:[%s2 + $0x12c] sm:$0xff]
        %v2021 = vld [vmem:[%s2 + $0x134] sm:$0xf]
        %v2022 = vld [vmem:[%s2 + $0x138] sm:$0xff]
        %v2023 = vld [vmem:[%s2 + $0x140] sm:$0xf]
        %v2024 = vld [vmem:[%s2 + $0x144] sm:$0xff]
        %v2025 = vld [vmem:[%s2 + $0x14c] sm:$0xf]
        %v2026 = vld [vmem:[%s2 + $0x150] sm:$0xff]
        %v2027 = vld [vmem:[%s2 + $0x158] sm:$0xf]
        %v2028 = vld [vmem:[%s2 + $0x15c] sm:$0xff]
        %v2029 = vld [vmem:[%s2 + $0x164] sm:$0xf]
        %v2030 = vld [vmem:[%s2 + $0x168] sm:$0xff]
        %v2031 = vld [vmem:[%s2 + $0x170] sm:$0xf]
        %v2032 = vld [vmem:[%s2 + $0x174] sm:$0xff]
        %v2033 = vld [vmem:[%s2 + $0x17c] sm:$0xf]
        %v2034 = vld [vmem:[%s2 + $0x180] sm:$0xff]
        %v2035 = vld [vmem:[%s2 + $0x188] sm:$0xf]
        %v2036 = vld [vmem:[%s2 + $0x18c] sm:$0xff]
        %v2037 = vld [vmem:[%s2 + $0x194] sm:$0xf]
        %v2038 = vld [vmem:[%s2 + $0x198] sm:$0xff]
        %v2039 = vld [vmem:[%s2 + $0x1a0] sm:$0xf]
        %v2040 = vld [vmem:[%s2 + $0x1a4] sm:$0xff]
        %v2041 = vld [vmem:[%s2 + $0x1ac] sm:$0xf]
        %v2042 = vld [vmem:[%s2 + $0x1b0] sm:$0xff]
        %v2043 = vld [vmem:[%s2 + $0x1b8] sm:$0xf]
        %v2044 = vld [vmem:[%s2 + $0x1bc] sm:$0xff]
        %v2045 = vld [vmem:[%s2 + $0x1c4] sm:$0xf]
        %v2046 = vld [vmem:[%s2 + $0x1c8] sm:$0xff]
        %v2047 = vld [vmem:[%s2 + $0x1d0] sm:$0xf]
        %v2048 = vld [vmem:[%s2 + $0x1d4] sm:$0xff]
        %v2049 = vld [vmem:[%s2 + $0x1dc] sm:$0xf]
        %v2050 = vld [vmem:[%s2 + $0x1e0] sm:$0xff]
        %v2051 = vld [vmem:[%s2 + $0x1e8] sm:$0xf]
        %v2052 = vld [vmem:[%s2 + $0x1ec] sm:$0xff]
        %v2053 = vld [vmem:[%s2 + $0x1f4] sm:$0xf]
        %v2054 = vld [vmem:[%s2 + $0x1f8] sm:$0xff]
        %v2055 = vld [vmem:[%s2 + $0x200] sm:$0xf]
        %v2056 = vld [vmem:[%s2 + $0x204] sm:$0xff]
        %v2057 = vld [vmem:[%s2 + $0x20c] sm:$0xf]
        %v2058 = vld [vmem:[%s2 + $0x210] sm:$0xff]
        %v2059 = vld [vmem:[%s2 + $0x218] sm:$0xf]
        %v2060 = vld [vmem:[%s2 + $0x21c] sm:$0xff]
        %v2061 = vld [vmem:[%s2 + $0x224] sm:$0xf]
        %v2062 = vld [vmem:[%s2 + $0x228] sm:$0xff]
        %v2063 = vld [vmem:[%s2 + $0x230] sm:$0xf]
        %v2064 = vld [vmem:[%s2 + $0x234] sm:$0xff]
        %v2065 = vld [vmem:[%s2 + $0x23c] sm:$0xf]
        %vm2066 = vcmask 392192
        %v2068 = vsel %vm2066, %v1955, 0
        %v2071 = vsel %vm2066, %v1958, 0
        %2073 = vmatprep.subr.bf16.mxu0 0
        %2074 = vmatpush1.bf16.xpose.msra.mxu0 0
        %2075 = vmatprep.subr.bf16.mxu0 0
        %2076 = vmatpush1.bf16.xpose.msra.mxu0 0
        %2077 = vmatprep.subr.bf16.mxu0 0
        %2078 = vmatpush1.bf16.xpose.msra.mxu0 0
        %2079 = vmatprep.subr.bf16.mxu0 0
        %2080 = vmatpush1.bf16.xpose.msra.mxu0 0
        %2081 = vmatprep.subr.bf16.mxu0 0
        %2082 = vmatpush1.bf16.xpose.msra.mxu0 0
        %2083 = vmatprep.subr.bf16.mxu0 0
        %2084 = vmatpush1.bf16.xpose.msra.mxu0 0
        %2085 = vmatprep.subr.bf16.mxu0 0
        %2086 = vmatpush1.bf16.xpose.msra.mxu0 0
        %2087 = vmatprep.subr.bf16.mxu0 0
        %2088 = vmatpush1.bf16.xpose.msra.mxu0 %v2071
        %2089 = vmatprep.subr.bf16.mxu0 0
        %2090 = vmatpush2.bf16.xpose.msra.mxu0 0
        %2091 = vmatprep.subr.bf16.mxu0 0
        %2092 = vmatpush2.bf16.xpose.msra.mxu0 0
        %2093 = vmatprep.subr.bf16.mxu0 0
        %2094 = vmatpush2.bf16.xpose.msra.mxu0 0
        %2095 = vmatprep.subr.bf16.mxu0 0
        %2096 = vmatpush2.bf16.xpose.msra.mxu0 0
        %2097 = vmatprep.subr.bf16.mxu0 0
        %2098 = vmatpush2.bf16.xpose.msra.mxu0 0
        %2099 = vmatprep.subr.bf16.mxu0 0
        %2100 = vmatpush2.bf16.xpose.msra.mxu0 0
        %2101 = vmatprep.subr.bf16.mxu0 0
        %2102 = vmatpush2.bf16.xpose.msra.mxu0 0
        %2103 = vmatprep.subr.bf16.mxu0 0
        %2104 = vmatpush2.bf16.xpose.msra.mxu0 0
        %2105 = vmatprep.mubr.bf16.mxu0 0
        %2106 = vmatmul.mubr.bf16.gmra.mxu0 %v2068
        %v2107 = vpop.f32.mrf.mxu0
        %v2108 = vadd.f32 %v1969, %v2107
        %v2109 = vpop.f32.mrf.mxu0
        %v2110 = vpop.f32.mrf.mxu0
        %v2111 = vpop.f32.mrf.mxu0
        %2112 = vdwg.mxu0
        %vm2113 = vcmask 64512
        %v2114 = vsel %vm2113, %v2108, -inf
        %2115 = vmax.xlane.f32.xlu0 %v2114
        %v2116 = vpop.xlane.xlu0 %2115
        %v2117 = vsub.f32 %v2108, %v2116
        %v2118 = vmul.f32 %v2117, 1.442695
        %v2119 = vpow.pop %v2118
        %v2120 = vsel %vm2113, %v2119, 0.0
        %2121 = vadd.xlane.f32.xlu0 %v2120
        %v2122 = vpop.xlane.xlu0 %2121
        %v2123 = vpack.c.bf16 %v2119, %v2119
        %v2125 = vsel %vm2113, %v2123, 0
        %vm2127 = vcmask 1043456
        %v2129 = vsel %vm2127, %v1961, 0
        %2131 = vmatprep.subr.bf16.mxu0 0
        %2132 = vmatpush1.bf16.msra.mxu0 0
        %2133 = vmatprep.subr.bf16.mxu0 0
        %2134 = vmatpush1.bf16.msra.mxu0 0
        %2135 = vmatprep.subr.bf16.mxu0 0
        %2136 = vmatpush1.bf16.msra.mxu0 0
        %2137 = vmatprep.subr.bf16.mxu0 0
        %2138 = vmatpush1.bf16.msra.mxu0 0
        %2139 = vmatprep.subr.bf16.mxu0 0
        %2140 = vmatpush1.bf16.msra.mxu0 0
        %2141 = vmatprep.subr.bf16.mxu0 0
        %2142 = vmatpush1.bf16.msra.mxu0 0
        %2143 = vmatprep.subr.bf16.mxu0 0
        %2144 = vmatpush1.bf16.msra.mxu0 0
        %2145 = vmatprep.subr.bf16.mxu0 0
        %2146 = vmatpush1.bf16.msra.mxu0 %v2129
        %2147 = vmatprep.subr.bf16.mxu0 0
        %2148 = vmatpush2.bf16.msra.mxu0 0
        %2149 = vmatprep.subr.bf16.mxu0 0
        %2150 = vmatpush2.bf16.msra.mxu0 0
        %2151 = vmatprep.subr.bf16.mxu0 0
        %2152 = vmatpush2.bf16.msra.mxu0 0
        %2153 = vmatprep.subr.bf16.mxu0 0
        %2154 = vmatpush2.bf16.msra.mxu0 0
        %2155 = vmatprep.subr.bf16.mxu0 0
        %2156 = vmatpush2.bf16.msra.mxu0 0
        %2157 = vmatprep.subr.bf16.mxu0 0
        %2158 = vmatpush2.bf16.msra.mxu0 0
        %2159 = vmatprep.subr.bf16.mxu0 0
        %2160 = vmatpush2.bf16.msra.mxu0 0
        %2161 = vmatprep.subr.bf16.mxu0 0
        %2162 = vmatpush2.bf16.msra.mxu0 0
        %2163 = vmatprep.mubr.bf16.mxu0 0
        %2164 = vmatmul.mubr.bf16.gmra.mxu0 %v2125
        %v2165 = vpop.f32.mrf.mxu0
        %v2166 = vadd.f32 0.0, %v2165
        %v2167 = vpop.f32.mrf.mxu0
        %v2168 = vpop.f32.mrf.mxu0
        %v2169 = vpop.f32.mrf.mxu0
        %2170 = vdwg.mxu0
        %v2171 = vrcp.pop %v2122
        %v2172 = vmul.f32 %v2166, %v2171
        %v2173 = vpack.c.bf16 %v2172, %v2172
        %2175 = vrot.lane.b32.xlu0 %v1955, 80
        %v2176 = vpop.permute.xlu0 %2175
        %2178 = vrot.lane.b32.xlu0 %v1958, 80
        %v2179 = vpop.permute.xlu0 %2178
        %v2181 = vsel %vm2066, %v2176, 0
        %v2184 = vsel %vm2066, %v2179, 0
        %2186 = vmatprep.subr.bf16.mxu0 0
        %2187 = vmatpush1.bf16.xpose.msra.mxu0 0
        %2188 = vmatprep.subr.bf16.mxu0 0
        %2189 = vmatpush1.bf16.xpose.msra.mxu0 0
        %2190 = vmatprep.subr.bf16.mxu0 0
        %2191 = vmatpush1.bf16.xpose.msra.mxu0 0
        %2192 = vmatprep.subr.bf16.mxu0 0
        %2193 = vmatpush1.bf16.xpose.msra.mxu0 0
        %2194 = vmatprep.subr.bf16.mxu0 0
        %2195 = vmatpush1.bf16.xpose.msra.mxu0 0
        %2196 = vmatprep.subr.bf16.mxu0 0
        %2197 = vmatpush1.bf16.xpose.msra.mxu0 0
        %2198 = vmatprep.subr.bf16.mxu0 0
        %2199 = vmatpush1.bf16.xpose.msra.mxu0 0
        %2200 = vmatprep.subr.bf16.mxu0 0
        %2201 = vmatpush1.bf16.xpose.msra.mxu0 %v2184
        %2202 = vmatprep.subr.bf16.mxu0 0
        %2203 = vmatpush2.bf16.xpose.msra.mxu0 0
        %2204 = vmatprep.subr.bf16.mxu0 0
        %2205 = vmatpush2.bf16.xpose.msra.mxu0 0
        %2206 = vmatprep.subr.bf16.mxu0 0
        %2207 = vmatpush2.bf16.xpose.msra.mxu0 0
        %2208 = vmatprep.subr.bf16.mxu0 0
        %2209 = vmatpush2.bf16.xpose.msra.mxu0 0
        %2210 = vmatprep.subr.bf16.mxu0 0
        %2211 = vmatpush2.bf16.xpose.msra.mxu0 0
        %2212 = vmatprep.subr.bf16.mxu0 0
        %2213 = vmatpush2.bf16.xpose.msra.mxu0 0
        %2214 = vmatprep.subr.bf16.mxu0 0
        %2215 = vmatpush2.bf16.xpose.msra.mxu0 0
        %2216 = vmatprep.subr.bf16.mxu0 0
        %2217 = vmatpush2.bf16.xpose.msra.mxu0 0
        %2218 = vmatprep.mubr.bf16.mxu0 0
        %2219 = vmatmul.mubr.bf16.gmra.mxu0 %v2181
        %v2220 = vpop.f32.mrf.mxu0
        %v2221 = vadd.f32 %v1969, %v2220
        %v2222 = vpop.f32.mrf.mxu0
        %v2223 = vpop.f32.mrf.mxu0
        %v2224 = vpop.f32.mrf.mxu0
        %2225 = vdwg.mxu0
        %v2226 = vsel %vm2113, %v2221, -inf
        %2227 = vmax.xlane.f32.xlu0 %v2226
        %v2228 = vpop.xlane.xlu0 %2227
        %v2229 = vsub.f32 %v2221, %v2228
        %v2230 = vmul.f32 %v2229, 1.442695
        %v2231 = vpow.pop %v2230
        %v2232 = vsel %vm2113, %v2231, 0.0
        %2233 = vadd.xlane.f32.xlu0 %v2232
        %v2234 = vpop.xlane.xlu0 %2233
        %v2235 = vpack.c.bf16 %v2231, %v2231
        %2237 = vrot.lane.b32.xlu0 %v1961, 80
        %v2238 = vpop.permute.xlu0 %2237
        %v2240 = vsel %vm2113, %v2235, 0
        %v2243 = vsel %vm2127, %v2238, 0
        %2245 = vmatprep.subr.bf16.mxu0 0
        %2246 = vmatpush1.bf16.msra.mxu0 0
        %2247 = vmatprep.subr.bf16.mxu0 0
        %2248 = vmatpush1.bf16.msra.mxu0 0
        %2249 = vmatprep.subr.bf16.mxu0 0
        %2250 = vmatpush1.bf16.msra.mxu0 0
        %2251 = vmatprep.subr.bf16.mxu0 0
        %2252 = vmatpush1.bf16.msra.mxu0 0
        %2253 = vmatprep.subr.bf16.mxu0 0
        %2254 = vmatpush1.bf16.msra.mxu0 0
        %2255 = vmatprep.subr.bf16.mxu0 0
        %2256 = vmatpush1.bf16.msra.mxu0 0
        %2257 = vmatprep.subr.bf16.mxu0 0
        %2258 = vmatpush1.bf16.msra.mxu0 0
        %2259 = vmatprep.subr.bf16.mxu0 0
        %2260 = vmatpush1.bf16.msra.mxu0 %v2243
        %2261 = vmatprep.subr.bf16.mxu0 0
        %2262 = vmatpush2.bf16.msra.mxu0 0
        %2263 = vmatprep.subr.bf16.mxu0 0
        %2264 = vmatpush2.bf16.msra.mxu0 0
        %2265 = vmatprep.subr.bf16.mxu0 0
        %2266 = vmatpush2.bf16.msra.mxu0 0
        %2267 = vmatprep.subr.bf16.mxu0 0
        %2268 = vmatpush2.bf16.msra.mxu0 0
        %2269 = vmatprep.subr.bf16.mxu0 0
        %2270 = vmatpush2.bf16.msra.mxu0 0
        %2271 = vmatprep.subr.bf16.mxu0 0
        %2272 = vmatpush2.bf16.msra.mxu0 0
        %2273 = vmatprep.subr.bf16.mxu0 0
        %2274 = vmatpush2.bf16.msra.mxu0 0
        %2275 = vmatprep.subr.bf16.mxu0 0
        %2276 = vmatpush2.bf16.msra.mxu0 0
        %2277 = vmatprep.mubr.bf16.mxu0 0
        %2278 = vmatmul.mubr.bf16.gmra.mxu0 %v2240
        %v2279 = vpop.f32.mrf.mxu0
        %v2280 = vadd.f32 0.0, %v2279
        %v2281 = vpop.f32.mrf.mxu0
        %v2282 = vpop.f32.mrf.mxu0
        %v2283 = vpop.f32.mrf.mxu0
        %2284 = vdwg.mxu0
        %v2285 = vrcp.pop %v2234
        %v2286 = vmul.f32 %v2280, %v2285
        %v2287 = vpack.c.bf16 %v2286, %v2286
        %v2300 = vunpack.c.l.b16 %v1982
        %v2301 = vunpack.c.h.b16 %v1982
        %v2302 = vunpack.c.l.b16 %v1983
        %v2303 = vunpack.c.l.b16 %v1984
        %v2304 = vunpack.c.h.b16 %v1984
        %v2305 = vunpack.c.l.b16 %v1985
        %v2306 = vunpack.c.l.b16 %v1986
        %v2307 = vunpack.c.h.b16 %v1986
        %v2308 = vunpack.c.l.b16 %v1987
        %v2309 = vunpack.c.l.b16 %v1988
        %v2310 = vunpack.c.h.b16 %v1988
        %v2311 = vunpack.c.l.b16 %v1989
        %v2312 = vunpack.c.l.b16 %v1990
        %v2313 = vunpack.c.h.b16 %v1990
        %v2314 = vunpack.c.l.b16 %v1991
        %v2315 = vunpack.c.l.b16 %v1992
        %v2316 = vunpack.c.h.b16 %v1992
        %v2317 = vunpack.c.l.b16 %v1993
        %v2318 = vpack.c.b16 %v2303, %v2300
        %v2319 = vpack.c.b16 %v2304, %v2301
        %v2320 = vpack.c.b16 %v2305, %v2302
        %v2321 = vpack.c.b16 %v2309, %v2306
        %v2322 = vpack.c.b16 %v2310, %v2307
        %v2323 = vpack.c.b16 %v2311, %v2308
        %v2324 = vpack.c.b16 %v2315, %v2312
        %v2325 = vpack.c.b16 %v2316, %v2313
        %v2326 = vpack.c.b16 %v2317, %v2314
        %v2337 = vsel %vm2066, %v2287, 0
        %2339 = vmatprep.subr.bf16.mxu0 0
        %2340 = vmatpush1.bf16.msra.mxu0 0
        %2341 = vmatprep.subr.bf16.mxu0 0
        %2342 = vmatpush1.bf16.msra.mxu0 0
        %2343 = vmatprep.subr.bf16.mxu0 0
        %2344 = vmatpush1.bf16.msra.mxu0 0
        %2345 = vmatprep.subr.bf16.mxu0 0
        %2346 = vmatpush1.bf16.msra.mxu0 0
        %2347 = vmatprep.subr.bf16.mxu0 0
        %2348 = vmatpush1.bf16.msra.mxu0 0
        %2349 = vmatprep.subr.bf16.mxu0 %v2325
        %2350 = vmatpush1.bf16.msra.mxu0 %v2324
        %2351 = vmatprep.subr.bf16.mxu0 %v2322
        %2352 = vmatpush1.bf16.msra.mxu0 %v2321
        %2353 = vmatprep.subr.bf16.mxu0 %v2319
        %2354 = vmatpush1.bf16.msra.mxu0 %v2318
        %2355 = vmatprep.subr.bf16.mxu0 0
        %2356 = vmatpush2.bf16.msra.mxu0 0
        %2357 = vmatprep.subr.bf16.mxu0 0
        %2358 = vmatpush2.bf16.msra.mxu0 0
        %2359 = vmatprep.subr.bf16.mxu0 0
        %2360 = vmatpush2.bf16.msra.mxu0 0
        %2361 = vmatprep.subr.bf16.mxu0 0
        %2362 = vmatpush2.bf16.msra.mxu0 0
        %2363 = vmatprep.subr.bf16.mxu0 0
        %2364 = vmatpush2.bf16.msra.mxu0 0
        %2365 = vmatprep.subr.bf16.mxu0 0
        %2366 = vmatpush2.bf16.msra.mxu0 0
        %2367 = vmatprep.subr.bf16.mxu0 0
        %2368 = vmatpush2.bf16.msra.mxu0 0
        %2369 = vmatprep.subr.bf16.mxu0 0
        %2370 = vmatpush2.bf16.msra.mxu0 0
        %2371 = vmatprep.mubr.bf16.mxu0 0
        %2372 = vmatmul.mubr.bf16.gmra.mxu0 %v2337
        %v2373 = vpop.f32.mrf.mxu0
        %v2374 = vadd.f32 0.0, %v2373
        %v2375 = vpop.f32.mrf.mxu0
        %v2376 = vadd.f32 0.0, %v2375
        %v2377 = vpop.f32.mrf.mxu0
        %v2378 = vpop.f32.mrf.mxu0
        %2379 = vdwg.mxu0
        %2380 = vmatprep.subr.bf16.mxu0 0
        %2381 = vmatpush1.bf16.msra.mxu0 0
        %2382 = vmatprep.subr.bf16.mxu0 0
        %2383 = vmatpush1.bf16.msra.mxu0 0
        %2384 = vmatprep.subr.bf16.mxu0 0
        %2385 = vmatpush1.bf16.msra.mxu0 0
        %2386 = vmatprep.subr.bf16.mxu0 0
        %2387 = vmatpush1.bf16.msra.mxu0 0
        %2388 = vmatprep.subr.bf16.mxu0 0
        %2389 = vmatpush1.bf16.msra.mxu0 0
        %2390 = vmatprep.subr.bf16.mxu0 0
        %2391 = vmatpush1.bf16.msra.mxu0 %v2326
        %2392 = vmatprep.subr.bf16.mxu0 0
        %2393 = vmatpush1.bf16.msra.mxu0 %v2323
        %2394 = vmatprep.subr.bf16.mxu0 0
        %2395 = vmatpush1.bf16.msra.mxu0 %v2320
        %2396 = vmatprep.subr.bf16.mxu0 0
        %2397 = vmatpush2.bf16.msra.mxu0 0
        %2398 = vmatprep.subr.bf16.mxu0 0
        %2399 = vmatpush2.bf16.msra.mxu0 0
        %2400 = vmatprep.subr.bf16.mxu0 0
        %2401 = vmatpush2.bf16.msra.mxu0 0
        %2402 = vmatprep.subr.bf16.mxu0 0
        %2403 = vmatpush2.bf16.msra.mxu0 0
        %2404 = vmatprep.subr.bf16.mxu0 0
        %2405 = vmatpush2.bf16.msra.mxu0 0
        %2406 = vmatprep.subr.bf16.mxu0 0
        %2407 = vmatpush2.bf16.msra.mxu0 0
        %2408 = vmatprep.subr.bf16.mxu0 0
        %2409 = vmatpush2.bf16.msra.mxu0 0
        %2410 = vmatprep.subr.bf16.mxu0 0
        %2411 = vmatpush2.bf16.msra.mxu0 0
        %2412 = vmatprep.mubr.bf16.mxu0 0
        %2413 = vmatmul.mubr.bf16.gmra.mxu0 %v2337
        %v2414 = vpop.f32.mrf.mxu0
        %v2415 = vadd.f32 0.0, %v2414
        %v2416 = vpop.f32.mrf.mxu0
        %v2417 = vpop.f32.mrf.mxu0
        %v2418 = vpop.f32.mrf.mxu0
        %2419 = vdwg.mxu0
        %v2432 = vunpack.c.l.b16 %v1970
        %v2433 = vunpack.c.h.b16 %v1970
        %v2434 = vunpack.c.l.b16 %v1971
        %v2435 = vunpack.c.l.b16 %v1972
        %v2436 = vunpack.c.h.b16 %v1972
        %v2437 = vunpack.c.l.b16 %v1973
        %v2438 = vunpack.c.l.b16 %v1974
        %v2439 = vunpack.c.h.b16 %v1974
        %v2440 = vunpack.c.l.b16 %v1975
        %v2441 = vunpack.c.l.b16 %v1976
        %v2442 = vunpack.c.h.b16 %v1976
        %v2443 = vunpack.c.l.b16 %v1977
        %v2444 = vunpack.c.l.b16 %v1978
        %v2445 = vunpack.c.h.b16 %v1978
        %v2446 = vunpack.c.l.b16 %v1979
        %v2447 = vunpack.c.l.b16 %v1980
        %v2448 = vunpack.c.h.b16 %v1980
        %v2449 = vunpack.c.l.b16 %v1981
        %v2450 = vpack.c.b16 %v2435, %v2432
        %v2451 = vpack.c.b16 %v2436, %v2433
        %v2452 = vpack.c.b16 %v2437, %v2434
        %v2453 = vpack.c.b16 %v2441, %v2438
        %v2454 = vpack.c.b16 %v2442, %v2439
        %v2455 = vpack.c.b16 %v2443, %v2440
        %v2456 = vpack.c.b16 %v2447, %v2444
        %v2457 = vpack.c.b16 %v2448, %v2445
        %v2458 = vpack.c.b16 %v2449, %v2446
        %v2469 = vsel %vm2066, %v2173, 0
        %2471 = vmatprep.subr.bf16.mxu0 0
        %2472 = vmatpush1.bf16.msra.mxu0 0
        %2473 = vmatprep.subr.bf16.mxu0 0
        %2474 = vmatpush1.bf16.msra.mxu0 0
        %2475 = vmatprep.subr.bf16.mxu0 0
        %2476 = vmatpush1.bf16.msra.mxu0 0
        %2477 = vmatprep.subr.bf16.mxu0 0
        %2478 = vmatpush1.bf16.msra.mxu0 0
        %2479 = vmatprep.subr.bf16.mxu0 0
        %2480 = vmatpush1.bf16.msra.mxu0 0
        %2481 = vmatprep.subr.bf16.mxu0 %v2457
        %2482 = vmatpush1.bf16.msra.mxu0 %v2456
        %2483 = vmatprep.subr.bf16.mxu0 %v2454
        %2484 = vmatpush1.bf16.msra.mxu0 %v2453
        %2485 = vmatprep.subr.bf16.mxu0 %v2451
        %2486 = vmatpush1.bf16.msra.mxu0 %v2450
        %2487 = vmatprep.subr.bf16.mxu0 0
        %2488 = vmatpush2.bf16.msra.mxu0 0
        %2489 = vmatprep.subr.bf16.mxu0 0
        %2490 = vmatpush2.bf16.msra.mxu0 0
        %2491 = vmatprep.subr.bf16.mxu0 0
        %2492 = vmatpush2.bf16.msra.mxu0 0
        %2493 = vmatprep.subr.bf16.mxu0 0
        %2494 = vmatpush2.bf16.msra.mxu0 0
        %2495 = vmatprep.subr.bf16.mxu0 0
        %2496 = vmatpush2.bf16.msra.mxu0 0
        %2497 = vmatprep.subr.bf16.mxu0 0
        %2498 = vmatpush2.bf16.msra.mxu0 0
        %2499 = vmatprep.subr.bf16.mxu0 0
        %2500 = vmatpush2.bf16.msra.mxu0 0
        %2501 = vmatprep.subr.bf16.mxu0 0
        %2502 = vmatpush2.bf16.msra.mxu0 0
        %2503 = vmatprep.mubr.bf16.mxu0 0
        %2504 = vmatmul.mubr.bf16.gmra.mxu0 %v2469
        %v2505 = vpop.f32.mrf.mxu0
        %v2506 = vadd.f32 %v2374, %v2505
        %v2507 = vpop.f32.mrf.mxu0
        %v2508 = vadd.f32 %v2376, %v2507
        %v2509 = vpop.f32.mrf.mxu0
        %v2510 = vpop.f32.mrf.mxu0
        %2511 = vdwg.mxu0
        %2512 = vmatprep.subr.bf16.mxu0 0
        %2513 = vmatpush1.bf16.msra.mxu0 0
        %2514 = vmatprep.subr.bf16.mxu0 0
        %2515 = vmatpush1.bf16.msra.mxu0 0
        %2516 = vmatprep.subr.bf16.mxu0 0
        %2517 = vmatpush1.bf16.msra.mxu0 0
        %2518 = vmatprep.subr.bf16.mxu0 0
        %2519 = vmatpush1.bf16.msra.mxu0 0
        %2520 = vmatprep.subr.bf16.mxu0 0
        %2521 = vmatpush1.bf16.msra.mxu0 0
        %2522 = vmatprep.subr.bf16.mxu0 0
        %2523 = vmatpush1.bf16.msra.mxu0 %v2458
        %2524 = vmatprep.subr.bf16.mxu0 0
        %2525 = vmatpush1.bf16.msra.mxu0 %v2455
        %2526 = vmatprep.subr.bf16.mxu0 0
        %2527 = vmatpush1.bf16.msra.mxu0 %v2452
        %2528 = vmatprep.subr.bf16.mxu0 0
        %2529 = vmatpush2.bf16.msra.mxu0 0
        %2530 = vmatprep.subr.bf16.mxu0 0
        %2531 = vmatpush2.bf16.msra.mxu0 0
        %2532 = vmatprep.subr.bf16.mxu0 0
        %2533 = vmatpush2.bf16.msra.mxu0 0
        %2534 = vmatprep.subr.bf16.mxu0 0
        %2535 = vmatpush2.bf16.msra.mxu0 0
        %2536 = vmatprep.subr.bf16.mxu0 0
        %2537 = vmatpush2.bf16.msra.mxu0 0
        %2538 = vmatprep.subr.bf16.mxu0 0
        %2539 = vmatpush2.bf16.msra.mxu0 0
        %2540 = vmatprep.subr.bf16.mxu0 0
        %2541 = vmatpush2.bf16.msra.mxu0 0
        %2542 = vmatprep.subr.bf16.mxu0 0
        %2543 = vmatpush2.bf16.msra.mxu0 0
        %2544 = vmatprep.mubr.bf16.mxu0 0
        %2545 = vmatmul.mubr.bf16.gmra.mxu0 %v2469
        %v2546 = vpop.f32.mrf.mxu0
        %v2547 = vadd.f32 %v2415, %v2546
        %v2548 = vpop.f32.mrf.mxu0
        %v2549 = vpop.f32.mrf.mxu0
        %v2550 = vpop.f32.mrf.mxu0
        %2551 = vdwg.mxu0
        %2553 = vrot.lane.b32.xlu0 %v1955, 32
        %v2554 = vpop.permute.xlu0 %2553
        %2555 = vrot.lane.b32.xlu0 %v1956, 32
        %v2556 = vpop.permute.xlu0 %2555
        %vm2557 = vcmask 261120
        %v2558 = vsel %vm2557, %v2554, %v2556
        %2560 = vrot.lane.b32.xlu0 %v1958, 32
        %v2561 = vpop.permute.xlu0 %2560
        %2562 = vrot.lane.b32.xlu0 %v1959, 32
        %v2563 = vpop.permute.xlu0 %2562
        %v2564 = vsel %vm2557, %v2561, %v2563
        %v2566 = vsel %vm2066, %v2558, 0
        %v2569 = vsel %vm2066, %v2564, 0
        %2571 = vmatprep.subr.bf16.mxu0 0
        %2572 = vmatpush1.bf16.xpose.msra.mxu0 0
        %2573 = vmatprep.subr.bf16.mxu0 0
        %2574 = vmatpush1.bf16.xpose.msra.mxu0 0
        %2575 = vmatprep.subr.bf16.mxu0 0
        %2576 = vmatpush1.bf16.xpose.msra.mxu0 0
        %2577 = vmatprep.subr.bf16.mxu0 0
        %2578 = vmatpush1.bf16.xpose.msra.mxu0 0
        %2579 = vmatprep.subr.bf16.mxu0 0
        %2580 = vmatpush1.bf16.xpose.msra.mxu0 0
        %2581 = vmatprep.subr.bf16.mxu0 0
        %2582 = vmatpush1.bf16.xpose.msra.mxu0 0
        %2583 = vmatprep.subr.bf16.mxu0 0
        %2584 = vmatpush1.bf16.xpose.msra.mxu0 0
        %2585 = vmatprep.subr.bf16.mxu0 0
        %2586 = vmatpush1.bf16.xpose.msra.mxu0 %v2569
        %2587 = vmatprep.subr.bf16.mxu0 0
        %2588 = vmatpush2.bf16.xpose.msra.mxu0 0
        %2589 = vmatprep.subr.bf16.mxu0 0
        %2590 = vmatpush2.bf16.xpose.msra.mxu0 0
        %2591 = vmatprep.subr.bf16.mxu0 0
        %2592 = vmatpush2.bf16.xpose.msra.mxu0 0
        %2593 = vmatprep.subr.bf16.mxu0 0
        %2594 = vmatpush2.bf16.xpose.msra.mxu0 0
        %2595 = vmatprep.subr.bf16.mxu0 0
        %2596 = vmatpush2.bf16.xpose.msra.mxu0 0
        %2597 = vmatprep.subr.bf16.mxu0 0
        %2598 = vmatpush2.bf16.xpose.msra.mxu0 0
        %2599 = vmatprep.subr.bf16.mxu0 0
        %2600 = vmatpush2.bf16.xpose.msra.mxu0 0
        %2601 = vmatprep.subr.bf16.mxu0 0
        %2602 = vmatpush2.bf16.xpose.msra.mxu0 0
        %2603 = vmatprep.mubr.bf16.mxu0 0
        %2604 = vmatmul.mubr.bf16.gmra.mxu0 %v2566
        %v2605 = vpop.f32.mrf.mxu0
        %v2606 = vadd.f32 %v1969, %v2605
        %v2607 = vpop.f32.mrf.mxu0
        %v2608 = vpop.f32.mrf.mxu0
        %v2609 = vpop.f32.mrf.mxu0
        %2610 = vdwg.mxu0
        %v2611 = vsel %vm2113, %v2606, -inf
        %2612 = vmax.xlane.f32.xlu0 %v2611
        %v2613 = vpop.xlane.xlu0 %2612
        %v2614 = vsub.f32 %v2606, %v2613
        %v2615 = vmul.f32 %v2614, 1.442695
        %v2616 = vpow.pop %v2615
        %v2617 = vsel %vm2113, %v2616, 0.0
        %2618 = vadd.xlane.f32.xlu0 %v2617
        %v2619 = vpop.xlane.xlu0 %2618
        %v2620 = vpack.c.bf16 %v2616, %v2616
        %2622 = vrot.lane.b32.xlu0 %v1961, 32
        %v2623 = vpop.permute.xlu0 %2622
        %2624 = vrot.lane.b32.xlu0 %v1962, 32
        %v2625 = vpop.permute.xlu0 %2624
        %v2626 = vsel %vm2557, %v2623, %v2625
        %v2628 = vsel %vm2113, %v2620, 0
        %v2631 = vsel %vm2127, %v2626, 0
        %2633 = vmatprep.subr.bf16.mxu0 0
        %2634 = vmatpush1.bf16.msra.mxu0 0
        %2635 = vmatprep.subr.bf16.mxu0 0
        %2636 = vmatpush1.bf16.msra.mxu0 0
        %2637 = vmatprep.subr.bf16.mxu0 0
        %2638 = vmatpush1.bf16.msra.mxu0 0
        %2639 = vmatprep.subr.bf16.mxu0 0
        %2640 = vmatpush1.bf16.msra.mxu0 0
        %2641 = vmatprep.subr.bf16.mxu0 0
        %2642 = vmatpush1.bf16.msra.mxu0 0
        %2643 = vmatprep.subr.bf16.mxu0 0
        %2644 = vmatpush1.bf16.msra.mxu0 0
        %2645 = vmatprep.subr.bf16.mxu0 0
        %2646 = vmatpush1.bf16.msra.mxu0 0
        %2647 = vmatprep.subr.bf16.mxu0 0
        %2648 = vmatpush1.bf16.msra.mxu0 %v2631
        %2649 = vmatprep.subr.bf16.mxu0 0
        %2650 = vmatpush2.bf16.msra.mxu0 0
        %2651 = vmatprep.subr.bf16.mxu0 0
        %2652 = vmatpush2.bf16.msra.mxu0 0
        %2653 = vmatprep.subr.bf16.mxu0 0
        %2654 = vmatpush2.bf16.msra.mxu0 0
        %2655 = vmatprep.subr.bf16.mxu0 0
        %2656 = vmatpush2.bf16.msra.mxu0 0
        %2657 = vmatprep.subr.bf16.mxu0 0
        %2658 = vmatpush2.bf16.msra.mxu0 0
        %2659 = vmatprep.subr.bf16.mxu0 0
        %2660 = vmatpush2.bf16.msra.mxu0 0
        %2661 = vmatprep.subr.bf16.mxu0 0
        %2662 = vmatpush2.bf16.msra.mxu0 0
        %2663 = vmatprep.subr.bf16.mxu0 0
        %2664 = vmatpush2.bf16.msra.mxu0 0
        %2665 = vmatprep.mubr.bf16.mxu0 0
        %2666 = vmatmul.mubr.bf16.gmra.mxu0 %v2628
        %v2667 = vpop.f32.mrf.mxu0
        %v2668 = vadd.f32 0.0, %v2667
        %v2669 = vpop.f32.mrf.mxu0
        %v2670 = vpop.f32.mrf.mxu0
        %v2671 = vpop.f32.mrf.mxu0
        %2672 = vdwg.mxu0
        %v2673 = vrcp.pop %v2619
        %v2674 = vmul.f32 %v2668, %v2673
        %v2675 = vpack.c.bf16 %v2674, %v2674
        %v2688 = vunpack.c.l.b16 %v1994
        %v2689 = vunpack.c.h.b16 %v1994
        %v2690 = vunpack.c.l.b16 %v1995
        %v2691 = vunpack.c.l.b16 %v1996
        %v2692 = vunpack.c.h.b16 %v1996
        %v2693 = vunpack.c.l.b16 %v1997
        %v2694 = vunpack.c.l.b16 %v1998
        %v2695 = vunpack.c.h.b16 %v1998
        %v2696 = vunpack.c.l.b16 %v1999
        %v2697 = vunpack.c.l.b16 %v2000
        %v2698 = vunpack.c.h.b16 %v2000
        %v2699 = vunpack.c.l.b16 %v2001
        %v2700 = vunpack.c.l.b16 %v2002
        %v2701 = vunpack.c.h.b16 %v2002
        %v2702 = vunpack.c.l.b16 %v2003
        %v2703 = vunpack.c.l.b16 %v2004
        %v2704 = vunpack.c.h.b16 %v2004
        %v2705 = vunpack.c.l.b16 %v2005
        %v2706 = vpack.c.b16 %v2691, %v2688
        %v2707 = vpack.c.b16 %v2692, %v2689
        %v2708 = vpack.c.b16 %v2693, %v2690
        %v2709 = vpack.c.b16 %v2697, %v2694
        %v2710 = vpack.c.b16 %v2698, %v2695
        %v2711 = vpack.c.b16 %v2699, %v2696
        %v2712 = vpack.c.b16 %v2703, %v2700
        %v2713 = vpack.c.b16 %v2704, %v2701
        %v2714 = vpack.c.b16 %v2705, %v2702
        %v2725 = vsel %vm2066, %v2675, 0
        %2727 = vmatprep.subr.bf16.mxu0 0
        %2728 = vmatpush1.bf16.msra.mxu0 0
        %2729 = vmatprep.subr.bf16.mxu0 0
        %2730 = vmatpush1.bf16.msra.mxu0 0
        %2731 = vmatprep.subr.bf16.mxu0 0
        %2732 = vmatpush1.bf16.msra.mxu0 0
        %2733 = vmatprep.subr.bf16.mxu0 0
        %2734 = vmatpush1.bf16.msra.mxu0 0
        %2735 = vmatprep.subr.bf16.mxu0 0
        %2736 = vmatpush1.bf16.msra.mxu0 0
        %2737 = vmatprep.subr.bf16.mxu0 %v2713
        %2738 = vmatpush1.bf16.msra.mxu0 %v2712
        %2739 = vmatprep.subr.bf16.mxu0 %v2710
        %2740 = vmatpush1.bf16.msra.mxu0 %v2709
        %2741 = vmatprep.subr.bf16.mxu0 %v2707
        %2742 = vmatpush1.bf16.msra.mxu0 %v2706
        %2743 = vmatprep.subr.bf16.mxu0 0
        %2744 = vmatpush2.bf16.msra.mxu0 0
        %2745 = vmatprep.subr.bf16.mxu0 0
        %2746 = vmatpush2.bf16.msra.mxu0 0
        %2747 = vmatprep.subr.bf16.mxu0 0
        %2748 = vmatpush2.bf16.msra.mxu0 0
        %2749 = vmatprep.subr.bf16.mxu0 0
        %2750 = vmatpush2.bf16.msra.mxu0 0
        %2751 = vmatprep.subr.bf16.mxu0 0
        %2752 = vmatpush2.bf16.msra.mxu0 0
        %2753 = vmatprep.subr.bf16.mxu0 0
        %2754 = vmatpush2.bf16.msra.mxu0 0
        %2755 = vmatprep.subr.bf16.mxu0 0
        %2756 = vmatpush2.bf16.msra.mxu0 0
        %2757 = vmatprep.subr.bf16.mxu0 0
        %2758 = vmatpush2.bf16.msra.mxu0 0
        %2759 = vmatprep.mubr.bf16.mxu0 0
        %2760 = vmatmul.mubr.bf16.gmra.mxu0 %v2725
        %v2761 = vpop.f32.mrf.mxu0
        %v2762 = vadd.f32 0.0, %v2761
        %v2763 = vpop.f32.mrf.mxu0
        %v2764 = vadd.f32 0.0, %v2763
        %v2765 = vpop.f32.mrf.mxu0
        %v2766 = vpop.f32.mrf.mxu0
        %2767 = vdwg.mxu0
        %2768 = vmatprep.subr.bf16.mxu0 0
        %2769 = vmatpush1.bf16.msra.mxu0 0
        %2770 = vmatprep.subr.bf16.mxu0 0
        %2771 = vmatpush1.bf16.msra.mxu0 0
        %2772 = vmatprep.subr.bf16.mxu0 0
        %2773 = vmatpush1.bf16.msra.mxu0 0
        %2774 = vmatprep.subr.bf16.mxu0 0
        %2775 = vmatpush1.bf16.msra.mxu0 0
        %2776 = vmatprep.subr.bf16.mxu0 0
        %2777 = vmatpush1.bf16.msra.mxu0 0
        %2778 = vmatprep.subr.bf16.mxu0 0
        %2779 = vmatpush1.bf16.msra.mxu0 %v2714
        %2780 = vmatprep.subr.bf16.mxu0 0
        %2781 = vmatpush1.bf16.msra.mxu0 %v2711
        %2782 = vmatprep.subr.bf16.mxu0 0
        %2783 = vmatpush1.bf16.msra.mxu0 %v2708
        %2784 = vmatprep.subr.bf16.mxu0 0
        %2785 = vmatpush2.bf16.msra.mxu0 0
        %2786 = vmatprep.subr.bf16.mxu0 0
        %2787 = vmatpush2.bf16.msra.mxu0 0
        %2788 = vmatprep.subr.bf16.mxu0 0
        %2789 = vmatpush2.bf16.msra.mxu0 0
        %2790 = vmatprep.subr.bf16.mxu0 0
        %2791 = vmatpush2.bf16.msra.mxu0 0
        %2792 = vmatprep.subr.bf16.mxu0 0
        %2793 = vmatpush2.bf16.msra.mxu0 0
        %2794 = vmatprep.subr.bf16.mxu0 0
        %2795 = vmatpush2.bf16.msra.mxu0 0
        %2796 = vmatprep.subr.bf16.mxu0 0
        %2797 = vmatpush2.bf16.msra.mxu0 0
        %2798 = vmatprep.subr.bf16.mxu0 0
        %2799 = vmatpush2.bf16.msra.mxu0 0
        %2800 = vmatprep.mubr.bf16.mxu0 0
        %2801 = vmatmul.mubr.bf16.gmra.mxu0 %v2725
        %v2802 = vpop.f32.mrf.mxu0
        %v2803 = vadd.f32 0.0, %v2802
        %v2804 = vpop.f32.mrf.mxu0
        %v2805 = vpop.f32.mrf.mxu0
        %v2806 = vpop.f32.mrf.mxu0
        %2807 = vdwg.mxu0
        %v2808 = vadd.f32 %v2506, %v2762
        %v2809 = vadd.f32 %v2508, %v2764
        %v2810 = vadd.f32 %v2547, %v2803
        %2811 = vrot.lane.b32.xlu0 %v1956, 112
        %v2812 = vpop.permute.xlu0 %2811
        %2813 = vrot.lane.b32.xlu0 %v1959, 112
        %v2814 = vpop.permute.xlu0 %2813
        %v2816 = vsel %vm2066, %v2812, 0
        %v2819 = vsel %vm2066, %v2814, 0
        %2821 = vmatprep.subr.bf16.mxu0 0
        %2822 = vmatpush1.bf16.xpose.msra.mxu0 0
        %2823 = vmatprep.subr.bf16.mxu0 0
        %2824 = vmatpush1.bf16.xpose.msra.mxu0 0
        %2825 = vmatprep.subr.bf16.mxu0 0
        %2826 = vmatpush1.bf16.xpose.msra.mxu0 0
        %2827 = vmatprep.subr.bf16.mxu0 0
        %2828 = vmatpush1.bf16.xpose.msra.mxu0 0
        %2829 = vmatprep.subr.bf16.mxu0 0
        %2830 = vmatpush1.bf16.xpose.msra.mxu0 0
        %2831 = vmatprep.subr.bf16.mxu0 0
        %2832 = vmatpush1.bf16.xpose.msra.mxu0 0
        %2833 = vmatprep.subr.bf16.mxu0 0
        %2834 = vmatpush1.bf16.xpose.msra.mxu0 0
        %2835 = vmatprep.subr.bf16.mxu0 0
        %2836 = vmatpush1.bf16.xpose.msra.mxu0 %v2819
        %2837 = vmatprep.subr.bf16.mxu0 0
        %2838 = vmatpush2.bf16.xpose.msra.mxu0 0
        %2839 = vmatprep.subr.bf16.mxu0 0
        %2840 = vmatpush2.bf16.xpose.msra.mxu0 0
        %2841 = vmatprep.subr.bf16.mxu0 0
        %2842 = vmatpush2.bf16.xpose.msra.mxu0 0
        %2843 = vmatprep.subr.bf16.mxu0 0
        %2844 = vmatpush2.bf16.xpose.msra.mxu0 0
        %2845 = vmatprep.subr.bf16.mxu0 0
        %2846 = vmatpush2.bf16.xpose.msra.mxu0 0
        %2847 = vmatprep.subr.bf16.mxu0 0
        %2848 = vmatpush2.bf16.xpose.msra.mxu0 0
        %2849 = vmatprep.subr.bf16.mxu0 0
        %2850 = vmatpush2.bf16.xpose.msra.mxu0 0
        %2851 = vmatprep.subr.bf16.mxu0 0
        %2852 = vmatpush2.bf16.xpose.msra.mxu0 0
        %2853 = vmatprep.mubr.bf16.mxu0 0
        %2854 = vmatmul.mubr.bf16.gmra.mxu0 %v2816
        %v2855 = vpop.f32.mrf.mxu0
        %v2856 = vadd.f32 %v1969, %v2855
        %v2857 = vpop.f32.mrf.mxu0
        %v2858 = vpop.f32.mrf.mxu0
        %v2859 = vpop.f32.mrf.mxu0
        %2860 = vdwg.mxu0
        %v2861 = vsel %vm2113, %v2856, -inf
        %2862 = vmax.xlane.f32.xlu0 %v2861
        %v2863 = vpop.xlane.xlu0 %2862
        %v2864 = vsub.f32 %v2856, %v2863
        %v2865 = vmul.f32 %v2864, 1.442695
        %v2866 = vpow.pop %v2865
        %v2867 = vsel %vm2113, %v2866, 0.0
        %2868 = vadd.xlane.f32.xlu0 %v2867
        %v2869 = vpop.xlane.xlu0 %2868
        %v2870 = vpack.c.bf16 %v2866, %v2866
        %2871 = vrot.lane.b32.xlu0 %v1962, 112
        %v2872 = vpop.permute.xlu0 %2871
        %v2874 = vsel %vm2113, %v2870, 0
        %v2877 = vsel %vm2127, %v2872, 0
        %2879 = vmatprep.subr.bf16.mxu0 0
        %2880 = vmatpush1.bf16.msra.mxu0 0
        %2881 = vmatprep.subr.bf16.mxu0 0
        %2882 = vmatpush1.bf16.msra.mxu0 0
        %2883 = vmatprep.subr.bf16.mxu0 0
        %2884 = vmatpush1.bf16.msra.mxu0 0
        %2885 = vmatprep.subr.bf16.mxu0 0
        %2886 = vmatpush1.bf16.msra.mxu0 0
        %2887 = vmatprep.subr.bf16.mxu0 0
        %2888 = vmatpush1.bf16.msra.mxu0 0
        %2889 = vmatprep.subr.bf16.mxu0 0
        %2890 = vmatpush1.bf16.msra.mxu0 0
        %2891 = vmatprep.subr.bf16.mxu0 0
        %2892 = vmatpush1.bf16.msra.mxu0 0
        %2893 = vmatprep.subr.bf16.mxu0 0
        %2894 = vmatpush1.bf16.msra.mxu0 %v2877
        %2895 = vmatprep.subr.bf16.mxu0 0
        %2896 = vmatpush2.bf16.msra.mxu0 0
        %2897 = vmatprep.subr.bf16.mxu0 0
        %2898 = vmatpush2.bf16.msra.mxu0 0
        %2899 = vmatprep.subr.bf16.mxu0 0
        %2900 = vmatpush2.bf16.msra.mxu0 0
        %2901 = vmatprep.subr.bf16.mxu0 0
        %2902 = vmatpush2.bf16.msra.mxu0 0
        %2903 = vmatprep.subr.bf16.mxu0 0
        %2904 = vmatpush2.bf16.msra.mxu0 0
        %2905 = vmatprep.subr.bf16.mxu0 0
        %2906 = vmatpush2.bf16.msra.mxu0 0
        %2907 = vmatprep.subr.bf16.mxu0 0
        %2908 = vmatpush2.bf16.msra.mxu0 0
        %2909 = vmatprep.subr.bf16.mxu0 0
        %2910 = vmatpush2.bf16.msra.mxu0 0
        %2911 = vmatprep.mubr.bf16.mxu0 0
        %2912 = vmatmul.mubr.bf16.gmra.mxu0 %v2874
        %v2913 = vpop.f32.mrf.mxu0
        %v2914 = vadd.f32 0.0, %v2913
        %v2915 = vpop.f32.mrf.mxu0
        %v2916 = vpop.f32.mrf.mxu0
        %v2917 = vpop.f32.mrf.mxu0
        %2918 = vdwg.mxu0
        %v2919 = vrcp.pop %v2869
        %v2920 = vmul.f32 %v2914, %v2919
        %v2921 = vpack.c.bf16 %v2920, %v2920
        %v2934 = vunpack.c.l.b16 %v2006
        %v2935 = vunpack.c.h.b16 %v2006
        %v2936 = vunpack.c.l.b16 %v2007
        %v2937 = vunpack.c.l.b16 %v2008
        %v2938 = vunpack.c.h.b16 %v2008
        %v2939 = vunpack.c.l.b16 %v2009
        %v2940 = vunpack.c.l.b16 %v2010
        %v2941 = vunpack.c.h.b16 %v2010
        %v2942 = vunpack.c.l.b16 %v2011
        %v2943 = vunpack.c.l.b16 %v2012
        %v2944 = vunpack.c.h.b16 %v2012
        %v2945 = vunpack.c.l.b16 %v2013
        %v2946 = vunpack.c.l.b16 %v2014
        %v2947 = vunpack.c.h.b16 %v2014
        %v2948 = vunpack.c.l.b16 %v2015
        %v2949 = vunpack.c.l.b16 %v2016
        %v2950 = vunpack.c.h.b16 %v2016
        %v2951 = vunpack.c.l.b16 %v2017
        %v2952 = vpack.c.b16 %v2937, %v2934
        %v2953 = vpack.c.b16 %v2938, %v2935
        %v2954 = vpack.c.b16 %v2939, %v2936
        %v2955 = vpack.c.b16 %v2943, %v2940
        %v2956 = vpack.c.b16 %v2944, %v2941
        %v2957 = vpack.c.b16 %v2945, %v2942
        %v2958 = vpack.c.b16 %v2949, %v2946
        %v2959 = vpack.c.b16 %v2950, %v2947
        %v2960 = vpack.c.b16 %v2951, %v2948
        %v2971 = vsel %vm2066, %v2921, 0
        %2973 = vmatprep.subr.bf16.mxu0 0
        %2974 = vmatpush1.bf16.msra.mxu0 0
        %2975 = vmatprep.subr.bf16.mxu0 0
        %2976 = vmatpush1.bf16.msra.mxu0 0
        %2977 = vmatprep.subr.bf16.mxu0 0
        %2978 = vmatpush1.bf16.msra.mxu0 0
        %2979 = vmatprep.subr.bf16.mxu0 0
        %2980 = vmatpush1.bf16.msra.mxu0 0
        %2981 = vmatprep.subr.bf16.mxu0 0
        %2982 = vmatpush1.bf16.msra.mxu0 0
        %2983 = vmatprep.subr.bf16.mxu0 %v2959
        %2984 = vmatpush1.bf16.msra.mxu0 %v2958
        %2985 = vmatprep.subr.bf16.mxu0 %v2956
        %2986 = vmatpush1.bf16.msra.mxu0 %v2955
        %2987 = vmatprep.subr.bf16.mxu0 %v2953
        %2988 = vmatpush1.bf16.msra.mxu0 %v2952
        %2989 = vmatprep.subr.bf16.mxu0 0
        %2990 = vmatpush2.bf16.msra.mxu0 0
        %2991 = vmatprep.subr.bf16.mxu0 0
        %2992 = vmatpush2.bf16.msra.mxu0 0
        %2993 = vmatprep.subr.bf16.mxu0 0
        %2994 = vmatpush2.bf16.msra.mxu0 0
        %2995 = vmatprep.subr.bf16.mxu0 0
        %2996 = vmatpush2.bf16.msra.mxu0 0
        %2997 = vmatprep.subr.bf16.mxu0 0
        %2998 = vmatpush2.bf16.msra.mxu0 0
        %2999 = vmatprep.subr.bf16.mxu0 0
        %3000 = vmatpush2.bf16.msra.mxu0 0
        %3001 = vmatprep.subr.bf16.mxu0 0
        %3002 = vmatpush2.bf16.msra.mxu0 0
        %3003 = vmatprep.subr.bf16.mxu0 0
        %3004 = vmatpush2.bf16.msra.mxu0 0
        %3005 = vmatprep.mubr.bf16.mxu0 0
        %3006 = vmatmul.mubr.bf16.gmra.mxu0 %v2971
        %v3007 = vpop.f32.mrf.mxu0
        %v3008 = vadd.f32 0.0, %v3007
        %v3009 = vpop.f32.mrf.mxu0
        %v3010 = vadd.f32 0.0, %v3009
        %v3011 = vpop.f32.mrf.mxu0
        %v3012 = vpop.f32.mrf.mxu0
        %3013 = vdwg.mxu0
        %3014 = vmatprep.subr.bf16.mxu0 0
        %3015 = vmatpush1.bf16.msra.mxu0 0
        %3016 = vmatprep.subr.bf16.mxu0 0
        %3017 = vmatpush1.bf16.msra.mxu0 0
        %3018 = vmatprep.subr.bf16.mxu0 0
        %3019 = vmatpush1.bf16.msra.mxu0 0
        %3020 = vmatprep.subr.bf16.mxu0 0
        %3021 = vmatpush1.bf16.msra.mxu0 0
        %3022 = vmatprep.subr.bf16.mxu0 0
        %3023 = vmatpush1.bf16.msra.mxu0 0
        %3024 = vmatprep.subr.bf16.mxu0 0
        %3025 = vmatpush1.bf16.msra.mxu0 %v2960
        %3026 = vmatprep.subr.bf16.mxu0 0
        %3027 = vmatpush1.bf16.msra.mxu0 %v2957
        %3028 = vmatprep.subr.bf16.mxu0 0
        %3029 = vmatpush1.bf16.msra.mxu0 %v2954
        %3030 = vmatprep.subr.bf16.mxu0 0
        %3031 = vmatpush2.bf16.msra.mxu0 0
        %3032 = vmatprep.subr.bf16.mxu0 0
        %3033 = vmatpush2.bf16.msra.mxu0 0
        %3034 = vmatprep.subr.bf16.mxu0 0
        %3035 = vmatpush2.bf16.msra.mxu0 0
        %3036 = vmatprep.subr.bf16.mxu0 0
        %3037 = vmatpush2.bf16.msra.mxu0 0
        %3038 = vmatprep.subr.bf16.mxu0 0
        %3039 = vmatpush2.bf16.msra.mxu0 0
        %3040 = vmatprep.subr.bf16.mxu0 0
        %3041 = vmatpush2.bf16.msra.mxu0 0
        %3042 = vmatprep.subr.bf16.mxu0 0
        %3043 = vmatpush2.bf16.msra.mxu0 0
        %3044 = vmatprep.subr.bf16.mxu0 0
        %3045 = vmatpush2.bf16.msra.mxu0 0
        %3046 = vmatprep.mubr.bf16.mxu0 0
        %3047 = vmatmul.mubr.bf16.gmra.mxu0 %v2971
        %v3048 = vpop.f32.mrf.mxu0
        %v3049 = vadd.f32 0.0, %v3048
        %v3050 = vpop.f32.mrf.mxu0
        %v3051 = vpop.f32.mrf.mxu0
        %v3052 = vpop.f32.mrf.mxu0
        %3053 = vdwg.mxu0
        %v3054 = vadd.f32 %v2808, %v3008
        %v3055 = vadd.f32 %v2809, %v3010
        %v3056 = vadd.f32 %v2810, %v3049
        %3057 = vrot.lane.b32.xlu0 %v1956, 64
        %v3058 = vpop.permute.xlu0 %3057
        %3059 = vrot.lane.b32.xlu0 %v1959, 64
        %v3060 = vpop.permute.xlu0 %3059
        %v3062 = vsel %vm2066, %v3058, 0
        %v3065 = vsel %vm2066, %v3060, 0
        %3067 = vmatprep.subr.bf16.mxu0 0
        %3068 = vmatpush1.bf16.xpose.msra.mxu0 0
        %3069 = vmatprep.subr.bf16.mxu0 0
        %3070 = vmatpush1.bf16.xpose.msra.mxu0 0
        %3071 = vmatprep.subr.bf16.mxu0 0
        %3072 = vmatpush1.bf16.xpose.msra.mxu0 0
        %3073 = vmatprep.subr.bf16.mxu0 0
        %3074 = vmatpush1.bf16.xpose.msra.mxu0 0
        %3075 = vmatprep.subr.bf16.mxu0 0
        %3076 = vmatpush1.bf16.xpose.msra.mxu0 0
        %3077 = vmatprep.subr.bf16.mxu0 0
        %3078 = vmatpush1.bf16.xpose.msra.mxu0 0
        %3079 = vmatprep.subr.bf16.mxu0 0
        %3080 = vmatpush1.bf16.xpose.msra.mxu0 0
        %3081 = vmatprep.subr.bf16.mxu0 0
        %3082 = vmatpush1.bf16.xpose.msra.mxu0 %v3065
        %3083 = vmatprep.subr.bf16.mxu0 0
        %3084 = vmatpush2.bf16.xpose.msra.mxu0 0
        %3085 = vmatprep.subr.bf16.mxu0 0
        %3086 = vmatpush2.bf16.xpose.msra.mxu0 0
        %3087 = vmatprep.subr.bf16.mxu0 0
        %3088 = vmatpush2.bf16.xpose.msra.mxu0 0
        %3089 = vmatprep.subr.bf16.mxu0 0
        %3090 = vmatpush2.bf16.xpose.msra.mxu0 0
        %3091 = vmatprep.subr.bf16.mxu0 0
        %3092 = vmatpush2.bf16.xpose.msra.mxu0 0
        %3093 = vmatprep.subr.bf16.mxu0 0
        %3094 = vmatpush2.bf16.xpose.msra.mxu0 0
        %3095 = vmatprep.subr.bf16.mxu0 0
        %3096 = vmatpush2.bf16.xpose.msra.mxu0 0
        %3097 = vmatprep.subr.bf16.mxu0 0
        %3098 = vmatpush2.bf16.xpose.msra.mxu0 0
        %3099 = vmatprep.mubr.bf16.mxu0 0
        %3100 = vmatmul.mubr.bf16.gmra.mxu0 %v3062
        %v3101 = vpop.f32.mrf.mxu0
        %v3102 = vadd.f32 %v1969, %v3101
        %v3103 = vpop.f32.mrf.mxu0
        %v3104 = vpop.f32.mrf.mxu0
        %v3105 = vpop.f32.mrf.mxu0
        %3106 = vdwg.mxu0
        %v3107 = vsel %vm2113, %v3102, -inf
        %3108 = vmax.xlane.f32.xlu0 %v3107
        %v3109 = vpop.xlane.xlu0 %3108
        %v3110 = vsub.f32 %v3102, %v3109
        %v3111 = vmul.f32 %v3110, 1.442695
        %v3112 = vpow.pop %v3111
        %v3113 = vsel %vm2113, %v3112, 0.0
        %3114 = vadd.xlane.f32.xlu0 %v3113
        %v3115 = vpop.xlane.xlu0 %3114
        %v3116 = vpack.c.bf16 %v3112, %v3112
        %3117 = vrot.lane.b32.xlu0 %v1962, 64
        %v3118 = vpop.permute.xlu0 %3117
        %v3120 = vsel %vm2113, %v3116, 0
        %v3123 = vsel %vm2127, %v3118, 0
        %3125 = vmatprep.subr.bf16.mxu0 0
        %3126 = vmatpush1.bf16.msra.mxu0 0
        %3127 = vmatprep.subr.bf16.mxu0 0
        %3128 = vmatpush1.bf16.msra.mxu0 0
        %3129 = vmatprep.subr.bf16.mxu0 0
        %3130 = vmatpush1.bf16.msra.mxu0 0
        %3131 = vmatprep.subr.bf16.mxu0 0
        %3132 = vmatpush1.bf16.msra.mxu0 0
        %3133 = vmatprep.subr.bf16.mxu0 0
        %3134 = vmatpush1.bf16.msra.mxu0 0
        %3135 = vmatprep.subr.bf16.mxu0 0
        %3136 = vmatpush1.bf16.msra.mxu0 0
        %3137 = vmatprep.subr.bf16.mxu0 0
        %3138 = vmatpush1.bf16.msra.mxu0 0
        %3139 = vmatprep.subr.bf16.mxu0 0
        %3140 = vmatpush1.bf16.msra.mxu0 %v3123
        %3141 = vmatprep.subr.bf16.mxu0 0
        %3142 = vmatpush2.bf16.msra.mxu0 0
        %3143 = vmatprep.subr.bf16.mxu0 0
        %3144 = vmatpush2.bf16.msra.mxu0 0
        %3145 = vmatprep.subr.bf16.mxu0 0
        %3146 = vmatpush2.bf16.msra.mxu0 0
        %3147 = vmatprep.subr.bf16.mxu0 0
        %3148 = vmatpush2.bf16.msra.mxu0 0
        %3149 = vmatprep.subr.bf16.mxu0 0
        %3150 = vmatpush2.bf16.msra.mxu0 0
        %3151 = vmatprep.subr.bf16.mxu0 0
        %3152 = vmatpush2.bf16.msra.mxu0 0
        %3153 = vmatprep.subr.bf16.mxu0 0
        %3154 = vmatpush2.bf16.msra.mxu0 0
        %3155 = vmatprep.subr.bf16.mxu0 0
        %3156 = vmatpush2.bf16.msra.mxu0 0
        %3157 = vmatprep.mubr.bf16.mxu0 0
        %3158 = vmatmul.mubr.bf16.gmra.mxu0 %v3120
        %v3159 = vpop.f32.mrf.mxu0
        %v3160 = vadd.f32 0.0, %v3159
        %v3161 = vpop.f32.mrf.mxu0
        %v3162 = vpop.f32.mrf.mxu0
        %v3163 = vpop.f32.mrf.mxu0
        %3164 = vdwg.mxu0
        %v3165 = vrcp.pop %v3115
        %v3166 = vmul.f32 %v3160, %v3165
        %v3167 = vpack.c.bf16 %v3166, %v3166
        %v3180 = vunpack.c.l.b16 %v2018
        %v3181 = vunpack.c.h.b16 %v2018
        %v3182 = vunpack.c.l.b16 %v2019
        %v3183 = vunpack.c.l.b16 %v2020
        %v3184 = vunpack.c.h.b16 %v2020
        %v3185 = vunpack.c.l.b16 %v2021
        %v3186 = vunpack.c.l.b16 %v2022
        %v3187 = vunpack.c.h.b16 %v2022
        %v3188 = vunpack.c.l.b16 %v2023
        %v3189 = vunpack.c.l.b16 %v2024
        %v3190 = vunpack.c.h.b16 %v2024
        %v3191 = vunpack.c.l.b16 %v2025
        %v3192 = vunpack.c.l.b16 %v2026
        %v3193 = vunpack.c.h.b16 %v2026
        %v3194 = vunpack.c.l.b16 %v2027
        %v3195 = vunpack.c.l.b16 %v2028
        %v3196 = vunpack.c.h.b16 %v2028
        %v3197 = vunpack.c.l.b16 %v2029
        %v3198 = vpack.c.b16 %v3183, %v3180
        %v3199 = vpack.c.b16 %v3184, %v3181
        %v3200 = vpack.c.b16 %v3185, %v3182
        %v3201 = vpack.c.b16 %v3189, %v3186
        %v3202 = vpack.c.b16 %v3190, %v3187
        %v3203 = vpack.c.b16 %v3191, %v3188
        %v3204 = vpack.c.b16 %v3195, %v3192
        %v3205 = vpack.c.b16 %v3196, %v3193
        %v3206 = vpack.c.b16 %v3197, %v3194
        %v3217 = vsel %vm2066, %v3167, 0
        %3219 = vmatprep.subr.bf16.mxu0 0
        %3220 = vmatpush1.bf16.msra.mxu0 0
        %3221 = vmatprep.subr.bf16.mxu0 0
        %3222 = vmatpush1.bf16.msra.mxu0 0
        %3223 = vmatprep.subr.bf16.mxu0 0
        %3224 = vmatpush1.bf16.msra.mxu0 0
        %3225 = vmatprep.subr.bf16.mxu0 0
        %3226 = vmatpush1.bf16.msra.mxu0 0
        %3227 = vmatprep.subr.bf16.mxu0 0
        %3228 = vmatpush1.bf16.msra.mxu0 0
        %3229 = vmatprep.subr.bf16.mxu0 %v3205
        %3230 = vmatpush1.bf16.msra.mxu0 %v3204
        %3231 = vmatprep.subr.bf16.mxu0 %v3202
        %3232 = vmatpush1.bf16.msra.mxu0 %v3201
        %3233 = vmatprep.subr.bf16.mxu0 %v3199
        %3234 = vmatpush1.bf16.msra.mxu0 %v3198
        %3235 = vmatprep.subr.bf16.mxu0 0
        %3236 = vmatpush2.bf16.msra.mxu0 0
        %3237 = vmatprep.subr.bf16.mxu0 0
        %3238 = vmatpush2.bf16.msra.mxu0 0
        %3239 = vmatprep.subr.bf16.mxu0 0
        %3240 = vmatpush2.bf16.msra.mxu0 0
        %3241 = vmatprep.subr.bf16.mxu0 0
        %3242 = vmatpush2.bf16.msra.mxu0 0
        %3243 = vmatprep.subr.bf16.mxu0 0
        %3244 = vmatpush2.bf16.msra.mxu0 0
        %3245 = vmatprep.subr.bf16.mxu0 0
        %3246 = vmatpush2.bf16.msra.mxu0 0
        %3247 = vmatprep.subr.bf16.mxu0 0
        %3248 = vmatpush2.bf16.msra.mxu0 0
        %3249 = vmatprep.subr.bf16.mxu0 0
        %3250 = vmatpush2.bf16.msra.mxu0 0
        %3251 = vmatprep.mubr.bf16.mxu0 0
        %3252 = vmatmul.mubr.bf16.gmra.mxu0 %v3217
        %v3253 = vpop.f32.mrf.mxu0
        %v3254 = vadd.f32 0.0, %v3253
        %v3255 = vpop.f32.mrf.mxu0
        %v3256 = vadd.f32 0.0, %v3255
        %v3257 = vpop.f32.mrf.mxu0
        %v3258 = vpop.f32.mrf.mxu0
        %3259 = vdwg.mxu0
        %3260 = vmatprep.subr.bf16.mxu0 0
        %3261 = vmatpush1.bf16.msra.mxu0 0
        %3262 = vmatprep.subr.bf16.mxu0 0
        %3263 = vmatpush1.bf16.msra.mxu0 0
        %3264 = vmatprep.subr.bf16.mxu0 0
        %3265 = vmatpush1.bf16.msra.mxu0 0
        %3266 = vmatprep.subr.bf16.mxu0 0
        %3267 = vmatpush1.bf16.msra.mxu0 0
        %3268 = vmatprep.subr.bf16.mxu0 0
        %3269 = vmatpush1.bf16.msra.mxu0 0
        %3270 = vmatprep.subr.bf16.mxu0 0
        %3271 = vmatpush1.bf16.msra.mxu0 %v3206
        %3272 = vmatprep.subr.bf16.mxu0 0
        %3273 = vmatpush1.bf16.msra.mxu0 %v3203
        %3274 = vmatprep.subr.bf16.mxu0 0
        %3275 = vmatpush1.bf16.msra.mxu0 %v3200
        %3276 = vmatprep.subr.bf16.mxu0 0
        %3277 = vmatpush2.bf16.msra.mxu0 0
        %3278 = vmatprep.subr.bf16.mxu0 0
        %3279 = vmatpush2.bf16.msra.mxu0 0
        %3280 = vmatprep.subr.bf16.mxu0 0
        %3281 = vmatpush2.bf16.msra.mxu0 0
        %3282 = vmatprep.subr.bf16.mxu0 0
        %3283 = vmatpush2.bf16.msra.mxu0 0
        %3284 = vmatprep.subr.bf16.mxu0 0
        %3285 = vmatpush2.bf16.msra.mxu0 0
        %3286 = vmatprep.subr.bf16.mxu0 0
        %3287 = vmatpush2.bf16.msra.mxu0 0
        %3288 = vmatprep.subr.bf16.mxu0 0
        %3289 = vmatpush2.bf16.msra.mxu0 0
        %3290 = vmatprep.subr.bf16.mxu0 0
        %3291 = vmatpush2.bf16.msra.mxu0 0
        %3292 = vmatprep.mubr.bf16.mxu0 0
        %3293 = vmatmul.mubr.bf16.gmra.mxu0 %v3217
        %v3294 = vpop.f32.mrf.mxu0
        %v3295 = vadd.f32 0.0, %v3294
        %v3296 = vpop.f32.mrf.mxu0
        %v3297 = vpop.f32.mrf.mxu0
        %v3298 = vpop.f32.mrf.mxu0
        %3299 = vdwg.mxu0
        %v3300 = vadd.f32 %v3054, %v3254
        %v3301 = vadd.f32 %v3055, %v3256
        %v3302 = vadd.f32 %v3056, %v3295
        %3304 = vrot.lane.b32.xlu0 %v1956, 16
        %v3305 = vpop.permute.xlu0 %3304
        %3306 = vrot.lane.b32.xlu0 %v1957, 16
        %v3307 = vpop.permute.xlu0 %3306
        %vm3308 = vcmask 130048
        %v3309 = vsel %vm3308, %v3305, %v3307
        %3311 = vrot.lane.b32.xlu0 %v1959, 16
        %v3312 = vpop.permute.xlu0 %3311
        %3313 = vrot.lane.b32.xlu0 %v1960, 16
        %v3314 = vpop.permute.xlu0 %3313
        %v3315 = vsel %vm3308, %v3312, %v3314
        %v3317 = vsel %vm2066, %v3309, 0
        %v3320 = vsel %vm2066, %v3315, 0
        %3322 = vmatprep.subr.bf16.mxu0 0
        %3323 = vmatpush1.bf16.xpose.msra.mxu0 0
        %3324 = vmatprep.subr.bf16.mxu0 0
        %3325 = vmatpush1.bf16.xpose.msra.mxu0 0
        %3326 = vmatprep.subr.bf16.mxu0 0
        %3327 = vmatpush1.bf16.xpose.msra.mxu0 0
        %3328 = vmatprep.subr.bf16.mxu0 0
        %3329 = vmatpush1.bf16.xpose.msra.mxu0 0
        %3330 = vmatprep.subr.bf16.mxu0 0
        %3331 = vmatpush1.bf16.xpose.msra.mxu0 0
        %3332 = vmatprep.subr.bf16.mxu0 0
        %3333 = vmatpush1.bf16.xpose.msra.mxu0 0
        %3334 = vmatprep.subr.bf16.mxu0 0
        %3335 = vmatpush1.bf16.xpose.msra.mxu0 0
        %3336 = vmatprep.subr.bf16.mxu0 0
        %3337 = vmatpush1.bf16.xpose.msra.mxu0 %v3320
        %3338 = vmatprep.subr.bf16.mxu0 0
        %3339 = vmatpush2.bf16.xpose.msra.mxu0 0
        %3340 = vmatprep.subr.bf16.mxu0 0
        %3341 = vmatpush2.bf16.xpose.msra.mxu0 0
        %3342 = vmatprep.subr.bf16.mxu0 0
        %3343 = vmatpush2.bf16.xpose.msra.mxu0 0
        %3344 = vmatprep.subr.bf16.mxu0 0
        %3345 = vmatpush2.bf16.xpose.msra.mxu0 0
        %3346 = vmatprep.subr.bf16.mxu0 0
        %3347 = vmatpush2.bf16.xpose.msra.mxu0 0
        %3348 = vmatprep.subr.bf16.mxu0 0
        %3349 = vmatpush2.bf16.xpose.msra.mxu0 0
        %3350 = vmatprep.subr.bf16.mxu0 0
        %3351 = vmatpush2.bf16.xpose.msra.mxu0 0
        %3352 = vmatprep.subr.bf16.mxu0 0
        %3353 = vmatpush2.bf16.xpose.msra.mxu0 0
        %3354 = vmatprep.mubr.bf16.mxu0 0
        %3355 = vmatmul.mubr.bf16.gmra.mxu0 %v3317
        %v3356 = vpop.f32.mrf.mxu0
        %v3357 = vadd.f32 %v1969, %v3356
        %v3358 = vpop.f32.mrf.mxu0
        %v3359 = vpop.f32.mrf.mxu0
        %v3360 = vpop.f32.mrf.mxu0
        %3361 = vdwg.mxu0
        %v3362 = vsel %vm2113, %v3357, -inf
        %3363 = vmax.xlane.f32.xlu0 %v3362
        %v3364 = vpop.xlane.xlu0 %3363
        %v3365 = vsub.f32 %v3357, %v3364
        %v3366 = vmul.f32 %v3365, 1.442695
        %v3367 = vpow.pop %v3366
        %v3368 = vsel %vm2113, %v3367, 0.0
        %3369 = vadd.xlane.f32.xlu0 %v3368
        %v3370 = vpop.xlane.xlu0 %3369
        %v3371 = vpack.c.bf16 %v3367, %v3367
        %3373 = vrot.lane.b32.xlu0 %v1962, 16
        %v3374 = vpop.permute.xlu0 %3373
        %3375 = vrot.lane.b32.xlu0 %v1963, 16
        %v3376 = vpop.permute.xlu0 %3375
        %v3377 = vsel %vm3308, %v3374, %v3376
        %v3379 = vsel %vm2113, %v3371, 0
        %v3382 = vsel %vm2127, %v3377, 0
        %3384 = vmatprep.subr.bf16.mxu0 0
        %3385 = vmatpush1.bf16.msra.mxu0 0
        %3386 = vmatprep.subr.bf16.mxu0 0
        %3387 = vmatpush1.bf16.msra.mxu0 0
        %3388 = vmatprep.subr.bf16.mxu0 0
        %3389 = vmatpush1.bf16.msra.mxu0 0
        %3390 = vmatprep.subr.bf16.mxu0 0
        %3391 = vmatpush1.bf16.msra.mxu0 0
        %3392 = vmatprep.subr.bf16.mxu0 0
        %3393 = vmatpush1.bf16.msra.mxu0 0
        %3394 = vmatprep.subr.bf16.mxu0 0
        %3395 = vmatpush1.bf16.msra.mxu0 0
        %3396 = vmatprep.subr.bf16.mxu0 0
        %3397 = vmatpush1.bf16.msra.mxu0 0
        %3398 = vmatprep.subr.bf16.mxu0 0
        %3399 = vmatpush1.bf16.msra.mxu0 %v3382
        %3400 = vmatprep.subr.bf16.mxu0 0
        %3401 = vmatpush2.bf16.msra.mxu0 0
        %3402 = vmatprep.subr.bf16.mxu0 0
        %3403 = vmatpush2.bf16.msra.mxu0 0
        %3404 = vmatprep.subr.bf16.mxu0 0
        %3405 = vmatpush2.bf16.msra.mxu0 0
        %3406 = vmatprep.subr.bf16.mxu0 0
        %3407 = vmatpush2.bf16.msra.mxu0 0
        %3408 = vmatprep.subr.bf16.mxu0 0
        %3409 = vmatpush2.bf16.msra.mxu0 0
        %3410 = vmatprep.subr.bf16.mxu0 0
        %3411 = vmatpush2.bf16.msra.mxu0 0
        %3412 = vmatprep.subr.bf16.mxu0 0
        %3413 = vmatpush2.bf16.msra.mxu0 0
        %3414 = vmatprep.subr.bf16.mxu0 0
        %3415 = vmatpush2.bf16.msra.mxu0 0
        %3416 = vmatprep.mubr.bf16.mxu0 0
        %3417 = vmatmul.mubr.bf16.gmra.mxu0 %v3379
        %v3418 = vpop.f32.mrf.mxu0
        %v3419 = vadd.f32 0.0, %v3418
        %v3420 = vpop.f32.mrf.mxu0
        %v3421 = vpop.f32.mrf.mxu0
        %v3422 = vpop.f32.mrf.mxu0
        %3423 = vdwg.mxu0
        %v3424 = vrcp.pop %v3370
        %v3425 = vmul.f32 %v3419, %v3424
        %v3426 = vpack.c.bf16 %v3425, %v3425
        %v3439 = vunpack.c.l.b16 %v2030
        %v3440 = vunpack.c.h.b16 %v2030
        %v3441 = vunpack.c.l.b16 %v2031
        %v3442 = vunpack.c.l.b16 %v2032
        %v3443 = vunpack.c.h.b16 %v2032
        %v3444 = vunpack.c.l.b16 %v2033
        %v3445 = vunpack.c.l.b16 %v2034
        %v3446 = vunpack.c.h.b16 %v2034
        %v3447 = vunpack.c.l.b16 %v2035
        %v3448 = vunpack.c.l.b16 %v2036
        %v3449 = vunpack.c.h.b16 %v2036
        %v3450 = vunpack.c.l.b16 %v2037
        %v3451 = vunpack.c.l.b16 %v2038
        %v3452 = vunpack.c.h.b16 %v2038
        %v3453 = vunpack.c.l.b16 %v2039
        %v3454 = vunpack.c.l.b16 %v2040
        %v3455 = vunpack.c.h.b16 %v2040
        %v3456 = vunpack.c.l.b16 %v2041
        %v3457 = vpack.c.b16 %v3442, %v3439
        %v3458 = vpack.c.b16 %v3443, %v3440
        %v3459 = vpack.c.b16 %v3444, %v3441
        %v3460 = vpack.c.b16 %v3448, %v3445
        %v3461 = vpack.c.b16 %v3449, %v3446
        %v3462 = vpack.c.b16 %v3450, %v3447
        %v3463 = vpack.c.b16 %v3454, %v3451
        %v3464 = vpack.c.b16 %v3455, %v3452
        %v3465 = vpack.c.b16 %v3456, %v3453
        %v3476 = vsel %vm2066, %v3426, 0
        %3478 = vmatprep.subr.bf16.mxu0 0
        %3479 = vmatpush1.bf16.msra.mxu0 0
        %3480 = vmatprep.subr.bf16.mxu0 0
        %3481 = vmatpush1.bf16.msra.mxu0 0
        %3482 = vmatprep.subr.bf16.mxu0 0
        %3483 = vmatpush1.bf16.msra.mxu0 0
        %3484 = vmatprep.subr.bf16.mxu0 0
        %3485 = vmatpush1.bf16.msra.mxu0 0
        %3486 = vmatprep.subr.bf16.mxu0 0
        %3487 = vmatpush1.bf16.msra.mxu0 0
        %3488 = vmatprep.subr.bf16.mxu0 %v3464
        %3489 = vmatpush1.bf16.msra.mxu0 %v3463
        %3490 = vmatprep.subr.bf16.mxu0 %v3461
        %3491 = vmatpush1.bf16.msra.mxu0 %v3460
        %3492 = vmatprep.subr.bf16.mxu0 %v3458
        %3493 = vmatpush1.bf16.msra.mxu0 %v3457
        %3494 = vmatprep.subr.bf16.mxu0 0
        %3495 = vmatpush2.bf16.msra.mxu0 0
        %3496 = vmatprep.subr.bf16.mxu0 0
        %3497 = vmatpush2.bf16.msra.mxu0 0
        %3498 = vmatprep.subr.bf16.mxu0 0
        %3499 = vmatpush2.bf16.msra.mxu0 0
        %3500 = vmatprep.subr.bf16.mxu0 0
        %3501 = vmatpush2.bf16.msra.mxu0 0
        %3502 = vmatprep.subr.bf16.mxu0 0
        %3503 = vmatpush2.bf16.msra.mxu0 0
        %3504 = vmatprep.subr.bf16.mxu0 0
        %3505 = vmatpush2.bf16.msra.mxu0 0
        %3506 = vmatprep.subr.bf16.mxu0 0
        %3507 = vmatpush2.bf16.msra.mxu0 0
        %3508 = vmatprep.subr.bf16.mxu0 0
        %3509 = vmatpush2.bf16.msra.mxu0 0
        %3510 = vmatprep.mubr.bf16.mxu0 0
        %3511 = vmatmul.mubr.bf16.gmra.mxu0 %v3476
        %v3512 = vpop.f32.mrf.mxu0
        %v3513 = vadd.f32 0.0, %v3512
        %v3514 = vpop.f32.mrf.mxu0
        %v3515 = vadd.f32 0.0, %v3514
        %v3516 = vpop.f32.mrf.mxu0
        %v3517 = vpop.f32.mrf.mxu0
        %3518 = vdwg.mxu0
        %3519 = vmatprep.subr.bf16.mxu0 0
        %3520 = vmatpush1.bf16.msra.mxu0 0
        %3521 = vmatprep.subr.bf16.mxu0 0
        %3522 = vmatpush1.bf16.msra.mxu0 0
        %3523 = vmatprep.subr.bf16.mxu0 0
        %3524 = vmatpush1.bf16.msra.mxu0 0
        %3525 = vmatprep.subr.bf16.mxu0 0
        %3526 = vmatpush1.bf16.msra.mxu0 0
        %3527 = vmatprep.subr.bf16.mxu0 0
        %3528 = vmatpush1.bf16.msra.mxu0 0
        %3529 = vmatprep.subr.bf16.mxu0 0
        %3530 = vmatpush1.bf16.msra.mxu0 %v3465
        %3531 = vmatprep.subr.bf16.mxu0 0
        %3532 = vmatpush1.bf16.msra.mxu0 %v3462
        %3533 = vmatprep.subr.bf16.mxu0 0
        %3534 = vmatpush1.bf16.msra.mxu0 %v3459
        %3535 = vmatprep.subr.bf16.mxu0 0
        %3536 = vmatpush2.bf16.msra.mxu0 0
        %3537 = vmatprep.subr.bf16.mxu0 0
        %3538 = vmatpush2.bf16.msra.mxu0 0
        %3539 = vmatprep.subr.bf16.mxu0 0
        %3540 = vmatpush2.bf16.msra.mxu0 0
        %3541 = vmatprep.subr.bf16.mxu0 0
        %3542 = vmatpush2.bf16.msra.mxu0 0
        %3543 = vmatprep.subr.bf16.mxu0 0
        %3544 = vmatpush2.bf16.msra.mxu0 0
        %3545 = vmatprep.subr.bf16.mxu0 0
        %3546 = vmatpush2.bf16.msra.mxu0 0
        %3547 = vmatprep.subr.bf16.mxu0 0
        %3548 = vmatpush2.bf16.msra.mxu0 0
        %3549 = vmatprep.subr.bf16.mxu0 0
        %3550 = vmatpush2.bf16.msra.mxu0 0
        %3551 = vmatprep.mubr.bf16.mxu0 0
        %3552 = vmatmul.mubr.bf16.gmra.mxu0 %v3476
        %v3553 = vpop.f32.mrf.mxu0
        %v3554 = vadd.f32 0.0, %v3553
        %v3555 = vpop.f32.mrf.mxu0
        %v3556 = vpop.f32.mrf.mxu0
        %v3557 = vpop.f32.mrf.mxu0
        %3558 = vdwg.mxu0
        %v3559 = vadd.f32 %v3300, %v3513
        %v3560 = vadd.f32 %v3301, %v3515
        %v3561 = vadd.f32 %v3302, %v3554
        %3562 = vrot.lane.b32.xlu0 %v1957, 96
        %v3563 = vpop.permute.xlu0 %3562
        %3564 = vrot.lane.b32.xlu0 %v1960, 96
        %v3565 = vpop.permute.xlu0 %3564
        %v3567 = vsel %vm2066, %v3563, 0
        %v3570 = vsel %vm2066, %v3565, 0
        %3572 = vmatprep.subr.bf16.mxu0 0
        %3573 = vmatpush1.bf16.xpose.msra.mxu0 0
        %3574 = vmatprep.subr.bf16.mxu0 0
        %3575 = vmatpush1.bf16.xpose.msra.mxu0 0
        %3576 = vmatprep.subr.bf16.mxu0 0
        %3577 = vmatpush1.bf16.xpose.msra.mxu0 0
        %3578 = vmatprep.subr.bf16.mxu0 0
        %3579 = vmatpush1.bf16.xpose.msra.mxu0 0
        %3580 = vmatprep.subr.bf16.mxu0 0
        %3581 = vmatpush1.bf16.xpose.msra.mxu0 0
        %3582 = vmatprep.subr.bf16.mxu0 0
        %3583 = vmatpush1.bf16.xpose.msra.mxu0 0
        %3584 = vmatprep.subr.bf16.mxu0 0
        %3585 = vmatpush1.bf16.xpose.msra.mxu0 0
        %3586 = vmatprep.subr.bf16.mxu0 0
        %3587 = vmatpush1.bf16.xpose.msra.mxu0 %v3570
        %3588 = vmatprep.subr.bf16.mxu0 0
        %3589 = vmatpush2.bf16.xpose.msra.mxu0 0
        %3590 = vmatprep.subr.bf16.mxu0 0
        %3591 = vmatpush2.bf16.xpose.msra.mxu0 0
        %3592 = vmatprep.subr.bf16.mxu0 0
        %3593 = vmatpush2.bf16.xpose.msra.mxu0 0
        %3594 = vmatprep.subr.bf16.mxu0 0
        %3595 = vmatpush2.bf16.xpose.msra.mxu0 0
        %3596 = vmatprep.subr.bf16.mxu0 0
        %3597 = vmatpush2.bf16.xpose.msra.mxu0 0
        %3598 = vmatprep.subr.bf16.mxu0 0
        %3599 = vmatpush2.bf16.xpose.msra.mxu0 0
        %3600 = vmatprep.subr.bf16.mxu0 0
        %3601 = vmatpush2.bf16.xpose.msra.mxu0 0
        %3602 = vmatprep.subr.bf16.mxu0 0
        %3603 = vmatpush2.bf16.xpose.msra.mxu0 0
        %3604 = vmatprep.mubr.bf16.mxu0 0
        %3605 = vmatmul.mubr.bf16.gmra.mxu0 %v3567
        %v3606 = vpop.f32.mrf.mxu0
        %v3607 = vadd.f32 %v1969, %v3606
        %v3608 = vpop.f32.mrf.mxu0
        %v3609 = vpop.f32.mrf.mxu0
        %v3610 = vpop.f32.mrf.mxu0
        %3611 = vdwg.mxu0
        %v3612 = vsel %vm2113, %v3607, -inf
        %3613 = vmax.xlane.f32.xlu0 %v3612
        %v3614 = vpop.xlane.xlu0 %3613
        %v3615 = vsub.f32 %v3607, %v3614
        %v3616 = vmul.f32 %v3615, 1.442695
        %v3617 = vpow.pop %v3616
        %v3618 = vsel %vm2113, %v3617, 0.0
        %3619 = vadd.xlane.f32.xlu0 %v3618
        %v3620 = vpop.xlane.xlu0 %3619
        %v3621 = vpack.c.bf16 %v3617, %v3617
        %3622 = vrot.lane.b32.xlu0 %v1963, 96
        %v3623 = vpop.permute.xlu0 %3622
        %v3625 = vsel %vm2113, %v3621, 0
        %v3628 = vsel %vm2127, %v3623, 0
        %3630 = vmatprep.subr.bf16.mxu0 0
        %3631 = vmatpush1.bf16.msra.mxu0 0
        %3632 = vmatprep.subr.bf16.mxu0 0
        %3633 = vmatpush1.bf16.msra.mxu0 0
        %3634 = vmatprep.subr.bf16.mxu0 0
        %3635 = vmatpush1.bf16.msra.mxu0 0
        %3636 = vmatprep.subr.bf16.mxu0 0
        %3637 = vmatpush1.bf16.msra.mxu0 0
        %3638 = vmatprep.subr.bf16.mxu0 0
        %3639 = vmatpush1.bf16.msra.mxu0 0
        %3640 = vmatprep.subr.bf16.mxu0 0
        %3641 = vmatpush1.bf16.msra.mxu0 0
        %3642 = vmatprep.subr.bf16.mxu0 0
        %3643 = vmatpush1.bf16.msra.mxu0 0
        %3644 = vmatprep.subr.bf16.mxu0 0
        %3645 = vmatpush1.bf16.msra.mxu0 %v3628
        %3646 = vmatprep.subr.bf16.mxu0 0
        %3647 = vmatpush2.bf16.msra.mxu0 0
        %3648 = vmatprep.subr.bf16.mxu0 0
        %3649 = vmatpush2.bf16.msra.mxu0 0
        %3650 = vmatprep.subr.bf16.mxu0 0
        %3651 = vmatpush2.bf16.msra.mxu0 0
        %3652 = vmatprep.subr.bf16.mxu0 0
        %3653 = vmatpush2.bf16.msra.mxu0 0
        %3654 = vmatprep.subr.bf16.mxu0 0
        %3655 = vmatpush2.bf16.msra.mxu0 0
        %3656 = vmatprep.subr.bf16.mxu0 0
        %3657 = vmatpush2.bf16.msra.mxu0 0
        %3658 = vmatprep.subr.bf16.mxu0 0
        %3659 = vmatpush2.bf16.msra.mxu0 0
        %3660 = vmatprep.subr.bf16.mxu0 0
        %3661 = vmatpush2.bf16.msra.mxu0 0
        %3662 = vmatprep.mubr.bf16.mxu0 0
        %3663 = vmatmul.mubr.bf16.gmra.mxu0 %v3625
        %v3664 = vpop.f32.mrf.mxu0
        %v3665 = vadd.f32 0.0, %v3664
        %v3666 = vpop.f32.mrf.mxu0
        %v3667 = vpop.f32.mrf.mxu0
        %v3668 = vpop.f32.mrf.mxu0
        %3669 = vdwg.mxu0
        %v3670 = vrcp.pop %v3620
        %v3671 = vmul.f32 %v3665, %v3670
        %v3672 = vpack.c.bf16 %v3671, %v3671
        %v3685 = vunpack.c.l.b16 %v2042
        %v3686 = vunpack.c.h.b16 %v2042
        %v3687 = vunpack.c.l.b16 %v2043
        %v3688 = vunpack.c.l.b16 %v2044
        %v3689 = vunpack.c.h.b16 %v2044
        %v3690 = vunpack.c.l.b16 %v2045
        %v3691 = vunpack.c.l.b16 %v2046
        %v3692 = vunpack.c.h.b16 %v2046
        %v3693 = vunpack.c.l.b16 %v2047
        %v3694 = vunpack.c.l.b16 %v2048
        %v3695 = vunpack.c.h.b16 %v2048
        %v3696 = vunpack.c.l.b16 %v2049
        %v3697 = vunpack.c.l.b16 %v2050
        %v3698 = vunpack.c.h.b16 %v2050
        %v3699 = vunpack.c.l.b16 %v2051
        %v3700 = vunpack.c.l.b16 %v2052
        %v3701 = vunpack.c.h.b16 %v2052
        %v3702 = vunpack.c.l.b16 %v2053
        %v3703 = vpack.c.b16 %v3688, %v3685
        %v3704 = vpack.c.b16 %v3689, %v3686
        %v3705 = vpack.c.b16 %v3690, %v3687
        %v3706 = vpack.c.b16 %v3694, %v3691
        %v3707 = vpack.c.b16 %v3695, %v3692
        %v3708 = vpack.c.b16 %v3696, %v3693
        %v3709 = vpack.c.b16 %v3700, %v3697
        %v3710 = vpack.c.b16 %v3701, %v3698
        %v3711 = vpack.c.b16 %v3702, %v3699
        %v3722 = vsel %vm2066, %v3672, 0
        %3724 = vmatprep.subr.bf16.mxu0 0
        %3725 = vmatpush1.bf16.msra.mxu0 0
        %3726 = vmatprep.subr.bf16.mxu0 0
        %3727 = vmatpush1.bf16.msra.mxu0 0
        %3728 = vmatprep.subr.bf16.mxu0 0
        %3729 = vmatpush1.bf16.msra.mxu0 0
        %3730 = vmatprep.subr.bf16.mxu0 0
        %3731 = vmatpush1.bf16.msra.mxu0 0
        %3732 = vmatprep.subr.bf16.mxu0 0
        %3733 = vmatpush1.bf16.msra.mxu0 0
        %3734 = vmatprep.subr.bf16.mxu0 %v3710
        %3735 = vmatpush1.bf16.msra.mxu0 %v3709
        %3736 = vmatprep.subr.bf16.mxu0 %v3707
        %3737 = vmatpush1.bf16.msra.mxu0 %v3706
        %3738 = vmatprep.subr.bf16.mxu0 %v3704
        %3739 = vmatpush1.bf16.msra.mxu0 %v3703
        %3740 = vmatprep.subr.bf16.mxu0 0
        %3741 = vmatpush2.bf16.msra.mxu0 0
        %3742 = vmatprep.subr.bf16.mxu0 0
        %3743 = vmatpush2.bf16.msra.mxu0 0
        %3744 = vmatprep.subr.bf16.mxu0 0
        %3745 = vmatpush2.bf16.msra.mxu0 0
        %3746 = vmatprep.subr.bf16.mxu0 0
        %3747 = vmatpush2.bf16.msra.mxu0 0
        %3748 = vmatprep.subr.bf16.mxu0 0
        %3749 = vmatpush2.bf16.msra.mxu0 0
        %3750 = vmatprep.subr.bf16.mxu0 0
        %3751 = vmatpush2.bf16.msra.mxu0 0
        %3752 = vmatprep.subr.bf16.mxu0 0
        %3753 = vmatpush2.bf16.msra.mxu0 0
        %3754 = vmatprep.subr.bf16.mxu0 0
        %3755 = vmatpush2.bf16.msra.mxu0 0
        %3756 = vmatprep.mubr.bf16.mxu0 0
        %3757 = vmatmul.mubr.bf16.gmra.mxu0 %v3722
        %v3758 = vpop.f32.mrf.mxu0
        %v3759 = vadd.f32 0.0, %v3758
        %v3760 = vpop.f32.mrf.mxu0
        %v3761 = vadd.f32 0.0, %v3760
        %v3762 = vpop.f32.mrf.mxu0
        %v3763 = vpop.f32.mrf.mxu0
        %3764 = vdwg.mxu0
        %3765 = vmatprep.subr.bf16.mxu0 0
        %3766 = vmatpush1.bf16.msra.mxu0 0
        %3767 = vmatprep.subr.bf16.mxu0 0
        %3768 = vmatpush1.bf16.msra.mxu0 0
        %3769 = vmatprep.subr.bf16.mxu0 0
        %3770 = vmatpush1.bf16.msra.mxu0 0
        %3771 = vmatprep.subr.bf16.mxu0 0
        %3772 = vmatpush1.bf16.msra.mxu0 0
        %3773 = vmatprep.subr.bf16.mxu0 0
        %3774 = vmatpush1.bf16.msra.mxu0 0
        %3775 = vmatprep.subr.bf16.mxu0 0
        %3776 = vmatpush1.bf16.msra.mxu0 %v3711
        %3777 = vmatprep.subr.bf16.mxu0 0
        %3778 = vmatpush1.bf16.msra.mxu0 %v3708
        %3779 = vmatprep.subr.bf16.mxu0 0
        %3780 = vmatpush1.bf16.msra.mxu0 %v3705
        %3781 = vmatprep.subr.bf16.mxu0 0
        %3782 = vmatpush2.bf16.msra.mxu0 0
        %3783 = vmatprep.subr.bf16.mxu0 0
        %3784 = vmatpush2.bf16.msra.mxu0 0
        %3785 = vmatprep.subr.bf16.mxu0 0
        %3786 = vmatpush2.bf16.msra.mxu0 0
        %3787 = vmatprep.subr.bf16.mxu0 0
        %3788 = vmatpush2.bf16.msra.mxu0 0
        %3789 = vmatprep.subr.bf16.mxu0 0
        %3790 = vmatpush2.bf16.msra.mxu0 0
        %3791 = vmatprep.subr.bf16.mxu0 0
        %3792 = vmatpush2.bf16.msra.mxu0 0
        %3793 = vmatprep.subr.bf16.mxu0 0
        %3794 = vmatpush2.bf16.msra.mxu0 0
        %3795 = vmatprep.subr.bf16.mxu0 0
        %3796 = vmatpush2.bf16.msra.mxu0 0
        %3797 = vmatprep.mubr.bf16.mxu0 0
        %3798 = vmatmul.mubr.bf16.gmra.mxu0 %v3722
        %v3799 = vpop.f32.mrf.mxu0
        %v3800 = vadd.f32 0.0, %v3799
        %v3801 = vpop.f32.mrf.mxu0
        %v3802 = vpop.f32.mrf.mxu0
        %v3803 = vpop.f32.mrf.mxu0
        %3804 = vdwg.mxu0
        %v3805 = vadd.f32 %v3559, %v3759
        %v3806 = vadd.f32 %v3560, %v3761
        %v3807 = vadd.f32 %v3561, %v3800
        %3808 = vrot.lane.b32.xlu0 %v1957, 48
        %v3809 = vpop.permute.xlu0 %3808
        %3810 = vrot.lane.b32.xlu0 %v1960, 48
        %v3811 = vpop.permute.xlu0 %3810
        %v3813 = vsel %vm2066, %v3809, 0
        %v3816 = vsel %vm2066, %v3811, 0
        %3818 = vmatprep.subr.bf16.mxu0 0
        %3819 = vmatpush1.bf16.xpose.msra.mxu0 0
        %3820 = vmatprep.subr.bf16.mxu0 0
        %3821 = vmatpush1.bf16.xpose.msra.mxu0 0
        %3822 = vmatprep.subr.bf16.mxu0 0
        %3823 = vmatpush1.bf16.xpose.msra.mxu0 0
        %3824 = vmatprep.subr.bf16.mxu0 0
        %3825 = vmatpush1.bf16.xpose.msra.mxu0 0
        %3826 = vmatprep.subr.bf16.mxu0 0
        %3827 = vmatpush1.bf16.xpose.msra.mxu0 0
        %3828 = vmatprep.subr.bf16.mxu0 0
        %3829 = vmatpush1.bf16.xpose.msra.mxu0 0
        %3830 = vmatprep.subr.bf16.mxu0 0
        %3831 = vmatpush1.bf16.xpose.msra.mxu0 0
        %3832 = vmatprep.subr.bf16.mxu0 0
        %3833 = vmatpush1.bf16.xpose.msra.mxu0 %v3816
        %3834 = vmatprep.subr.bf16.mxu0 0
        %3835 = vmatpush2.bf16.xpose.msra.mxu0 0
        %3836 = vmatprep.subr.bf16.mxu0 0
        %3837 = vmatpush2.bf16.xpose.msra.mxu0 0
        %3838 = vmatprep.subr.bf16.mxu0 0
        %3839 = vmatpush2.bf16.xpose.msra.mxu0 0
        %3840 = vmatprep.subr.bf16.mxu0 0
        %3841 = vmatpush2.bf16.xpose.msra.mxu0 0
        %3842 = vmatprep.subr.bf16.mxu0 0
        %3843 = vmatpush2.bf16.xpose.msra.mxu0 0
        %3844 = vmatprep.subr.bf16.mxu0 0
        %3845 = vmatpush2.bf16.xpose.msra.mxu0 0
        %3846 = vmatprep.subr.bf16.mxu0 0
        %3847 = vmatpush2.bf16.xpose.msra.mxu0 0
        %3848 = vmatprep.subr.bf16.mxu0 0
        %3849 = vmatpush2.bf16.xpose.msra.mxu0 0
        %3850 = vmatprep.mubr.bf16.mxu0 0
        %3851 = vmatmul.mubr.bf16.gmra.mxu0 %v3813
        %v3852 = vpop.f32.mrf.mxu0
        %v3853 = vadd.f32 %v1969, %v3852
        %v3854 = vpop.f32.mrf.mxu0
        %v3855 = vpop.f32.mrf.mxu0
        %v3856 = vpop.f32.mrf.mxu0
        %3857 = vdwg.mxu0
        %v3858 = vsel %vm2113, %v3853, -inf
        %3859 = vmax.xlane.f32.xlu0 %v3858
        %v3860 = vpop.xlane.xlu0 %3859
        %v3861 = vsub.f32 %v3853, %v3860
        %v3862 = vmul.f32 %v3861, 1.442695
        %v3863 = vpow.pop %v3862
        %v3864 = vsel %vm2113, %v3863, 0.0
        %3865 = vadd.xlane.f32.xlu0 %v3864
        %v3866 = vpop.xlane.xlu0 %3865
        %v3867 = vpack.c.bf16 %v3863, %v3863
        %3868 = vrot.lane.b32.xlu0 %v1963, 48
        %v3869 = vpop.permute.xlu0 %3868
        %v3871 = vsel %vm2113, %v3867, 0
        %v3874 = vsel %vm2127, %v3869, 0
        %3876 = vmatprep.subr.bf16.mxu0 0
        %3877 = vmatpush1.bf16.msra.mxu0 0
        %3878 = vmatprep.subr.bf16.mxu0 0
        %3879 = vmatpush1.bf16.msra.mxu0 0
        %3880 = vmatprep.subr.bf16.mxu0 0
        %3881 = vmatpush1.bf16.msra.mxu0 0
        %3882 = vmatprep.subr.bf16.mxu0 0
        %3883 = vmatpush1.bf16.msra.mxu0 0
        %3884 = vmatprep.subr.bf16.mxu0 0
        %3885 = vmatpush1.bf16.msra.mxu0 0
        %3886 = vmatprep.subr.bf16.mxu0 0
        %3887 = vmatpush1.bf16.msra.mxu0 0
        %3888 = vmatprep.subr.bf16.mxu0 0
        %3889 = vmatpush1.bf16.msra.mxu0 0
        %3890 = vmatprep.subr.bf16.mxu0 0
        %3891 = vmatpush1.bf16.msra.mxu0 %v3874
        %3892 = vmatprep.subr.bf16.mxu0 0
        %3893 = vmatpush2.bf16.msra.mxu0 0
        %3894 = vmatprep.subr.bf16.mxu0 0
        %3895 = vmatpush2.bf16.msra.mxu0 0
        %3896 = vmatprep.subr.bf16.mxu0 0
        %3897 = vmatpush2.bf16.msra.mxu0 0
        %3898 = vmatprep.subr.bf16.mxu0 0
        %3899 = vmatpush2.bf16.msra.mxu0 0
        %3900 = vmatprep.subr.bf16.mxu0 0
        %3901 = vmatpush2.bf16.msra.mxu0 0
        %3902 = vmatprep.subr.bf16.mxu0 0
        %3903 = vmatpush2.bf16.msra.mxu0 0
        %3904 = vmatprep.subr.bf16.mxu0 0
        %3905 = vmatpush2.bf16.msra.mxu0 0
        %3906 = vmatprep.subr.bf16.mxu0 0
        %3907 = vmatpush2.bf16.msra.mxu0 0
        %3908 = vmatprep.mubr.bf16.mxu0 0
        %3909 = vmatmul.mubr.bf16.gmra.mxu0 %v3871
        %v3910 = vpop.f32.mrf.mxu0
        %v3911 = vadd.f32 0.0, %v3910
        %v3912 = vpop.f32.mrf.mxu0
        %v3913 = vpop.f32.mrf.mxu0
        %v3914 = vpop.f32.mrf.mxu0
        %3915 = vdwg.mxu0
        %v3916 = vrcp.pop %v3866
        %v3917 = vmul.f32 %v3911, %v3916
        %v3918 = vpack.c.bf16 %v3917, %v3917
        %v3931 = vunpack.c.l.b16 %v2054
        %v3932 = vunpack.c.h.b16 %v2054
        %v3933 = vunpack.c.l.b16 %v2055
        %v3934 = vunpack.c.l.b16 %v2056
        %v3935 = vunpack.c.h.b16 %v2056
        %v3936 = vunpack.c.l.b16 %v2057
        %v3937 = vunpack.c.l.b16 %v2058
        %v3938 = vunpack.c.h.b16 %v2058
        %v3939 = vunpack.c.l.b16 %v2059
        %v3940 = vunpack.c.l.b16 %v2060
        %v3941 = vunpack.c.h.b16 %v2060
        %v3942 = vunpack.c.l.b16 %v2061
        %v3943 = vunpack.c.l.b16 %v2062
        %v3944 = vunpack.c.h.b16 %v2062
        %v3945 = vunpack.c.l.b16 %v2063
        %v3946 = vunpack.c.l.b16 %v2064
        %v3947 = vunpack.c.h.b16 %v2064
        %v3948 = vunpack.c.l.b16 %v2065
        %v3949 = vpack.c.b16 %v3934, %v3931
        %v3950 = vpack.c.b16 %v3935, %v3932
        %v3951 = vpack.c.b16 %v3936, %v3933
        %v3952 = vpack.c.b16 %v3940, %v3937
        %v3953 = vpack.c.b16 %v3941, %v3938
        %v3954 = vpack.c.b16 %v3942, %v3939
        %v3955 = vpack.c.b16 %v3946, %v3943
        %v3956 = vpack.c.b16 %v3947, %v3944
        %v3957 = vpack.c.b16 %v3948, %v3945
        %v3968 = vsel %vm2066, %v3918, 0
        %3970 = vmatprep.subr.bf16.mxu0 0
        %3971 = vmatpush1.bf16.msra.mxu0 0
        %3972 = vmatprep.subr.bf16.mxu0 0
        %3973 = vmatpush1.bf16.msra.mxu0 0
        %3974 = vmatprep.subr.bf16.mxu0 0
        %3975 = vmatpush1.bf16.msra.mxu0 0
        %3976 = vmatprep.subr.bf16.mxu0 0
        %3977 = vmatpush1.bf16.msra.mxu0 0
        %3978 = vmatprep.subr.bf16.mxu0 0
        %3979 = vmatpush1.bf16.msra.mxu0 0
        %3980 = vmatprep.subr.bf16.mxu0 %v3956
        %3981 = vmatpush1.bf16.msra.mxu0 %v3955
        %3982 = vmatprep.subr.bf16.mxu0 %v3953
        %3983 = vmatpush1.bf16.msra.mxu0 %v3952
        %3984 = vmatprep.subr.bf16.mxu0 %v3950
        %3985 = vmatpush1.bf16.msra.mxu0 %v3949
        %3986 = vmatprep.subr.bf16.mxu0 0
        %3987 = vmatpush2.bf16.msra.mxu0 0
        %3988 = vmatprep.subr.bf16.mxu0 0
        %3989 = vmatpush2.bf16.msra.mxu0 0
        %3990 = vmatprep.subr.bf16.mxu0 0
        %3991 = vmatpush2.bf16.msra.mxu0 0
        %3992 = vmatprep.subr.bf16.mxu0 0
        %3993 = vmatpush2.bf16.msra.mxu0 0
        %3994 = vmatprep.subr.bf16.mxu0 0
        %3995 = vmatpush2.bf16.msra.mxu0 0
        %3996 = vmatprep.subr.bf16.mxu0 0
        %3997 = vmatpush2.bf16.msra.mxu0 0
        %3998 = vmatprep.subr.bf16.mxu0 0
        %3999 = vmatpush2.bf16.msra.mxu0 0
        %4000 = vmatprep.subr.bf16.mxu0 0
        %4001 = vmatpush2.bf16.msra.mxu0 0
        %4002 = vmatprep.mubr.bf16.mxu0 0
        %4003 = vmatmul.mubr.bf16.gmra.mxu0 %v3968
        %v4004 = vpop.f32.mrf.mxu0
        %v4005 = vadd.f32 0.0, %v4004
        %v4006 = vpop.f32.mrf.mxu0
        %v4007 = vadd.f32 0.0, %v4006
        %v4008 = vpop.f32.mrf.mxu0
        %v4009 = vpop.f32.mrf.mxu0
        %4010 = vdwg.mxu0
        %4011 = vmatprep.subr.bf16.mxu0 0
        %4012 = vmatpush1.bf16.msra.mxu0 0
        %4013 = vmatprep.subr.bf16.mxu0 0
        %4014 = vmatpush1.bf16.msra.mxu0 0
        %4015 = vmatprep.subr.bf16.mxu0 0
        %4016 = vmatpush1.bf16.msra.mxu0 0
        %4017 = vmatprep.subr.bf16.mxu0 0
        %4018 = vmatpush1.bf16.msra.mxu0 0
        %4019 = vmatprep.subr.bf16.mxu0 0
        %4020 = vmatpush1.bf16.msra.mxu0 0
        %4021 = vmatprep.subr.bf16.mxu0 0
        %4022 = vmatpush1.bf16.msra.mxu0 %v3957
        %4023 = vmatprep.subr.bf16.mxu0 0
        %4024 = vmatpush1.bf16.msra.mxu0 %v3954
        %4025 = vmatprep.subr.bf16.mxu0 0
        %4026 = vmatpush1.bf16.msra.mxu0 %v3951
        %4027 = vmatprep.subr.bf16.mxu0 0
        %4028 = vmatpush2.bf16.msra.mxu0 0
        %4029 = vmatprep.subr.bf16.mxu0 0
        %4030 = vmatpush2.bf16.msra.mxu0 0
        %4031 = vmatprep.subr.bf16.mxu0 0
        %4032 = vmatpush2.bf16.msra.mxu0 0
        %4033 = vmatprep.subr.bf16.mxu0 0
        %4034 = vmatpush2.bf16.msra.mxu0 0
        %4035 = vmatprep.subr.bf16.mxu0 0
        %4036 = vmatpush2.bf16.msra.mxu0 0
        %4037 = vmatprep.subr.bf16.mxu0 0
        %4038 = vmatpush2.bf16.msra.mxu0 0
        %4039 = vmatprep.subr.bf16.mxu0 0
        %4040 = vmatpush2.bf16.msra.mxu0 0
        %4041 = vmatprep.subr.bf16.mxu0 0
        %4042 = vmatpush2.bf16.msra.mxu0 0
        %4043 = vmatprep.mubr.bf16.mxu0 0
        %4044 = vmatmul.mubr.bf16.gmra.mxu0 %v3968
        %v4045 = vpop.f32.mrf.mxu0
        %v4046 = vadd.f32 0.0, %v4045
        %v4047 = vpop.f32.mrf.mxu0
        %v4048 = vpop.f32.mrf.mxu0
        %v4049 = vpop.f32.mrf.mxu0
        %4050 = vdwg.mxu0
        %v4051 = vadd.f32 %v3805, %v4005
        %v4052 = vadd.f32 %v3806, %v4007
        %v4053 = vadd.f32 %v3807, %v4046
        %v4054 = vld [vmem:[%s3] sm:$0x7]
        %v4056 = vlaneseq
        %v4057 = vshrl.u32 %v4056, 7
        %v4058 = vsub.s32 0, %v4057
        %v4059 = vrot.slane %v4054, %v4058
        %v4060 = vlaneseq
        %v4061 = vshrl.u32 %v4060, 7
        %v4062 = vsub.s32 1, %v4061
        %v4063 = vrot.slane %v4054, %v4062
        %v4064 = vlaneseq
        %v4065 = vshrl.u32 %v4064, 7
        %v4066 = vsub.s32 2, %v4065
        %v4067 = vrot.slane %v4054, %v4066
        %v4071 = vadd.f32 %v4051, %v4059
        %v4072 = vadd.f32 %v4052, %v4063
        %v4073 = vadd.f32 %v4053, %v4067
        %4074 = vst [vmem:[%s190] sm:$0xff] %v4071
        %4075 = vst [vmem:[%s190 + $0x8] sm:$0xff] %v4072
        %4076 = vst [vmem:[%s190 + $0x10] sm:$0xff] %v4073
        %s4077 = sand.u32 %s115, 1
        %s4078 = scalar_lea.sflag [#allocation3], %s4077
        %s4079 = sand.u32 %s115, 1
        %s4080 = smul.addr %s4079, 24
        %s4081 = scalar_lea.vmem [#allocation2], %s4080
        // Predicated region
        $region37: #{_mha_forward.1} parent=35 // pred_check
          %p4082 = pneg %p125
        $region38: #{_mha_forward.1} parent=35 // pred_check_branch
          %4084 = sbr.rel (%p4082) target = $region40
        $region39: #{_mha_forward.1} parent=35 // pred_region
          %s4086 = ssub.s32 384, 384
          %4087 = vsyncadd %s4078, %s4086
          %s4088 = smul.addr %s18, 3
          %s4089 = smul.addr %s4088, 128
          %s4090 = scalar_lea.hbm %s4, %s4089
          %s4092 = sshll.u32 %s4081, 4
          %s4093 = int_to_ptr.vmem [resolvable:$true] %s4092
          %4095 = dma.vmem_to_hbm [thread:$0]  %s4093, 384, %s4090, %s4078
        $region40: #{_mha_forward.1} parent=35 // pred_fallthru
          _
      $region36: #{_mha_forward.1} parent=5 // pred_fallthru
        _
      %p4096 = scmp.le.s32.totalorder 2, %s13
      // Predicated region
      $region41: #{_mha_forward.1} parent=5 // pred_check
        %p4097 = pneg %p4096
      $region42: #{_mha_forward.1} parent=5 // pred_check_branch
        %4099 = sbr.rel (%p4097) target = $region44
      $region43: #{_mha_forward.1} parent=5 // pred_region
        %s4100 = ssub.s32 %s13, 2
        // Predicated region
        $region45: #{_mha_forward.1} parent=43 // pred_check
          %p4101 = pneg %p131
        $region46: #{_mha_forward.1} parent=43 // pred_check_branch
          %4103 = sbr.rel (%p4101) target = $region48
        $region47: #{_mha_forward.1} parent=43 // pred_region
          %s4104 = sand.u32 %s116, 1
          %s4105 = scalar_lea.sflag [#allocation3], %s4104
          %s4106 = sand.u32 %s116, 1
          %s4107 = smul.addr %s4106, 24
          %s4108 = scalar_lea.vmem [#allocation2], %s4107
          %4109 = dma.done %s4105, 384
        $region48: #{_mha_forward.1} parent=43 // pred_fallthru
          _
      $region44: #{_mha_forward.1} parent=5 // pred_fallthru
        _
    $region6: #{_mha_forward.1} parent=1 // loop_footer
      %s17 = sadd.s32 1, %s13
    $region7: #{_mha_forward.1} parent=1 // loop_footer_branch
      %12 = sbr.rel target = $region3
    $region8: #{_mha_forward.1} parent=1 // loop_exit
      _
    %4110 = vsyncpa [#allocation3], 1
    %s4111 = scalar_lea.sflag [#allocation3], 1
    %4112 = vsyncpa %s4111, 1

</llo_original>
